<compile_context>
chip_gen: v6e
topology: v6e:2x2x1
jax: 0.10.0
libtpu: 0.0.40
codegen_flags: <defaults>
</compile_context>

<pallas_src>
import math
import functools

import jax
import jax.numpy as jnp
from jax.experimental import pallas as pl
from jax.experimental.pallas import tpu as pltpu


def _attn_pool_kernel(xf_ref, pos0_ref, posx_ref,
                      wq_ref, wk_ref, wv_ref, wo_ref,
                      bq_ref, bk_ref, bv_ref, bo_ref,
                      hm_ref, hmT_ref, bmap_ref, bmapT_ref,
                      out_ref, *, num_heads: int, tb: int, hw: int):
    # xf_ref   : (TB*HW, C) bf16   spatial tokens, rows grouped per batch elem
    # pos0_ref : (1, C)     f32    positional embedding of the global token
    # posx_ref : (TB*HW, C) bf16   spatial pos-emb, tiled TB times
    # wq/wk/wv/wo_ref : (C, C) bf16  pre-transposed projections (wq pre-scaled)
    # bq/bk/bv/bo_ref : (1, C) f32   biases (bq pre-scaled)
    # hm_ref   : (C, NH)    bf16   one-hot channel -> head map
    # hmT_ref  : (NH, C)    bf16   its transpose
    # bmap_ref : (TB, TB*HW) bf16  one-hot batch-segment map (row -> batch)
    # bmapT_ref: (TB*HW, TB) bf16  its transpose
    # out_ref  : (TB, C)
    rows, C = xf_ref.shape
    NH = num_heads
    inv_hw = 1.0 / float(hw)

    xf = xf_ref[...]                                             # (rows, C) bf16
    bmap = bmap_ref[...]                                         # (TB, rows)
    bmapT = bmapT_ref[...]                                       # (rows, TB)
    hm = hm_ref[...]                                             # (C, NH)
    hmT = hmT_ref[...]                                           # (NH, C)

    # ---- global (query) token = per-batch spatial mean (MXU segment sum) ----
    g = jnp.dot(bmap, xf, preferred_element_type=jnp.float32) * inv_hw   # (TB, C)
    t0 = (g + pos0_ref[...]).astype(jnp.bfloat16)                        # (TB, C)

    q = jnp.dot(t0, wq_ref[...], preferred_element_type=jnp.float32) + bq_ref[...]
    k0 = jnp.dot(t0, wk_ref[...], preferred_element_type=jnp.float32) + bk_ref[...]
    v0 = jnp.dot(t0, wv_ref[...], preferred_element_type=jnp.float32) + bv_ref[...]
    qb = q.astype(jnp.bfloat16)          # one consistent rounding of the query

    # ---- spatial tokens: stay 2-D (rows, C) throughout ----
    tx = xf + posx_ref[...]                                              # bf16
    kx = jnp.dot(tx, wk_ref[...], preferred_element_type=jnp.float32) + bk_ref[...]
    vx = jnp.dot(tx, wv_ref[...], preferred_element_type=jnp.float32) + bv_ref[...]

    # broadcast the (pre-scaled) query to every spatial row of its batch elem
    q_rows = jnp.dot(bmapT, qb, preferred_element_type=jnp.float32)      # (rows, C)

    # ---- per-head scores via one-hot channel->head reduction on the MXU ----
    sx = jnp.dot((kx * q_rows).astype(jnp.bfloat16), hm,
                 preferred_element_type=jnp.float32)                     # (rows, NH)
    s0 = jnp.dot((k0 * qb.astype(jnp.float32)).astype(jnp.bfloat16), hm,
                 preferred_element_type=jnp.float32)                     # (TB, NH)

    # ---- softmax over {global token, HW spatial tokens}; small 3-D tensor ----
    sx3 = sx.reshape(tb, hw, NH)
    m = jnp.maximum(jnp.max(sx3, axis=1), s0)                            # (TB, NH)
    px3 = jnp.exp(sx3 - m[:, None, :])
    p0 = jnp.exp(s0 - m)
    inv = pl.reciprocal(jnp.sum(px3, axis=1) + p0, approx=True)          # (TB, NH)
    wx = (px3 * inv[:, None, :]).reshape(rows, NH)
    w0 = p0 * inv

    # ---- weighted-value combine: per-head weights -> channels, segment sum ----
    wx_c = jnp.dot(wx.astype(jnp.bfloat16), hmT,
                   preferred_element_type=jnp.float32)                   # (rows, C)
    w0_c = jnp.dot(w0.astype(jnp.bfloat16), hmT,
                   preferred_element_type=jnp.float32)                   # (TB, C)
    ctx = jnp.dot(bmap, (wx_c * vx).astype(jnp.bfloat16),
                  preferred_element_type=jnp.float32) + w0_c * v0        # (TB, C)

    out = jnp.dot(ctx.astype(jnp.bfloat16), wo_ref[...],
                  preferred_element_type=jnp.float32) + bo_ref[...]
    out_ref[...] = out.astype(out_ref.dtype)


def _vmem_limit_bytes():
    cap = 0
    try:
        cap = int(getattr(pltpu.get_tpu_info(), "vmem_capacity_bytes", 0))
    except Exception:
        cap = 0
    if cap <= 0:
        cap = 64 * 1024 * 1024          # conservative default: v7x per-core VMEM
    return min((cap * 7) // 8, 128 * 1024 * 1024)


def _vmem_estimate_bytes(tb, HW, C, NH):
    rows = tb * HW
    weights = 4 * C * C * 2                        # wq/wk/wv/wo bf16, single-buffered
    consts = rows * C * 2 + 2 * tb * rows * 2 + 2 * C * NH * 2 + 5 * C * 4
    x_blk = 2 * rows * C * 2                       # double-buffered bf16 activation block
    out_blk = 2 * tb * C * 4
    live = 5 * rows * C * 4                        # f32 intermediates (upper bound)
    return weights + consts + x_blk + out_blk + live


def _pick_batch_block(B, HW, C, NH, vmem_budget):
    # Keep sublane row dims 8-aligned unless the block spans the full array:
    # requiring TB % 8 == 0 (or TB == B) covers both the (TB, C) output block
    # and the (TB*HW, C) activation block for any HW (incl. HW=49).
    valid = [tb for tb in range(1, B + 1)
             if B % tb == 0 and (tb % 8 == 0 or tb == B)]
    fits = [tb for tb in valid if _vmem_estimate_bytes(tb, HW, C, NH) <= vmem_budget]
    if not fits:
        return min(valid)
    multi = [tb for tb in fits if B // tb >= 2]    # >= 2 grid steps (v7x: 2 TCs)
    for tb in sorted(multi):
        if tb * HW >= 512:                         # fill 256-row MXU passes
            return tb
    return max(multi) if multi else max(fits)


def _build_attn_pool_call(*, B, HW, C, NH, TB, out_dtype, vmem_limit, single_buffer):
    rows = TB * HW
    grid = (B // TB,)
    kernel = functools.partial(_attn_pool_kernel, num_heads=NH, tb=TB, hw=HW)

    const_kw = {"pipeline_mode": pl.Buffered(1)} if single_buffer else {}

    def const(shape):
        return pl.BlockSpec(shape, lambda *_, n=len(shape): (0,) * n, **const_kw)

    in_specs = [
        pl.BlockSpec((rows, C), lambda b: (b, 0)),     # xf (streamed, bf16)
        const((1, C)),                                  # pos0
        const((rows, C)),                               # posx (tiled)
        const((C, C)), const((C, C)), const((C, C)), const((C, C)),   # wq,wk,wv,wo
        const((1, C)), const((1, C)), const((1, C)), const((1, C)),   # bq,bk,bv,bo
        const((C, NH)), const((NH, C)),                 # hm, hmT
        const((TB, rows)), const((rows, TB)),           # bmap, bmapT
    ]
    out_spec = pl.BlockSpec((TB, C), lambda b: (b, 0))

    cost = pl.CostEstimate(
        flops=int(4 * B * HW * C * C + 8 * B * C * C
                  + 4 * B * HW * C * NH + 8 * B * HW * C),
        transcendentals=int(B * (HW + 1) * NH),
        bytes_accessed=int(B * HW * C * 2 + 4 * C * C * 2 + B * C * 4
                           + rows * C * 2 + 8 * C * 4 + 2 * C * NH * 2
                           + 2 * TB * rows * 2),
    )

    return pl.pallas_call(
        kernel,
        out_shape=jax.ShapeDtypeStruct((B, C), out_dtype),
        grid_spec=pltpu.PrefetchScalarGridSpec(
            num_scalar_prefetch=0,
            grid=grid,
            in_specs=in_specs,
            out_specs=out_spec,
        ),
        compiler_params=pltpu.CompilerParams(
            dimension_semantics=("parallel",),
            vmem_limit_bytes=int(vmem_limit),
        ),
        cost_estimate=cost,
    )


def attention_pool_2d(x, pos_emb, in_proj_w, in_proj_b, out_proj_w, out_proj_b,
                      num_heads):
    """x: (B, C, H, W) float32 (NCHW, as in PyTorch). Returns (B, C)."""
    B, C, H, W = x.shape
    HW = H * W
    assert pos_emb.shape == (1, HW + 1, C)
    assert C % num_heads == 0
    head_dim = C // num_heads
    scale = 1.0 / math.sqrt(head_dim)

    # ---- activations: ONE fused transpose+downcast pass; kernel reads bf16 ----
    # TODO(synk): if this wrapper pass ever dominates, pass x natively as
    # (B, C, HW) and contract over C in-kernel (weight-on-left dot_general).
    xf2 = (jnp.transpose(x.reshape(B, C, HW), (0, 2, 1))
           .reshape(B * HW, C).astype(jnp.bfloat16))

    # ---- one-time parameter / constant prep ----
    pos0 = pos_emb[0, 0:1, :].astype(jnp.float32)                  # (1, C)
    posx = pos_emb[0, 1:, :].astype(jnp.bfloat16)                  # (HW, C)

    wq, wk, wv = in_proj_w[:C], in_proj_w[C:2 * C], in_proj_w[2 * C:]
    bq, bk, bv = in_proj_b[:C], in_proj_b[C:2 * C], in_proj_b[2 * C:]
    wq_t = (wq.T * scale).astype(jnp.bfloat16)     # 1/sqrt(head_dim) folded in
    wk_t = wk.T.astype(jnp.bfloat16)
    wv_t = wv.T.astype(jnp.bfloat16)
    wo_t = out_proj_w.T.astype(jnp.bfloat16)
    bq_s = (bq * scale).reshape(1, C).astype(jnp.float32)
    bk_r = bk.reshape(1, C).astype(jnp.float32)
    bv_r = bv.reshape(1, C).astype(jnp.float32)
    bo_r = out_proj_b.reshape(1, C).astype(jnp.float32)

    head_ids = jnp.arange(C, dtype=jnp.int32) // head_dim
    hm = (head_ids[:, None] ==
          jnp.arange(num_heads, dtype=jnp.int32)[None, :]).astype(jnp.bfloat16)
    hmT = hm.T                                                      # (NH, C)

    vmem_limit = _vmem_limit_bytes()
    TB = _pick_batch_block(B, HW, C, num_heads, (vmem_limit * 7) // 10)
    rows = TB * HW

    posx_t = jnp.tile(posx, (TB, 1))                                # (TB*HW, C)
    row_batch = jnp.arange(rows, dtype=jnp.int32) // HW
    bmap = (jnp.arange(TB, dtype=jnp.int32)[:, None] ==
            row_batch[None, :]).astype(jnp.bfloat16)                # (TB, TB*HW)
    bmapT = bmap.T                                                  # (TB*HW, TB)

    args = (xf2, pos0, posx_t, wq_t, wk_t, wv_t, wo_t,
            bq_s, bk_r, bv_r, bo_r, hm, hmT, bmap, bmapT)

    def run(single_buffer):
        f = _build_attn_pool_call(B=B, HW=HW, C=C, NH=num_heads, TB=TB,
                                  out_dtype=x.dtype, vmem_limit=vmem_limit,
                                  single_buffer=single_buffer)
        return jax.block_until_ready(f(*args))

    try:
        return run(True)          # single-buffer grid-invariant operands
    except Exception:
        # pl.Buffered(1) not supported on this Pallas build: fall back to the
        # default double-buffered pipeline (correct, just uses more VMEM).
        return run(False)


def reference_attention_pool_2d(x, pos_emb, in_proj_w, in_proj_b,
                                out_proj_w, out_proj_b, num_heads):
    """Pure-JAX replica of the PyTorch forward (for correctness check)."""
    B, C, H, W = x.shape
    xf = jnp.transpose(x.reshape(B, C, H * W), (0, 2, 1))           # (B, HW, C)
    g = xf.mean(axis=1, keepdims=True)
    tok = jnp.concatenate([g, xf], axis=1) + pos_emb                # (B, S, C)
    wq, wk, wv = in_proj_w[:C], in_proj_w[C:2 * C], in_proj_w[2 * C:]
    bq, bk, bv = in_proj_b[:C], in_proj_b[C:2 * C], in_proj_b[2 * C:]
    q = tok[:, 0:1] @ wq.T + bq
    k = tok @ wk.T + bk
    v = tok @ wv.T + bv
    d = C // num_heads
    S = tok.shape[1]
    qh = q.reshape(B, 1, num_heads, d).transpose(0, 2, 1, 3)
    kh = k.reshape(B, S, num_heads, d).transpose(0, 2, 1, 3)
    vh = v.reshape(B, S, num_heads, d).transpose(0, 2, 1, 3)
    s = (qh @ kh.transpose(0, 1, 3, 2)) / math.sqrt(d)
    p = jax.nn.softmax(s, axis=-1)
    o = (p @ vh).transpose(0, 2, 1, 3).reshape(B, 1, C)
    return (o @ out_proj_w.T + out_proj_b)[:, 0, :]


if __name__ == "__main__":
    # Small shapes consistent with the module; B=16 gives TB=8, grid=2, which
    # exercises the batched grid and the pipelined activation stream.
    B, C, H, W = 16, 32, 4, 4
    num_heads = 4
    S = H * W + 1

    key = jax.random.PRNGKey(0)
    kx, kpos, kiw, kib, kow, kob = jax.random.split(key, 6)

    x = jax.random.normal(kx, (B, C, H, W), dtype=jnp.float32)
    pos_emb = jax.random.normal(kpos, (1, S, C), dtype=jnp.float32) * (1.0 / math.sqrt(C))
    in_proj_w = jax.random.normal(kiw, (3 * C, C), dtype=jnp.float32) * 0.05
    in_proj_b = jax.random.normal(kib, (3 * C,), dtype=jnp.float32) * 0.01
    out_proj_w = jax.random.normal(kow, (C, C), dtype=jnp.float32) * 0.05
    out_proj_b = jax.random.normal(kob, (C,), dtype=jnp.float32) * 0.01

    out = attention_pool_2d(x, pos_emb, in_proj_w, in_proj_b,
                            out_proj_w, out_proj_b, num_heads)
    out = jax.block_until_ready(out)

    ref = reference_attention_pool_2d(x, pos_emb, in_proj_w, in_proj_b,
                                      out_proj_w, out_proj_b, num_heads)
    assert out.shape == (B, C)
    # bf16 activations/weights + approx reciprocal -> relaxed tolerance vs f32.
    assert jnp.allclose(out, ref, atol=2e-2, rtol=2e-2), "mismatch vs JAX reference"

    print("KERNEL_OK")
</pallas_src>

<mosaic_0001>
module attributes {stable_mosaic.version = 11 : i64} {
  func.func @_attn_pool_kernel(%arg0: i32, %arg1: memref<128x32xbf16, #tpu.memory_space<vmem>>, %arg2: memref<1x32xf32, #tpu.memory_space<vmem>>, %arg3: memref<128x32xbf16, #tpu.memory_space<vmem>>, %arg4: memref<32x32xbf16, #tpu.memory_space<vmem>>, %arg5: memref<32x32xbf16, #tpu.memory_space<vmem>>, %arg6: memref<32x32xbf16, #tpu.memory_space<vmem>>, %arg7: memref<32x32xbf16, #tpu.memory_space<vmem>>, %arg8: memref<1x32xf32, #tpu.memory_space<vmem>>, %arg9: memref<1x32xf32, #tpu.memory_space<vmem>>, %arg10: memref<1x32xf32, #tpu.memory_space<vmem>>, %arg11: memref<1x32xf32, #tpu.memory_space<vmem>>, %arg12: memref<32x4xbf16, #tpu.memory_space<vmem>>, %arg13: memref<4x32xbf16, #tpu.memory_space<vmem>>, %arg14: memref<8x128xbf16, #tpu.memory_space<vmem>>, %arg15: memref<128x8xbf16, #tpu.memory_space<vmem>>, %arg16: memref<8x32xf32, #tpu.memory_space<vmem>>) attributes {dimension_semantics = [#tpu.dimension_semantics<parallel>], iteration_bounds = array<i64: 2>, scalar_prefetch = 0 : i64, scratch_operands = 0 : i64, tpu.core_type = #tpu.core_type<tc>, window_params = [{transform_indices = @transform_0, window_bounds = array<i64: 128, 32>}, {pipeline_mode = #tpu.pipeline_mode<synchronous>, transform_indices = @transform_1, window_bounds = array<i64: 1, 32>}, {pipeline_mode = #tpu.pipeline_mode<synchronous>, transform_indices = @transform_2, window_bounds = array<i64: 128, 32>}, {pipeline_mode = #tpu.pipeline_mode<synchronous>, transform_indices = @transform_3, window_bounds = array<i64: 32, 32>}, {pipeline_mode = #tpu.pipeline_mode<synchronous>, transform_indices = @transform_4, window_bounds = array<i64: 32, 32>}, {pipeline_mode = #tpu.pipeline_mode<synchronous>, transform_indices = @transform_5, window_bounds = array<i64: 32, 32>}, {pipeline_mode = #tpu.pipeline_mode<synchronous>, transform_indices = @transform_6, window_bounds = array<i64: 32, 32>}, {pipeline_mode = #tpu.pipeline_mode<synchronous>, transform_indices = @transform_7, window_bounds = array<i64: 1, 32>}, {pipeline_mode = #tpu.pipeline_mode<synchronous>, transform_indices = @transform_8, window_bounds = array<i64: 1, 32>}, {pipeline_mode = #tpu.pipeline_mode<synchronous>, transform_indices = @transform_9, window_bounds = array<i64: 1, 32>}, {pipeline_mode = #tpu.pipeline_mode<synchronous>, transform_indices = @transform_10, window_bounds = array<i64: 1, 32>}, {pipeline_mode = #tpu.pipeline_mode<synchronous>, transform_indices = @transform_11, window_bounds = array<i64: 32, 4>}, {pipeline_mode = #tpu.pipeline_mode<synchronous>, transform_indices = @transform_12, window_bounds = array<i64: 4, 32>}, {pipeline_mode = #tpu.pipeline_mode<synchronous>, transform_indices = @transform_13, window_bounds = array<i64: 8, 128>}, {pipeline_mode = #tpu.pipeline_mode<synchronous>, transform_indices = @transform_14, window_bounds = array<i64: 128, 8>}, {transform_indices = @transform_15, window_bounds = array<i64: 8, 32>}]} {
    %c0 = arith.constant 0 : index
    %c0_0 = arith.constant 0 : index
    %0 = vector.load %arg1[%c0, %c0_0] : memref<128x32xbf16, #tpu.memory_space<vmem>>, vector<128x32xbf16>
    %c0_1 = arith.constant 0 : index
    %c0_2 = arith.constant 0 : index
    %1 = vector.load %arg14[%c0_1, %c0_2] : memref<8x128xbf16, #tpu.memory_space<vmem>>, vector<8x128xbf16>
    %c0_3 = arith.constant 0 : index
    %c0_4 = arith.constant 0 : index
    %2 = vector.load %arg15[%c0_3, %c0_4] : memref<128x8xbf16, #tpu.memory_space<vmem>>, vector<128x8xbf16>
    %c0_5 = arith.constant 0 : index
    %c0_6 = arith.constant 0 : index
    %3 = vector.load %arg12[%c0_5, %c0_6] : memref<32x4xbf16, #tpu.memory_space<vmem>>, vector<32x4xbf16>
    %c0_7 = arith.constant 0 : index
    %c0_8 = arith.constant 0 : index
    %4 = vector.load %arg13[%c0_7, %c0_8] : memref<4x32xbf16, #tpu.memory_space<vmem>>, vector<4x32xbf16>
    %cst = arith.constant dense<0.000000e+00> : vector<8x32xf32>
    %5 = tpu.matmul %1, %0, %cst {dimension_numbers = #tpu.dot_dimension_numbers<[1], [0], [0], [1], [0, 0, 1, 1], [], []>} : vector<8x128xbf16>, vector<128x32xbf16>, vector<8x32xf32> -> vector<8x32xf32>
    %cst_9 = arith.constant 6.250000e-02 : f32
    %6 = vector.broadcast %cst_9 : f32 to vector<8x32xf32>
    %7 = arith.mulf %5, %6 : vector<8x32xf32>
    %c0_10 = arith.constant 0 : index
    %c0_11 = arith.constant 0 : index
    %8 = vector.load %arg2[%c0_10, %c0_11] : memref<1x32xf32, #tpu.memory_space<vmem>>, vector<1x32xf32>
    %9 = vector.broadcast %8 : vector<1x32xf32> to vector<8x32xf32>
    %10 = arith.addf %7, %9 : vector<8x32xf32>
    %11 = arith.truncf %10 : vector<8x32xf32> to vector<8x32xbf16>
    %c0_12 = arith.constant 0 : index
    %c0_13 = arith.constant 0 : index
    %12 = vector.load %arg4[%c0_12, %c0_13] : memref<32x32xbf16, #tpu.memory_space<vmem>>, vector<32x32xbf16>
    %cst_14 = arith.constant dense<0.000000e+00> : vector<8x32xf32>
    %13 = tpu.matmul %11, %12, %cst_14 {dimension_numbers = #tpu.dot_dimension_numbers<[1], [0], [0], [1], [0, 0, 1, 1], [], []>} : vector<8x32xbf16>, vector<32x32xbf16>, vector<8x32xf32> -> vector<8x32xf32>
    %c0_15 = arith.constant 0 : index
    %c0_16 = arith.constant 0 : index
    %14 = vector.load %arg8[%c0_15, %c0_16] : memref<1x32xf32, #tpu.memory_space<vmem>>, vector<1x32xf32>
    %15 = vector.broadcast %14 : vector<1x32xf32> to vector<8x32xf32>
    %16 = arith.addf %13, %15 : vector<8x32xf32>
    %c0_17 = arith.constant 0 : index
    %c0_18 = arith.constant 0 : index
    %17 = vector.load %arg5[%c0_17, %c0_18] : memref<32x32xbf16, #tpu.memory_space<vmem>>, vector<32x32xbf16>
    %cst_19 = arith.constant dense<0.000000e+00> : vector<8x32xf32>
    %18 = tpu.matmul %11, %17, %cst_19 {dimension_numbers = #tpu.dot_dimension_numbers<[1], [0], [0], [1], [0, 0, 1, 1], [], []>} : vector<8x32xbf16>, vector<32x32xbf16>, vector<8x32xf32> -> vector<8x32xf32>
    %c0_20 = arith.constant 0 : index
    %c0_21 = arith.constant 0 : index
    %19 = vector.load %arg9[%c0_20, %c0_21] : memref<1x32xf32, #tpu.memory_space<vmem>>, vector<1x32xf32>
    %20 = vector.broadcast %19 : vector<1x32xf32> to vector<8x32xf32>
    %21 = arith.addf %18, %20 : vector<8x32xf32>
    %c0_22 = arith.constant 0 : index
    %c0_23 = arith.constant 0 : index
    %22 = vector.load %arg6[%c0_22, %c0_23] : memref<32x32xbf16, #tpu.memory_space<vmem>>, vector<32x32xbf16>
    %cst_24 = arith.constant dense<0.000000e+00> : vector<8x32xf32>
    %23 = tpu.matmul %11, %22, %cst_24 {dimension_numbers = #tpu.dot_dimension_numbers<[1], [0], [0], [1], [0, 0, 1, 1], [], []>} : vector<8x32xbf16>, vector<32x32xbf16>, vector<8x32xf32> -> vector<8x32xf32>
    %c0_25 = arith.constant 0 : index
    %c0_26 = arith.constant 0 : index
    %24 = vector.load %arg10[%c0_25, %c0_26] : memref<1x32xf32, #tpu.memory_space<vmem>>, vector<1x32xf32>
    %25 = vector.broadcast %24 : vector<1x32xf32> to vector<8x32xf32>
    %26 = arith.addf %23, %25 : vector<8x32xf32>
    %27 = arith.truncf %16 : vector<8x32xf32> to vector<8x32xbf16>
    %c0_27 = arith.constant 0 : index
    %c0_28 = arith.constant 0 : index
    %28 = vector.load %arg3[%c0_27, %c0_28] : memref<128x32xbf16, #tpu.memory_space<vmem>>, vector<128x32xbf16>
    %29 = arith.addf %0, %28 : vector<128x32xbf16>
    %c0_29 = arith.constant 0 : index
    %c0_30 = arith.constant 0 : index
    %30 = vector.load %arg5[%c0_29, %c0_30] : memref<32x32xbf16, #tpu.memory_space<vmem>>, vector<32x32xbf16>
    %cst_31 = arith.constant dense<0.000000e+00> : vector<128x32xf32>
    %31 = tpu.matmul %29, %30, %cst_31 {dimension_numbers = #tpu.dot_dimension_numbers<[1], [0], [0], [1], [0, 0, 1, 1], [], []>} : vector<128x32xbf16>, vector<32x32xbf16>, vector<128x32xf32> -> vector<128x32xf32>
    %c0_32 = arith.constant 0 : index
    %c0_33 = arith.constant 0 : index
    %32 = vector.load %arg9[%c0_32, %c0_33] : memref<1x32xf32, #tpu.memory_space<vmem>>, vector<1x32xf32>
    %33 = vector.broadcast %32 : vector<1x32xf32> to vector<128x32xf32>
    %34 = arith.addf %31, %33 : vector<128x32xf32>
    %c0_34 = arith.constant 0 : index
    %c0_35 = arith.constant 0 : index
    %35 = vector.load %arg6[%c0_34, %c0_35] : memref<32x32xbf16, #tpu.memory_space<vmem>>, vector<32x32xbf16>
    %cst_36 = arith.constant dense<0.000000e+00> : vector<128x32xf32>
    %36 = tpu.matmul %29, %35, %cst_36 {dimension_numbers = #tpu.dot_dimension_numbers<[1], [0], [0], [1], [0, 0, 1, 1], [], []>} : vector<128x32xbf16>, vector<32x32xbf16>, vector<128x32xf32> -> vector<128x32xf32>
    %c0_37 = arith.constant 0 : index
    %c0_38 = arith.constant 0 : index
    %37 = vector.load %arg10[%c0_37, %c0_38] : memref<1x32xf32, #tpu.memory_space<vmem>>, vector<1x32xf32>
    %38 = vector.broadcast %37 : vector<1x32xf32> to vector<128x32xf32>
    %39 = arith.addf %36, %38 : vector<128x32xf32>
    %cst_39 = arith.constant dense<0.000000e+00> : vector<128x32xf32>
    %40 = tpu.matmul %2, %27, %cst_39 {dimension_numbers = #tpu.dot_dimension_numbers<[1], [0], [0], [1], [0, 0, 1, 1], [], []>} : vector<128x8xbf16>, vector<8x32xbf16>, vector<128x32xf32> -> vector<128x32xf32>
    %41 = arith.mulf %34, %40 : vector<128x32xf32>
    %42 = arith.truncf %41 : vector<128x32xf32> to vector<128x32xbf16>
    %cst_40 = arith.constant dense<0.000000e+00> : vector<128x4xf32>
    %43 = tpu.matmul %42, %3, %cst_40 {dimension_numbers = #tpu.dot_dimension_numbers<[1], [0], [0], [1], [0, 0, 1, 1], [], []>} : vector<128x32xbf16>, vector<32x4xbf16>, vector<128x4xf32> -> vector<128x4xf32>
    %44 = arith.extf %27 : vector<8x32xbf16> to vector<8x32xf32>
    %45 = arith.mulf %21, %44 : vector<8x32xf32>
    %46 = arith.truncf %45 : vector<8x32xf32> to vector<8x32xbf16>
    %cst_41 = arith.constant dense<0.000000e+00> : vector<8x4xf32>
    %47 = tpu.matmul %46, %3, %cst_41 {dimension_numbers = #tpu.dot_dimension_numbers<[1], [0], [0], [1], [0, 0, 1, 1], [], []>} : vector<8x32xbf16>, vector<32x4xbf16>, vector<8x4xf32> -> vector<8x4xf32>
    %48 = vector.shape_cast %43 : vector<128x4xf32> to vector<8x16x4xf32>
    %cst_42 = arith.constant dense<0xFF800000> : vector<8x4xf32>
    %49 = vector.multi_reduction <maximumf>, %48, %cst_42 [1] : vector<8x16x4xf32> to vector<8x4xf32>
    %50 = arith.maximumf %49, %47 : vector<8x4xf32>
    %51 = vector.shape_cast %50 : vector<8x4xf32> to vector<8x1x4xf32>
    %52 = vector.broadcast %51 : vector<8x1x4xf32> to vector<8x16x4xf32>
    %53 = arith.subf %48, %52 : vector<8x16x4xf32>
    %54 = math.exp %53 : vector<8x16x4xf32>
    %55 = arith.subf %47, %50 : vector<8x4xf32>
    %56 = math.exp %55 : vector<8x4xf32>
    %cst_43 = arith.constant dense<0.000000e+00> : vector<8x4xf32>
    %57 = vector.multi_reduction <add>, %54, %cst_43 [1] : vector<8x16x4xf32> to vector<8x4xf32>
    %58 = arith.addf %57, %56 : vector<8x4xf32>
    %59 = tpu.reciprocal %58 {approx = true} : vector<8x4xf32> -> vector<8x4xf32>
    %60 = vector.shape_cast %59 : vector<8x4xf32> to vector<8x1x4xf32>
    %61 = vector.broadcast %60 : vector<8x1x4xf32> to vector<8x16x4xf32>
    %62 = arith.mulf %54, %61 : vector<8x16x4xf32>
    %63 = vector.shape_cast %62 : vector<8x16x4xf32> to vector<128x4xf32>
    %64 = arith.mulf %56, %59 : vector<8x4xf32>
    %65 = arith.truncf %63 : vector<128x4xf32> to vector<128x4xbf16>
    %cst_44 = arith.constant dense<0.000000e+00> : vector<128x32xf32>
    %66 = tpu.matmul %65, %4, %cst_44 {dimension_numbers = #tpu.dot_dimension_numbers<[1], [0], [0], [1], [0, 0, 1, 1], [], []>} : vector<128x4xbf16>, vector<4x32xbf16>, vector<128x32xf32> -> vector<128x32xf32>
    %67 = arith.truncf %64 : vector<8x4xf32> to vector<8x4xbf16>
    %cst_45 = arith.constant dense<0.000000e+00> : vector<8x32xf32>
    %68 = tpu.matmul %67, %4, %cst_45 {dimension_numbers = #tpu.dot_dimension_numbers<[1], [0], [0], [1], [0, 0, 1, 1], [], []>} : vector<8x4xbf16>, vector<4x32xbf16>, vector<8x32xf32> -> vector<8x32xf32>
    %69 = arith.mulf %66, %39 : vector<128x32xf32>
    %70 = arith.truncf %69 : vector<128x32xf32> to vector<128x32xbf16>
    %cst_46 = arith.constant dense<0.000000e+00> : vector<8x32xf32>
    %71 = tpu.matmul %1, %70, %cst_46 {dimension_numbers = #tpu.dot_dimension_numbers<[1], [0], [0], [1], [0, 0, 1, 1], [], []>} : vector<8x128xbf16>, vector<128x32xbf16>, vector<8x32xf32> -> vector<8x32xf32>
    %72 = arith.mulf %68, %26 : vector<8x32xf32>
    %73 = arith.addf %71, %72 : vector<8x32xf32>
    %74 = arith.truncf %73 : vector<8x32xf32> to vector<8x32xbf16>
    %c0_47 = arith.constant 0 : index
    %c0_48 = arith.constant 0 : index
    %75 = vector.load %arg7[%c0_47, %c0_48] : memref<32x32xbf16, #tpu.memory_space<vmem>>, vector<32x32xbf16>
    %cst_49 = arith.constant dense<0.000000e+00> : vector<8x32xf32>
    %76 = tpu.matmul %74, %75, %cst_49 {dimension_numbers = #tpu.dot_dimension_numbers<[1], [0], [0], [1], [0, 0, 1, 1], [], []>} : vector<8x32xbf16>, vector<32x32xbf16>, vector<8x32xf32> -> vector<8x32xf32>
    %c0_50 = arith.constant 0 : index
    %c0_51 = arith.constant 0 : index
    %77 = vector.load %arg11[%c0_50, %c0_51] : memref<1x32xf32, #tpu.memory_space<vmem>>, vector<1x32xf32>
    %78 = vector.broadcast %77 : vector<1x32xf32> to vector<8x32xf32>
    %79 = arith.addf %76, %78 : vector<8x32xf32>
    %c0_52 = arith.constant 0 : index
    %c0_53 = arith.constant 0 : index
    %80 = vector.load %arg16[%c0_52, %c0_53] : memref<8x32xf32, #tpu.memory_space<vmem>>, vector<8x32xf32>
    tpu.vector_store %arg16[%c0_52, %c0_53], %79 {strides = array<i32>} : memref<8x32xf32, #tpu.memory_space<vmem>>, vector<8x32xf32>,
    return
  }
  func.func @transform_0(%arg0: i32) -> (i32, i32) {
    %c0_i32 = arith.constant 0 : i32
    %c0_i32_0 = arith.constant 0 : i32
    return %arg0, %c0_i32 : i32, i32
  }
  func.func @transform_1(%arg0: i32) -> (i32, i32) {
    %c0_i32 = arith.constant 0 : i32
    %c0_i32_0 = arith.constant 0 : i32
    %c0_i32_1 = arith.constant 0 : i32
    return %c0_i32, %c0_i32_0 : i32, i32
  }
  func.func @transform_2(%arg0: i32) -> (i32, i32) {
    %c0_i32 = arith.constant 0 : i32
    %c0_i32_0 = arith.constant 0 : i32
    %c0_i32_1 = arith.constant 0 : i32
    return %c0_i32, %c0_i32_0 : i32, i32
  }
  func.func @transform_3(%arg0: i32) -> (i32, i32) {
    %c0_i32 = arith.constant 0 : i32
    %c0_i32_0 = arith.constant 0 : i32
    %c0_i32_1 = arith.constant 0 : i32
    return %c0_i32, %c0_i32_0 : i32, i32
  }
  func.func @transform_4(%arg0: i32) -> (i32, i32) {
    %c0_i32 = arith.constant 0 : i32
    %c0_i32_0 = arith.constant 0 : i32
    %c0_i32_1 = arith.constant 0 : i32
    return %c0_i32, %c0_i32_0 : i32, i32
  }
  func.func @transform_5(%arg0: i32) -> (i32, i32) {
    %c0_i32 = arith.constant 0 : i32
    %c0_i32_0 = arith.constant 0 : i32
    %c0_i32_1 = arith.constant 0 : i32
    return %c0_i32, %c0_i32_0 : i32, i32
  }
  func.func @transform_6(%arg0: i32) -> (i32, i32) {
    %c0_i32 = arith.constant 0 : i32
    %c0_i32_0 = arith.constant 0 : i32
    %c0_i32_1 = arith.constant 0 : i32
    return %c0_i32, %c0_i32_0 : i32, i32
  }
  func.func @transform_7(%arg0: i32) -> (i32, i32) {
    %c0_i32 = arith.constant 0 : i32
    %c0_i32_0 = arith.constant 0 : i32
    %c0_i32_1 = arith.constant 0 : i32
    return %c0_i32, %c0_i32_0 : i32, i32
  }
  func.func @transform_8(%arg0: i32) -> (i32, i32) {
    %c0_i32 = arith.constant 0 : i32
    %c0_i32_0 = arith.constant 0 : i32
    %c0_i32_1 = arith.constant 0 : i32
    return %c0_i32, %c0_i32_0 : i32, i32
  }
  func.func @transform_9(%arg0: i32) -> (i32, i32) {
    %c0_i32 = arith.constant 0 : i32
    %c0_i32_0 = arith.constant 0 : i32
    %c0_i32_1 = arith.constant 0 : i32
    return %c0_i32, %c0_i32_0 : i32, i32
  }
  func.func @transform_10(%arg0: i32) -> (i32, i32) {
    %c0_i32 = arith.constant 0 : i32
    %c0_i32_0 = arith.constant 0 : i32
    %c0_i32_1 = arith.constant 0 : i32
    return %c0_i32, %c0_i32_0 : i32, i32
  }
  func.func @transform_11(%arg0: i32) -> (i32, i32) {
    %c0_i32 = arith.constant 0 : i32
    %c0_i32_0 = arith.constant 0 : i32
    %c0_i32_1 = arith.constant 0 : i32
    return %c0_i32, %c0_i32_0 : i32, i32
  }
  func.func @transform_12(%arg0: i32) -> (i32, i32) {
    %c0_i32 = arith.constant 0 : i32
    %c0_i32_0 = arith.constant 0 : i32
    %c0_i32_1 = arith.constant 0 : i32
    return %c0_i32, %c0_i32_0 : i32, i32
  }
  func.func @transform_13(%arg0: i32) -> (i32, i32) {
    %c0_i32 = arith.constant 0 : i32
    %c0_i32_0 = arith.constant 0 : i32
    %c0_i32_1 = arith.constant 0 : i32
    return %c0_i32, %c0_i32_0 : i32, i32
  }
  func.func @transform_14(%arg0: i32) -> (i32, i32) {
    %c0_i32 = arith.constant 0 : i32
    %c0_i32_0 = arith.constant 0 : i32
    %c0_i32_1 = arith.constant 0 : i32
    return %c0_i32, %c0_i32_0 : i32, i32
  }
  func.func @transform_15(%arg0: i32) -> (i32, i32) {
    %c0_i32 = arith.constant 0 : i32
    %c0_i32_0 = arith.constant 0 : i32
    return %arg0, %c0_i32 : i32, i32
  }
}

module attributes {stable_mosaic.version = 11 : i64} {
  func.func @_attn_pool_kernel(%arg0: i32, %arg1: memref<128x32xbf16, #tpu.memory_space<vmem>>, %arg2: memref<1x32xf32, #tpu.memory_space<vmem>>, %arg3: memref<128x32xbf16, #tpu.memory_space<vmem>>, %arg4: memref<32x32xbf16, #tpu.memory_space<vmem>>, %arg5: memref<32x32xbf16, #tpu.memory_space<vmem>>, %arg6: memref<32x32xbf16, #tpu.memory_space<vmem>>, %arg7: memref<32x32xbf16, #tpu.memory_space<vmem>>, %arg8: memref<1x32xf32, #tpu.memory_space<vmem>>, %arg9: memref<1x32xf32, #tpu.memory_space<vmem>>, %arg10: memref<1x32xf32, #tpu.memory_space<vmem>>, %arg11: memref<1x32xf32, #tpu.memory_space<vmem>>, %arg12: memref<32x4xbf16, #tpu.memory_space<vmem>>, %arg13: memref<4x32xbf16, #tpu.memory_space<vmem>>, %arg14: memref<8x128xbf16, #tpu.memory_space<vmem>>, %arg15: memref<128x8xbf16, #tpu.memory_space<vmem>>, %arg16: memref<8x32xf32, #tpu.memory_space<vmem>>) attributes {dimension_semantics = [#tpu.dimension_semantics<parallel>], iteration_bounds = array<i64: 2>, scalar_prefetch = 0 : i64, scratch_operands = 0 : i64, tpu.core_type = #tpu.core_type<tc>, window_params = [{transform_indices = @transform_0, window_bounds = array<i64: 128, 32>}, {pipeline_mode = #tpu.pipeline_mode<synchronous>, transform_indices = @transform_1, window_bounds = array<i64: 1, 32>}, {pipeline_mode = #tpu.pipeline_mode<synchronous>, transform_indices = @transform_2, window_bounds = array<i64: 128, 32>}, {pipeline_mode = #tpu.pipeline_mode<synchronous>, transform_indices = @transform_3, window_bounds = array<i64: 32, 32>}, {pipeline_mode = #tpu.pipeline_mode<synchronous>, transform_indices = @transform_4, window_bounds = array<i64: 32, 32>}, {pipeline_mode = #tpu.pipeline_mode<synchronous>, transform_indices = @transform_5, window_bounds = array<i64: 32, 32>}, {pipeline_mode = #tpu.pipeline_mode<synchronous>, transform_indices = @transform_6, window_bounds = array<i64: 32, 32>}, {pipeline_mode = #tpu.pipeline_mode<synchronous>, transform_indices = @transform_7, window_bounds = array<i64: 1, 32>}, {pipeline_mode = #tpu.pipeline_mode<synchronous>, transform_indices = @transform_8, window_bounds = array<i64: 1, 32>}, {pipeline_mode = #tpu.pipeline_mode<synchronous>, transform_indices = @transform_9, window_bounds = array<i64: 1, 32>}, {pipeline_mode = #tpu.pipeline_mode<synchronous>, transform_indices = @transform_10, window_bounds = array<i64: 1, 32>}, {pipeline_mode = #tpu.pipeline_mode<synchronous>, transform_indices = @transform_11, window_bounds = array<i64: 32, 4>}, {pipeline_mode = #tpu.pipeline_mode<synchronous>, transform_indices = @transform_12, window_bounds = array<i64: 4, 32>}, {pipeline_mode = #tpu.pipeline_mode<synchronous>, transform_indices = @transform_13, window_bounds = array<i64: 8, 128>}, {pipeline_mode = #tpu.pipeline_mode<synchronous>, transform_indices = @transform_14, window_bounds = array<i64: 128, 8>}, {transform_indices = @transform_15, window_bounds = array<i64: 8, 32>}]} {
    %c0 = arith.constant 0 : index
    %c0_0 = arith.constant 0 : index
    %0 = vector.load %arg1[%c0, %c0_0] : memref<128x32xbf16, #tpu.memory_space<vmem>>, vector<128x32xbf16>
    %c0_1 = arith.constant 0 : index
    %c0_2 = arith.constant 0 : index
    %1 = vector.load %arg14[%c0_1, %c0_2] : memref<8x128xbf16, #tpu.memory_space<vmem>>, vector<8x128xbf16>
    %c0_3 = arith.constant 0 : index
    %c0_4 = arith.constant 0 : index
    %2 = vector.load %arg15[%c0_3, %c0_4] : memref<128x8xbf16, #tpu.memory_space<vmem>>, vector<128x8xbf16>
    %c0_5 = arith.constant 0 : index
    %c0_6 = arith.constant 0 : index
    %3 = vector.load %arg12[%c0_5, %c0_6] : memref<32x4xbf16, #tpu.memory_space<vmem>>, vector<32x4xbf16>
    %c0_7 = arith.constant 0 : index
    %c0_8 = arith.constant 0 : index
    %4 = vector.load %arg13[%c0_7, %c0_8] : memref<4x32xbf16, #tpu.memory_space<vmem>>, vector<4x32xbf16>
    %cst = arith.constant dense<0.000000e+00> : vector<8x32xf32>
    %5 = tpu.matmul %1, %0, %cst {dimension_numbers = #tpu.dot_dimension_numbers<[1], [0], [0], [1], [0, 0, 1, 1], [], []>} : vector<8x128xbf16>, vector<128x32xbf16>, vector<8x32xf32> -> vector<8x32xf32>
    %cst_9 = arith.constant 6.250000e-02 : f32
    %6 = vector.broadcast %cst_9 : f32 to vector<8x32xf32>
    %7 = arith.mulf %5, %6 : vector<8x32xf32>
    %c0_10 = arith.constant 0 : index
    %c0_11 = arith.constant 0 : index
    %8 = vector.load %arg2[%c0_10, %c0_11] : memref<1x32xf32, #tpu.memory_space<vmem>>, vector<1x32xf32>
    %9 = vector.broadcast %8 : vector<1x32xf32> to vector<8x32xf32>
    %10 = arith.addf %7, %9 : vector<8x32xf32>
    %11 = arith.truncf %10 : vector<8x32xf32> to vector<8x32xbf16>
    %c0_12 = arith.constant 0 : index
    %c0_13 = arith.constant 0 : index
    %12 = vector.load %arg4[%c0_12, %c0_13] : memref<32x32xbf16, #tpu.memory_space<vmem>>, vector<32x32xbf16>
    %cst_14 = arith.constant dense<0.000000e+00> : vector<8x32xf32>
    %13 = tpu.matmul %11, %12, %cst_14 {dimension_numbers = #tpu.dot_dimension_numbers<[1], [0], [0], [1], [0, 0, 1, 1], [], []>} : vector<8x32xbf16>, vector<32x32xbf16>, vector<8x32xf32> -> vector<8x32xf32>
    %c0_15 = arith.constant 0 : index
    %c0_16 = arith.constant 0 : index
    %14 = vector.load %arg8[%c0_15, %c0_16] : memref<1x32xf32, #tpu.memory_space<vmem>>, vector<1x32xf32>
    %15 = vector.broadcast %14 : vector<1x32xf32> to vector<8x32xf32>
    %16 = arith.addf %13, %15 : vector<8x32xf32>
    %c0_17 = arith.constant 0 : index
    %c0_18 = arith.constant 0 : index
    %17 = vector.load %arg5[%c0_17, %c0_18] : memref<32x32xbf16, #tpu.memory_space<vmem>>, vector<32x32xbf16>
    %cst_19 = arith.constant dense<0.000000e+00> : vector<8x32xf32>
    %18 = tpu.matmul %11, %17, %cst_19 {dimension_numbers = #tpu.dot_dimension_numbers<[1], [0], [0], [1], [0, 0, 1, 1], [], []>} : vector<8x32xbf16>, vector<32x32xbf16>, vector<8x32xf32> -> vector<8x32xf32>
    %c0_20 = arith.constant 0 : index
    %c0_21 = arith.constant 0 : index
    %19 = vector.load %arg9[%c0_20, %c0_21] : memref<1x32xf32, #tpu.memory_space<vmem>>, vector<1x32xf32>
    %20 = vector.broadcast %19 : vector<1x32xf32> to vector<8x32xf32>
    %21 = arith.addf %18, %20 : vector<8x32xf32>
    %c0_22 = arith.constant 0 : index
    %c0_23 = arith.constant 0 : index
    %22 = vector.load %arg6[%c0_22, %c0_23] : memref<32x32xbf16, #tpu.memory_space<vmem>>, vector<32x32xbf16>
    %cst_24 = arith.constant dense<0.000000e+00> : vector<8x32xf32>
    %23 = tpu.matmul %11, %22, %cst_24 {dimension_numbers = #tpu.dot_dimension_numbers<[1], [0], [0], [1], [0, 0, 1, 1], [], []>} : vector<8x32xbf16>, vector<32x32xbf16>, vector<8x32xf32> -> vector<8x32xf32>
    %c0_25 = arith.constant 0 : index
    %c0_26 = arith.constant 0 : index
    %24 = vector.load %arg10[%c0_25, %c0_26] : memref<1x32xf32, #tpu.memory_space<vmem>>, vector<1x32xf32>
    %25 = vector.broadcast %24 : vector<1x32xf32> to vector<8x32xf32>
    %26 = arith.addf %23, %25 : vector<8x32xf32>
    %27 = arith.truncf %16 : vector<8x32xf32> to vector<8x32xbf16>
    %c0_27 = arith.constant 0 : index
    %c0_28 = arith.constant 0 : index
    %28 = vector.load %arg3[%c0_27, %c0_28] : memref<128x32xbf16, #tpu.memory_space<vmem>>, vector<128x32xbf16>
    %29 = arith.addf %0, %28 : vector<128x32xbf16>
    %c0_29 = arith.constant 0 : index
    %c0_30 = arith.constant 0 : index
    %30 = vector.load %arg5[%c0_29, %c0_30] : memref<32x32xbf16, #tpu.memory_space<vmem>>, vector<32x32xbf16>
    %cst_31 = arith.constant dense<0.000000e+00> : vector<128x32xf32>
    %31 = tpu.matmul %29, %30, %cst_31 {dimension_numbers = #tpu.dot_dimension_numbers<[1], [0], [0], [1], [0, 0, 1, 1], [], []>} : vector<128x32xbf16>, vector<32x32xbf16>, vector<128x32xf32> -> vector<128x32xf32>
    %c0_32 = arith.constant 0 : index
    %c0_33 = arith.constant 0 : index
    %32 = vector.load %arg9[%c0_32, %c0_33] : memref<1x32xf32, #tpu.memory_space<vmem>>, vector<1x32xf32>
    %33 = vector.broadcast %32 : vector<1x32xf32> to vector<128x32xf32>
    %34 = arith.addf %31, %33 : vector<128x32xf32>
    %c0_34 = arith.constant 0 : index
    %c0_35 = arith.constant 0 : index
    %35 = vector.load %arg6[%c0_34, %c0_35] : memref<32x32xbf16, #tpu.memory_space<vmem>>, vector<32x32xbf16>
    %cst_36 = arith.constant dense<0.000000e+00> : vector<128x32xf32>
    %36 = tpu.matmul %29, %35, %cst_36 {dimension_numbers = #tpu.dot_dimension_numbers<[1], [0], [0], [1], [0, 0, 1, 1], [], []>} : vector<128x32xbf16>, vector<32x32xbf16>, vector<128x32xf32> -> vector<128x32xf32>
    %c0_37 = arith.constant 0 : index
    %c0_38 = arith.constant 0 : index
    %37 = vector.load %arg10[%c0_37, %c0_38] : memref<1x32xf32, #tpu.memory_space<vmem>>, vector<1x32xf32>
    %38 = vector.broadcast %37 : vector<1x32xf32> to vector<128x32xf32>
    %39 = arith.addf %36, %38 : vector<128x32xf32>
    %cst_39 = arith.constant dense<0.000000e+00> : vector<128x32xf32>
    %40 = tpu.matmul %2, %27, %cst_39 {dimension_numbers = #tpu.dot_dimension_numbers<[1], [0], [0], [1], [0, 0, 1, 1], [], []>} : vector<128x8xbf16>, vector<8x32xbf16>, vector<128x32xf32> -> vector<128x32xf32>
    %41 = arith.mulf %34, %40 : vector<128x32xf32>
    %42 = arith.truncf %41 : vector<128x32xf32> to vector<128x32xbf16>
    %cst_40 = arith.constant dense<0.000000e+00> : vector<128x4xf32>
    %43 = tpu.matmul %42, %3, %cst_40 {dimension_numbers = #tpu.dot_dimension_numbers<[1], [0], [0], [1], [0, 0, 1, 1], [], []>} : vector<128x32xbf16>, vector<32x4xbf16>, vector<128x4xf32> -> vector<128x4xf32>
    %44 = arith.extf %27 : vector<8x32xbf16> to vector<8x32xf32>
    %45 = arith.mulf %21, %44 : vector<8x32xf32>
    %46 = arith.truncf %45 : vector<8x32xf32> to vector<8x32xbf16>
    %cst_41 = arith.constant dense<0.000000e+00> : vector<8x4xf32>
    %47 = tpu.matmul %46, %3, %cst_41 {dimension_numbers = #tpu.dot_dimension_numbers<[1], [0], [0], [1], [0, 0, 1, 1], [], []>} : vector<8x32xbf16>, vector<32x4xbf16>, vector<8x4xf32> -> vector<8x4xf32>
    %48 = vector.shape_cast %43 : vector<128x4xf32> to vector<8x16x4xf32>
    %cst_42 = arith.constant dense<0xFF800000> : vector<8x4xf32>
    %49 = vector.multi_reduction <maximumf>, %48, %cst_42 [1] : vector<8x16x4xf32> to vector<8x4xf32>
    %50 = arith.maximumf %49, %47 : vector<8x4xf32>
    %51 = vector.shape_cast %50 : vector<8x4xf32> to vector<8x1x4xf32>
    %52 = vector.broadcast %51 : vector<8x1x4xf32> to vector<8x16x4xf32>
    %53 = arith.subf %48, %52 : vector<8x16x4xf32>
    %54 = math.exp %53 : vector<8x16x4xf32>
    %55 = arith.subf %47, %50 : vector<8x4xf32>
    %56 = math.exp %55 : vector<8x4xf32>
    %cst_43 = arith.constant dense<0.000000e+00> : vector<8x4xf32>
    %57 = vector.multi_reduction <add>, %54, %cst_43 [1] : vector<8x16x4xf32> to vector<8x4xf32>
    %58 = arith.addf %57, %56 : vector<8x4xf32>
    %59 = tpu.reciprocal %58 {approx = true} : vector<8x4xf32> -> vector<8x4xf32>
    %60 = vector.shape_cast %59 : vector<8x4xf32> to vector<8x1x4xf32>
    %61 = vector.broadcast %60 : vector<8x1x4xf32> to vector<8x16x4xf32>
    %62 = arith.mulf %54, %61 : vector<8x16x4xf32>
    %63 = vector.shape_cast %62 : vector<8x16x4xf32> to vector<128x4xf32>
    %64 = arith.mulf %56, %59 : vector<8x4xf32>
    %65 = arith.truncf %63 : vector<128x4xf32> to vector<128x4xbf16>
    %cst_44 = arith.constant dense<0.000000e+00> : vector<128x32xf32>
    %66 = tpu.matmul %65, %4, %cst_44 {dimension_numbers = #tpu.dot_dimension_numbers<[1], [0], [0], [1], [0, 0, 1, 1], [], []>} : vector<128x4xbf16>, vector<4x32xbf16>, vector<128x32xf32> -> vector<128x32xf32>
    %67 = arith.truncf %64 : vector<8x4xf32> to vector<8x4xbf16>
    %cst_45 = arith.constant dense<0.000000e+00> : vector<8x32xf32>
    %68 = tpu.matmul %67, %4, %cst_45 {dimension_numbers = #tpu.dot_dimension_numbers<[1], [0], [0], [1], [0, 0, 1, 1], [], []>} : vector<8x4xbf16>, vector<4x32xbf16>, vector<8x32xf32> -> vector<8x32xf32>
    %69 = arith.mulf %66, %39 : vector<128x32xf32>
    %70 = arith.truncf %69 : vector<128x32xf32> to vector<128x32xbf16>
    %cst_46 = arith.constant dense<0.000000e+00> : vector<8x32xf32>
    %71 = tpu.matmul %1, %70, %cst_46 {dimension_numbers = #tpu.dot_dimension_numbers<[1], [0], [0], [1], [0, 0, 1, 1], [], []>} : vector<8x128xbf16>, vector<128x32xbf16>, vector<8x32xf32> -> vector<8x32xf32>
    %72 = arith.mulf %68, %26 : vector<8x32xf32>
    %73 = arith.addf %71, %72 : vector<8x32xf32>
    %74 = arith.truncf %73 : vector<8x32xf32> to vector<8x32xbf16>
    %c0_47 = arith.constant 0 : index
    %c0_48 = arith.constant 0 : index
    %75 = vector.load %arg7[%c0_47, %c0_48] : memref<32x32xbf16, #tpu.memory_space<vmem>>, vector<32x32xbf16>
    %cst_49 = arith.constant dense<0.000000e+00> : vector<8x32xf32>
    %76 = tpu.matmul %74, %75, %cst_49 {dimension_numbers = #tpu.dot_dimension_numbers<[1], [0], [0], [1], [0, 0, 1, 1], [], []>} : vector<8x32xbf16>, vector<32x32xbf16>, vector<8x32xf32> -> vector<8x32xf32>
    %c0_50 = arith.constant 0 : index
    %c0_51 = arith.constant 0 : index
    %77 = vector.load %arg11[%c0_50, %c0_51] : memref<1x32xf32, #tpu.memory_space<vmem>>, vector<1x32xf32>
    %78 = vector.broadcast %77 : vector<1x32xf32> to vector<8x32xf32>
    %79 = arith.addf %76, %78 : vector<8x32xf32>
    %c0_52 = arith.constant 0 : index
    %c0_53 = arith.constant 0 : index
    %80 = vector.load %arg16[%c0_52, %c0_53] : memref<8x32xf32, #tpu.memory_space<vmem>>, vector<8x32xf32>
    tpu.vector_store %arg16[%c0_52, %c0_53], %79 {strides = array<i32>} : memref<8x32xf32, #tpu.memory_space<vmem>>, vector<8x32xf32>,
    return
  }
  func.func @transform_0(%arg0: i32) -> (i32, i32) {
    %c0_i32 = arith.constant 0 : i32
    %c0_i32_0 = arith.constant 0 : i32
    return %arg0, %c0_i32 : i32, i32
  }
  func.func @transform_1(%arg0: i32) -> (i32, i32) {
    %c0_i32 = arith.constant 0 : i32
    %c0_i32_0 = arith.constant 0 : i32
    %c0_i32_1 = arith.constant 0 : i32
    return %c0_i32, %c0_i32_0 : i32, i32
  }
  func.func @transform_2(%arg0: i32) -> (i32, i32) {
    %c0_i32 = arith.constant 0 : i32
    %c0_i32_0 = arith.constant 0 : i32
    %c0_i32_1 = arith.constant 0 : i32
    return %c0_i32, %c0_i32_0 : i32, i32
  }
  func.func @transform_3(%arg0: i32) -> (i32, i32) {
    %c0_i32 = arith.constant 0 : i32
    %c0_i32_0 = arith.constant 0 : i32
    %c0_i32_1 = arith.constant 0 : i32
    return %c0_i32, %c0_i32_0 : i32, i32
  }
  func.func @transform_4(%arg0: i32) -> (i32, i32) {
    %c0_i32 = arith.constant 0 : i32
    %c0_i32_0 = arith.constant 0 : i32
    %c0_i32_1 = arith.constant 0 : i32
    return %c0_i32, %c0_i32_0 : i32, i32
  }
  func.func @transform_5(%arg0: i32) -> (i32, i32) {
    %c0_i32 = arith.constant 0 : i32
    %c0_i32_0 = arith.constant 0 : i32
    %c0_i32_1 = arith.constant 0 : i32
    return %c0_i32, %c0_i32_0 : i32, i32
  }
  func.func @transform_6(%arg0: i32) -> (i32, i32) {
    %c0_i32 = arith.constant 0 : i32
    %c0_i32_0 = arith.constant 0 : i32
    %c0_i32_1 = arith.constant 0 : i32
    return %c0_i32, %c0_i32_0 : i32, i32
  }
  func.func @transform_7(%arg0: i32) -> (i32, i32) {
    %c0_i32 = arith.constant 0 : i32
    %c0_i32_0 = arith.constant 0 : i32
    %c0_i32_1 = arith.constant 0 : i32
    return %c0_i32, %c0_i32_0 : i32, i32
  }
  func.func @transform_8(%arg0: i32) -> (i32, i32) {
    %c0_i32 = arith.constant 0 : i32
    %c0_i32_0 = arith.constant 0 : i32
    %c0_i32_1 = arith.constant 0 : i32
    return %c0_i32, %c0_i32_0 : i32, i32
  }
  func.func @transform_9(%arg0: i32) -> (i32, i32) {
    %c0_i32 = arith.constant 0 : i32
    %c0_i32_0 = arith.constant 0 : i32
    %c0_i32_1 = arith.constant 0 : i32
    return %c0_i32, %c0_i32_0 : i32, i32
  }
  func.func @transform_10(%arg0: i32) -> (i32, i32) {
    %c0_i32 = arith.constant 0 : i32
    %c0_i32_0 = arith.constant 0 : i32
    %c0_i32_1 = arith.constant 0 : i32
    return %c0_i32, %c0_i32_0 : i32, i32
  }
  func.func @transform_11(%arg0: i32) -> (i32, i32) {
    %c0_i32 = arith.constant 0 : i32
    %c0_i32_0 = arith.constant 0 : i32
    %c0_i32_1 = arith.constant 0 : i32
    return %c0_i32, %c0_i32_0 : i32, i32
  }
  func.func @transform_12(%arg0: i32) -> (i32, i32) {
    %c0_i32 = arith.constant 0 : i32
    %c0_i32_0 = arith.constant 0 : i32
    %c0_i32_1 = arith.constant 0 : i32
    return %c0_i32, %c0_i32_0 : i32, i32
  }
  func.func @transform_13(%arg0: i32) -> (i32, i32) {
    %c0_i32 = arith.constant 0 : i32
    %c0_i32_0 = arith.constant 0 : i32
    %c0_i32_1 = arith.constant 0 : i32
    return %c0_i32, %c0_i32_0 : i32, i32
  }
  func.func @transform_14(%arg0: i32) -> (i32, i32) {
    %c0_i32 = arith.constant 0 : i32
    %c0_i32_0 = arith.constant 0 : i32
    %c0_i32_1 = arith.constant 0 : i32
    return %c0_i32, %c0_i32_0 : i32, i32
  }
  func.func @transform_15(%arg0: i32) -> (i32, i32) {
    %c0_i32 = arith.constant 0 : i32
    %c0_i32_0 = arith.constant 0 : i32
    return %arg0, %c0_i32 : i32, i32
  }
}

</mosaic_0001>

<llo_original>
// kernel: tpu_custom_call.1
$region0: #{tpu_custom_call.1}
  #allocation0 [shape = 'u32[]', space=smem, size = 0x4, offset = 0x4, fixed_abs, tag = 'smem constant byte address 0x4 - core index']
  #allocation1 [shape = 'u32[144,128]{1,0:T(1,128)}', space=vmem, size = 0x12000, scoped, tag = 'internal scratch']
  %s0 = inlined_call_operand.vmem [shape: bf16[256,32], index: 0, kind: input, shape index: {}]
  %s1 = inlined_call_operand.vmem [shape: f32[1,32], index: 1, kind: input, shape index: {}]
  %s2 = inlined_call_operand.vmem [shape: bf16[128,32], index: 2, kind: input, shape index: {}]
  %s3 = inlined_call_operand.vmem [shape: bf16[32,32], index: 3, kind: input, shape index: {}]
  %s4 = inlined_call_operand.vmem [shape: bf16[32,32], index: 4, kind: input, shape index: {}]
  %s5 = inlined_call_operand.vmem [shape: bf16[32,32], index: 5, kind: input, shape index: {}]
  %s6 = inlined_call_operand.vmem [shape: bf16[32,32], index: 6, kind: input, shape index: {}]
  %s7 = inlined_call_operand.vmem [shape: f32[1,32], index: 7, kind: input, shape index: {}]
  %s8 = inlined_call_operand.vmem [shape: f32[1,32], index: 8, kind: input, shape index: {}]
  %s9 = inlined_call_operand.vmem [shape: f32[1,32], index: 9, kind: input, shape index: {}]
  %s10 = inlined_call_operand.vmem [shape: f32[1,32], index: 10, kind: input, shape index: {}]
  %s11 = inlined_call_operand.vmem [shape: bf16[32,4], index: 11, kind: input, shape index: {}]
  %s12 = inlined_call_operand.vmem [shape: bf16[4,32], index: 12, kind: input, shape index: {}]
  %s13 = inlined_call_operand.vmem [shape: bf16[8,128], index: 13, kind: input, shape index: {}]
  %s14 = inlined_call_operand.vmem [shape: bf16[128,8], index: 14, kind: input, shape index: {}]
  %s15 = inlined_call_operand.hbm [shape: f32[16,32], index: 15, kind: output, shape index: {}]
  %s16 = sld [smem:[#allocation0]]
  $region93: #{tpu_custom_call.1} parent=0
    _
  %s18 = ssub.s32 1, %s16
  %s19 = scalar_select 0, %s18, %s16
  $region1: #{tpu_custom_call.1} parent=0
    #allocation2 [shape = 'u8[8192]{0}', space=vmem, size = 0x2000, scoped, tag = 'output window, operand 0']
    #allocation3 [shape = 's32[2]{0}', space=sflag, size = 0x8, scoped, tag = 'scoped memory for tpu_custom_call.1']
    %20 = vsyncpa [#allocation3], 0
    %s21 = scalar_lea.sflag [#allocation3], 1
    %22 = vsyncpa %s21, 0
    loop: start=0, step=1, limit=4
    $region2: #{tpu_custom_call.1} parent=1 // loop_pre_header
      _
    $region3: #{tpu_custom_call.1} parent=1 // loop_header
      %s24 = sphi 0, %s28
      %p25 = scmp.ge.s32.totalorder %s24, 4
      %s34 = sphi 0, %s36
      %s37 = sphi 0, %s34
      %s38 = sphi 0, %s37
      %s54 = sphi 0, %s38
      %s58 = sphi 0, %s58
      %s60 = sphi 0, %s58
      %s61 = sphi 0, %s60
      %s75 = sphi 0, %s61
      %s79 = sphi 0, %s79
      %s81 = sphi 0, %s79
      %s82 = sphi 0, %s81
      %s96 = sphi 0, %s82
      %s100 = sphi 0, %s100
      %s102 = sphi 0, %s100
      %s103 = sphi 0, %s102
      %s117 = sphi 0, %s103
      %s121 = sphi 0, %s121
      %s123 = sphi 0, %s121
      %s124 = sphi 0, %s123
      %s138 = sphi 0, %s124
      %s142 = sphi 0, %s142
      %s144 = sphi 0, %s142
      %s145 = sphi 0, %s144
      %s159 = sphi 0, %s145
      %s163 = sphi 0, %s163
      %s165 = sphi 0, %s163
      %s166 = sphi 0, %s165
      %s180 = sphi 0, %s166
      %s184 = sphi 0, %s184
      %s186 = sphi 0, %s184
      %s187 = sphi 0, %s186
      %s201 = sphi 0, %s187
      %s205 = sphi 0, %s205
      %s207 = sphi 0, %s205
      %s208 = sphi 0, %s207
      %s222 = sphi 0, %s208
      %s226 = sphi 0, %s226
      %s228 = sphi 0, %s226
      %s229 = sphi 0, %s228
      %s243 = sphi 0, %s229
      %s247 = sphi 0, %s247
      %s249 = sphi 0, %s247
      %s250 = sphi 0, %s249
      %s264 = sphi 0, %s250
      %s268 = sphi 0, %s268
      %s270 = sphi 0, %s268
      %s271 = sphi 0, %s270
      %s285 = sphi 0, %s271
      %s289 = sphi 0, %s289
      %s291 = sphi 0, %s289
      %s292 = sphi 0, %s291
      %s306 = sphi 0, %s292
      %s310 = sphi 0, %s310
      %s312 = sphi 0, %s310
      %s313 = sphi 0, %s312
      %s327 = sphi 0, %s313
      %s331 = sphi 0, %s331
      %s333 = sphi 0, %s331
      %s334 = sphi 0, %s333
      %s348 = sphi 0, %s334
      %s354 = sphi 0, %s356
      %s357 = sphi 0, %s354
      %s358 = sphi 0, %s357
      %s374 = sphi 0, %s358
    $region4: #{tpu_custom_call.1} parent=1 // loop_header_branch
      %27 = sbr.rel (%p25) target = $region8
    $region5: #{tpu_custom_call.1} parent=1 // loop_body
      %s29 = ssub.s32 %s24, 1
      %s30 = ssub.s32 %s24, 2
      %s31 = sadd.s32 %s24, 1
      %s32 = ssub.s32 %s24, %s31
      %p33 = scmp.eq.s32.totalorder %s32, 0
      %s35 = sadd.s32 %s34, 1
      %s36 = scalar_select %p33, %s34, %s35
      %p39 = pneg %p33
      %p40 = scmp.eq.s32.totalorder %s24, 1
      %p41 = por %p39, %p40
      %p42 = scmp.ne.s32.totalorder %s34, %s37
      %p43 = scmp.eq.s32.totalorder %s24, 0
      %p44 = por %p42, %p43
      %p45 = scmp.ne.s32.totalorder %s34, %s37
      %p46 = scmp.eq.s32.totalorder %s29, 1
      %p47 = por %p45, %p46
      %p48 = scmp.ne.s32.totalorder %s37, %s38
      %p49 = scmp.eq.s32.totalorder %s29, 0
      %p50 = por %p48, %p49
      %p51 = scmp.ne.s32.totalorder %s37, %s38
      %p52 = scmp.eq.s32.totalorder %s30, 1
      %p53 = por %p51, %p52
      %p55 = scmp.ne.s32.totalorder %s38, %s54
      %p56 = scmp.eq.s32.totalorder %s30, 0
      %p57 = por %p55, %p56
      %s59 = sadd.s32 %s58, 1
      %p62 = scmp.eq.s32.totalorder %s24, 1
      %p63 = scmp.ne.s32.totalorder %s58, %s60
      %p64 = scmp.eq.s32.totalorder %s24, 0
      %p65 = por %p63, %p64
      %p66 = scmp.ne.s32.totalorder %s58, %s60
      %p67 = scmp.eq.s32.totalorder %s29, 1
      %p68 = por %p66, %p67
      %p69 = scmp.ne.s32.totalorder %s60, %s61
      %p70 = scmp.eq.s32.totalorder %s29, 0
      %p71 = por %p69, %p70
      %p72 = scmp.ne.s32.totalorder %s60, %s61
      %p73 = scmp.eq.s32.totalorder %s30, 1
      %p74 = por %p72, %p73
      %p76 = scmp.ne.s32.totalorder %s61, %s75
      %p77 = scmp.eq.s32.totalorder %s30, 0
      %p78 = por %p76, %p77
      %s80 = sadd.s32 %s79, 1
      %p83 = scmp.eq.s32.totalorder %s24, 1
      %p84 = scmp.ne.s32.totalorder %s79, %s81
      %p85 = scmp.eq.s32.totalorder %s24, 0
      %p86 = por %p84, %p85
      %p87 = scmp.ne.s32.totalorder %s79, %s81
      %p88 = scmp.eq.s32.totalorder %s29, 1
      %p89 = por %p87, %p88
      %p90 = scmp.ne.s32.totalorder %s81, %s82
      %p91 = scmp.eq.s32.totalorder %s29, 0
      %p92 = por %p90, %p91
      %p93 = scmp.ne.s32.totalorder %s81, %s82
      %p94 = scmp.eq.s32.totalorder %s30, 1
      %p95 = por %p93, %p94
      %p97 = scmp.ne.s32.totalorder %s82, %s96
      %p98 = scmp.eq.s32.totalorder %s30, 0
      %p99 = por %p97, %p98
      %s101 = sadd.s32 %s100, 1
      %p104 = scmp.eq.s32.totalorder %s24, 1
      %p105 = scmp.ne.s32.totalorder %s100, %s102
      %p106 = scmp.eq.s32.totalorder %s24, 0
      %p107 = por %p105, %p106
      %p108 = scmp.ne.s32.totalorder %s100, %s102
      %p109 = scmp.eq.s32.totalorder %s29, 1
      %p110 = por %p108, %p109
      %p111 = scmp.ne.s32.totalorder %s102, %s103
      %p112 = scmp.eq.s32.totalorder %s29, 0
      %p113 = por %p111, %p112
      %p114 = scmp.ne.s32.totalorder %s102, %s103
      %p115 = scmp.eq.s32.totalorder %s30, 1
      %p116 = por %p114, %p115
      %p118 = scmp.ne.s32.totalorder %s103, %s117
      %p119 = scmp.eq.s32.totalorder %s30, 0
      %p120 = por %p118, %p119
      %s122 = sadd.s32 %s121, 1
      %p125 = scmp.eq.s32.totalorder %s24, 1
      %p126 = scmp.ne.s32.totalorder %s121, %s123
      %p127 = scmp.eq.s32.totalorder %s24, 0
      %p128 = por %p126, %p127
      %p129 = scmp.ne.s32.totalorder %s121, %s123
      %p130 = scmp.eq.s32.totalorder %s29, 1
      %p131 = por %p129, %p130
      %p132 = scmp.ne.s32.totalorder %s123, %s124
      %p133 = scmp.eq.s32.totalorder %s29, 0
      %p134 = por %p132, %p133
      %p135 = scmp.ne.s32.totalorder %s123, %s124
      %p136 = scmp.eq.s32.totalorder %s30, 1
      %p137 = por %p135, %p136
      %p139 = scmp.ne.s32.totalorder %s124, %s138
      %p140 = scmp.eq.s32.totalorder %s30, 0
      %p141 = por %p139, %p140
      %s143 = sadd.s32 %s142, 1
      %p146 = scmp.eq.s32.totalorder %s24, 1
      %p147 = scmp.ne.s32.totalorder %s142, %s144
      %p148 = scmp.eq.s32.totalorder %s24, 0
      %p149 = por %p147, %p148
      %p150 = scmp.ne.s32.totalorder %s142, %s144
      %p151 = scmp.eq.s32.totalorder %s29, 1
      %p152 = por %p150, %p151
      %p153 = scmp.ne.s32.totalorder %s144, %s145
      %p154 = scmp.eq.s32.totalorder %s29, 0
      %p155 = por %p153, %p154
      %p156 = scmp.ne.s32.totalorder %s144, %s145
      %p157 = scmp.eq.s32.totalorder %s30, 1
      %p158 = por %p156, %p157
      %p160 = scmp.ne.s32.totalorder %s145, %s159
      %p161 = scmp.eq.s32.totalorder %s30, 0
      %p162 = por %p160, %p161
      %s164 = sadd.s32 %s163, 1
      %p167 = scmp.eq.s32.totalorder %s24, 1
      %p168 = scmp.ne.s32.totalorder %s163, %s165
      %p169 = scmp.eq.s32.totalorder %s24, 0
      %p170 = por %p168, %p169
      %p171 = scmp.ne.s32.totalorder %s163, %s165
      %p172 = scmp.eq.s32.totalorder %s29, 1
      %p173 = por %p171, %p172
      %p174 = scmp.ne.s32.totalorder %s165, %s166
      %p175 = scmp.eq.s32.totalorder %s29, 0
      %p176 = por %p174, %p175
      %p177 = scmp.ne.s32.totalorder %s165, %s166
      %p178 = scmp.eq.s32.totalorder %s30, 1
      %p179 = por %p177, %p178
      %p181 = scmp.ne.s32.totalorder %s166, %s180
      %p182 = scmp.eq.s32.totalorder %s30, 0
      %p183 = por %p181, %p182
      %s185 = sadd.s32 %s184, 1
      %p188 = scmp.eq.s32.totalorder %s24, 1
      %p189 = scmp.ne.s32.totalorder %s184, %s186
      %p190 = scmp.eq.s32.totalorder %s24, 0
      %p191 = por %p189, %p190
      %p192 = scmp.ne.s32.totalorder %s184, %s186
      %p193 = scmp.eq.s32.totalorder %s29, 1
      %p194 = por %p192, %p193
      %p195 = scmp.ne.s32.totalorder %s186, %s187
      %p196 = scmp.eq.s32.totalorder %s29, 0
      %p197 = por %p195, %p196
      %p198 = scmp.ne.s32.totalorder %s186, %s187
      %p199 = scmp.eq.s32.totalorder %s30, 1
      %p200 = por %p198, %p199
      %p202 = scmp.ne.s32.totalorder %s187, %s201
      %p203 = scmp.eq.s32.totalorder %s30, 0
      %p204 = por %p202, %p203
      %s206 = sadd.s32 %s205, 1
      %p209 = scmp.eq.s32.totalorder %s24, 1
      %p210 = scmp.ne.s32.totalorder %s205, %s207
      %p211 = scmp.eq.s32.totalorder %s24, 0
      %p212 = por %p210, %p211
      %p213 = scmp.ne.s32.totalorder %s205, %s207
      %p214 = scmp.eq.s32.totalorder %s29, 1
      %p215 = por %p213, %p214
      %p216 = scmp.ne.s32.totalorder %s207, %s208
      %p217 = scmp.eq.s32.totalorder %s29, 0
      %p218 = por %p216, %p217
      %p219 = scmp.ne.s32.totalorder %s207, %s208
      %p220 = scmp.eq.s32.totalorder %s30, 1
      %p221 = por %p219, %p220
      %p223 = scmp.ne.s32.totalorder %s208, %s222
      %p224 = scmp.eq.s32.totalorder %s30, 0
      %p225 = por %p223, %p224
      %s227 = sadd.s32 %s226, 1
      %p230 = scmp.eq.s32.totalorder %s24, 1
      %p231 = scmp.ne.s32.totalorder %s226, %s228
      %p232 = scmp.eq.s32.totalorder %s24, 0
      %p233 = por %p231, %p232
      %p234 = scmp.ne.s32.totalorder %s226, %s228
      %p235 = scmp.eq.s32.totalorder %s29, 1
      %p236 = por %p234, %p235
      %p237 = scmp.ne.s32.totalorder %s228, %s229
      %p238 = scmp.eq.s32.totalorder %s29, 0
      %p239 = por %p237, %p238
      %p240 = scmp.ne.s32.totalorder %s228, %s229
      %p241 = scmp.eq.s32.totalorder %s30, 1
      %p242 = por %p240, %p241
      %p244 = scmp.ne.s32.totalorder %s229, %s243
      %p245 = scmp.eq.s32.totalorder %s30, 0
      %p246 = por %p244, %p245
      %s248 = sadd.s32 %s247, 1
      %p251 = scmp.eq.s32.totalorder %s24, 1
      %p252 = scmp.ne.s32.totalorder %s247, %s249
      %p253 = scmp.eq.s32.totalorder %s24, 0
      %p254 = por %p252, %p253
      %p255 = scmp.ne.s32.totalorder %s247, %s249
      %p256 = scmp.eq.s32.totalorder %s29, 1
      %p257 = por %p255, %p256
      %p258 = scmp.ne.s32.totalorder %s249, %s250
      %p259 = scmp.eq.s32.totalorder %s29, 0
      %p260 = por %p258, %p259
      %p261 = scmp.ne.s32.totalorder %s249, %s250
      %p262 = scmp.eq.s32.totalorder %s30, 1
      %p263 = por %p261, %p262
      %p265 = scmp.ne.s32.totalorder %s250, %s264
      %p266 = scmp.eq.s32.totalorder %s30, 0
      %p267 = por %p265, %p266
      %s269 = sadd.s32 %s268, 1
      %p272 = scmp.eq.s32.totalorder %s24, 1
      %p273 = scmp.ne.s32.totalorder %s268, %s270
      %p274 = scmp.eq.s32.totalorder %s24, 0
      %p275 = por %p273, %p274
      %p276 = scmp.ne.s32.totalorder %s268, %s270
      %p277 = scmp.eq.s32.totalorder %s29, 1
      %p278 = por %p276, %p277
      %p279 = scmp.ne.s32.totalorder %s270, %s271
      %p280 = scmp.eq.s32.totalorder %s29, 0
      %p281 = por %p279, %p280
      %p282 = scmp.ne.s32.totalorder %s270, %s271
      %p283 = scmp.eq.s32.totalorder %s30, 1
      %p284 = por %p282, %p283
      %p286 = scmp.ne.s32.totalorder %s271, %s285
      %p287 = scmp.eq.s32.totalorder %s30, 0
      %p288 = por %p286, %p287
      %s290 = sadd.s32 %s289, 1
      %p293 = scmp.eq.s32.totalorder %s24, 1
      %p294 = scmp.ne.s32.totalorder %s289, %s291
      %p295 = scmp.eq.s32.totalorder %s24, 0
      %p296 = por %p294, %p295
      %p297 = scmp.ne.s32.totalorder %s289, %s291
      %p298 = scmp.eq.s32.totalorder %s29, 1
      %p299 = por %p297, %p298
      %p300 = scmp.ne.s32.totalorder %s291, %s292
      %p301 = scmp.eq.s32.totalorder %s29, 0
      %p302 = por %p300, %p301
      %p303 = scmp.ne.s32.totalorder %s291, %s292
      %p304 = scmp.eq.s32.totalorder %s30, 1
      %p305 = por %p303, %p304
      %p307 = scmp.ne.s32.totalorder %s292, %s306
      %p308 = scmp.eq.s32.totalorder %s30, 0
      %p309 = por %p307, %p308
      %s311 = sadd.s32 %s310, 1
      %p314 = scmp.eq.s32.totalorder %s24, 1
      %p315 = scmp.ne.s32.totalorder %s310, %s312
      %p316 = scmp.eq.s32.totalorder %s24, 0
      %p317 = por %p315, %p316
      %p318 = scmp.ne.s32.totalorder %s310, %s312
      %p319 = scmp.eq.s32.totalorder %s29, 1
      %p320 = por %p318, %p319
      %p321 = scmp.ne.s32.totalorder %s312, %s313
      %p322 = scmp.eq.s32.totalorder %s29, 0
      %p323 = por %p321, %p322
      %p324 = scmp.ne.s32.totalorder %s312, %s313
      %p325 = scmp.eq.s32.totalorder %s30, 1
      %p326 = por %p324, %p325
      %p328 = scmp.ne.s32.totalorder %s313, %s327
      %p329 = scmp.eq.s32.totalorder %s30, 0
      %p330 = por %p328, %p329
      %s332 = sadd.s32 %s331, 1
      %p335 = scmp.eq.s32.totalorder %s24, 1
      %p336 = scmp.ne.s32.totalorder %s331, %s333
      %p337 = scmp.eq.s32.totalorder %s24, 0
      %p338 = por %p336, %p337
      %p339 = scmp.ne.s32.totalorder %s331, %s333
      %p340 = scmp.eq.s32.totalorder %s29, 1
      %p341 = por %p339, %p340
      %p342 = scmp.ne.s32.totalorder %s333, %s334
      %p343 = scmp.eq.s32.totalorder %s29, 0
      %p344 = por %p342, %p343
      %p345 = scmp.ne.s32.totalorder %s333, %s334
      %p346 = scmp.eq.s32.totalorder %s30, 1
      %p347 = por %p345, %p346
      %p349 = scmp.ne.s32.totalorder %s334, %s348
      %p350 = scmp.eq.s32.totalorder %s30, 0
      %p351 = por %p349, %p350
      %s352 = ssub.s32 %s24, %s31
      %p353 = scmp.eq.s32.totalorder %s352, 0
      %s355 = sadd.s32 %s354, 1
      %s356 = scalar_select %p353, %s354, %s355
      %p359 = pneg %p353
      %p360 = scmp.eq.s32.totalorder %s24, 1
      %p361 = por %p359, %p360
      %p362 = scmp.ne.s32.totalorder %s354, %s357
      %p363 = scmp.eq.s32.totalorder %s24, 0
      %p364 = por %p362, %p363
      %p365 = scmp.ne.s32.totalorder %s354, %s357
      %p366 = scmp.eq.s32.totalorder %s29, 1
      %p367 = por %p365, %p366
      %p368 = scmp.ne.s32.totalorder %s357, %s358
      %p369 = scmp.eq.s32.totalorder %s29, 0
      %p370 = por %p368, %p369
      %p371 = scmp.ne.s32.totalorder %s357, %s358
      %p372 = scmp.eq.s32.totalorder %s30, 1
      %p373 = por %p371, %p372
      %p375 = scmp.ne.s32.totalorder %s358, %s374
      %p376 = scmp.eq.s32.totalorder %s30, 0
      %p377 = por %p375, %p376
      %p378 = scmp.le.s32.totalorder 1, %s24
      %p379 = scmp.lt.s32.totalorder %s24, 3
      %p380 = pnand %p378, %p379
      %p381 = pneg %p380
      // Predicated region
      $region9: #{tpu_custom_call.1} parent=5 // pred_check
        _
      $region10: #{tpu_custom_call.1} parent=5 // pred_check_branch
        %383 = sbr.rel (%p380) target = $region12
      $region11: #{tpu_custom_call.1} parent=5 // pred_region
        %s384 = ssub.s32 %s24, 1
        // Predicated region
        $region13: #{tpu_custom_call.1} parent=11 // pred_check
          %p385 = pneg %p71
        $region14: #{tpu_custom_call.1} parent=11 // pred_check_branch
          %387 = sbr.rel (%p385) target = $region16
        $region15: #{tpu_custom_call.1} parent=11 // pred_region
          _
        $region16: #{tpu_custom_call.1} parent=11 // pred_fallthru
          _
        // Predicated region
        $region17: #{tpu_custom_call.1} parent=11 // pred_check
          %p388 = pneg %p92
        $region18: #{tpu_custom_call.1} parent=11 // pred_check_branch
          %390 = sbr.rel (%p388) target = $region20
        $region19: #{tpu_custom_call.1} parent=11 // pred_region
          _
        $region20: #{tpu_custom_call.1} parent=11 // pred_fallthru
          _
        // Predicated region
        $region21: #{tpu_custom_call.1} parent=11 // pred_check
          %p391 = pneg %p113
        $region22: #{tpu_custom_call.1} parent=11 // pred_check_branch
          %393 = sbr.rel (%p391) target = $region24
        $region23: #{tpu_custom_call.1} parent=11 // pred_region
          _
        $region24: #{tpu_custom_call.1} parent=11 // pred_fallthru
          _
        // Predicated region
        $region25: #{tpu_custom_call.1} parent=11 // pred_check
          %p394 = pneg %p134
        $region26: #{tpu_custom_call.1} parent=11 // pred_check_branch
          %396 = sbr.rel (%p394) target = $region28
        $region27: #{tpu_custom_call.1} parent=11 // pred_region
          _
        $region28: #{tpu_custom_call.1} parent=11 // pred_fallthru
          _
        // Predicated region
        $region29: #{tpu_custom_call.1} parent=11 // pred_check
          %p397 = pneg %p155
        $region30: #{tpu_custom_call.1} parent=11 // pred_check_branch
          %399 = sbr.rel (%p397) target = $region32
        $region31: #{tpu_custom_call.1} parent=11 // pred_region
          _
        $region32: #{tpu_custom_call.1} parent=11 // pred_fallthru
          _
        // Predicated region
        $region33: #{tpu_custom_call.1} parent=11 // pred_check
          %p400 = pneg %p176
        $region34: #{tpu_custom_call.1} parent=11 // pred_check_branch
          %402 = sbr.rel (%p400) target = $region36
        $region35: #{tpu_custom_call.1} parent=11 // pred_region
          _
        $region36: #{tpu_custom_call.1} parent=11 // pred_fallthru
          _
        // Predicated region
        $region37: #{tpu_custom_call.1} parent=11 // pred_check
          %p403 = pneg %p197
        $region38: #{tpu_custom_call.1} parent=11 // pred_check_branch
          %405 = sbr.rel (%p403) target = $region40
        $region39: #{tpu_custom_call.1} parent=11 // pred_region
          _
        $region40: #{tpu_custom_call.1} parent=11 // pred_fallthru
          _
        // Predicated region
        $region41: #{tpu_custom_call.1} parent=11 // pred_check
          %p406 = pneg %p218
        $region42: #{tpu_custom_call.1} parent=11 // pred_check_branch
          %408 = sbr.rel (%p406) target = $region44
        $region43: #{tpu_custom_call.1} parent=11 // pred_region
          _
        $region44: #{tpu_custom_call.1} parent=11 // pred_fallthru
          _
        // Predicated region
        $region45: #{tpu_custom_call.1} parent=11 // pred_check
          %p409 = pneg %p239
        $region46: #{tpu_custom_call.1} parent=11 // pred_check_branch
          %411 = sbr.rel (%p409) target = $region48
        $region47: #{tpu_custom_call.1} parent=11 // pred_region
          _
        $region48: #{tpu_custom_call.1} parent=11 // pred_fallthru
          _
        // Predicated region
        $region49: #{tpu_custom_call.1} parent=11 // pred_check
          %p412 = pneg %p260
        $region50: #{tpu_custom_call.1} parent=11 // pred_check_branch
          %414 = sbr.rel (%p412) target = $region52
        $region51: #{tpu_custom_call.1} parent=11 // pred_region
          _
        $region52: #{tpu_custom_call.1} parent=11 // pred_fallthru
          _
        // Predicated region
        $region53: #{tpu_custom_call.1} parent=11 // pred_check
          %p415 = pneg %p281
        $region54: #{tpu_custom_call.1} parent=11 // pred_check_branch
          %417 = sbr.rel (%p415) target = $region56
        $region55: #{tpu_custom_call.1} parent=11 // pred_region
          _
        $region56: #{tpu_custom_call.1} parent=11 // pred_fallthru
          _
        // Predicated region
        $region57: #{tpu_custom_call.1} parent=11 // pred_check
          %p418 = pneg %p302
        $region58: #{tpu_custom_call.1} parent=11 // pred_check_branch
          %420 = sbr.rel (%p418) target = $region60
        $region59: #{tpu_custom_call.1} parent=11 // pred_region
          _
        $region60: #{tpu_custom_call.1} parent=11 // pred_fallthru
          _
        // Predicated region
        $region61: #{tpu_custom_call.1} parent=11 // pred_check
          %p421 = pneg %p323
        $region62: #{tpu_custom_call.1} parent=11 // pred_check_branch
          %423 = sbr.rel (%p421) target = $region64
        $region63: #{tpu_custom_call.1} parent=11 // pred_region
          _
        $region64: #{tpu_custom_call.1} parent=11 // pred_fallthru
          _
        // Predicated region
        $region65: #{tpu_custom_call.1} parent=11 // pred_check
          %p424 = pneg %p344
        $region66: #{tpu_custom_call.1} parent=11 // pred_check_branch
          %426 = sbr.rel (%p424) target = $region68
        $region67: #{tpu_custom_call.1} parent=11 // pred_region
          _
        $region68: #{tpu_custom_call.1} parent=11 // pred_fallthru
          _
      $region12: #{tpu_custom_call.1} parent=5 // pred_fallthru
        _
      %p427 = scmp.lt.s32.totalorder %s24, 2
      // Predicated region
      $region69: #{tpu_custom_call.1} parent=5 // pred_check
        %p428 = pneg %p427
      $region70: #{tpu_custom_call.1} parent=5 // pred_check_branch
        %430 = sbr.rel (%p428) target = $region72
      $region71: #{tpu_custom_call.1} parent=5 // pred_region
        // Predicated region
        $region73: #{tpu_custom_call.1} parent=71 // pred_check
          %p431 = pneg %p44
        $region74: #{tpu_custom_call.1} parent=71 // pred_check_branch
          %433 = sbr.rel (%p431) target = $region76
        $region75: #{tpu_custom_call.1} parent=71 // pred_region
          %s434 = smul.u32 16, %s24
          %p435 = scmp.lt.s32.totalorder %s434, 31
          %s436 = scalar_select %p435, %s434, 31
          %s437 = smul.addr %s436, 4
          %s438 = scalar_lea.vmem %s0, %s437
          %s439 = smul.u32 16, %s24
        $region76: #{tpu_custom_call.1} parent=71 // pred_fallthru
          _
      $region72: #{tpu_custom_call.1} parent=5 // pred_fallthru
        _
      %p440 = scmp.le.s32.totalorder 1, %s24
      %p441 = scmp.lt.s32.totalorder %s24, 3
      %p442 = pnand %p440, %p441
      %p443 = pneg %p442
      // Predicated region
      $region77: #{tpu_custom_call.1} parent=5 // pred_check
        _
      $region78: #{tpu_custom_call.1} parent=5 // pred_check_branch
        %445 = sbr.rel (%p442) target = $region80
      $region79: #{tpu_custom_call.1} parent=5 // pred_region
        %s446 = ssub.s32 %s24, 1
        %s447 = smul.u32 16, %s29
        %p448 = scmp.lt.s32.totalorder %s447, 31
        %s449 = scalar_select %p448, %s447, 31
        %s450 = smul.addr %s449, 4
        %s451 = scalar_lea.vmem %s0, %s450
        %p452 = pneg %p50
        %p453 = pneg %p47
        %p454 = pneg %p71
        %p455 = pneg %p68
        %p456 = pneg %p92
        %p457 = pneg %p89
        %p458 = pneg %p113
        %p459 = pneg %p110
        %p460 = pneg %p134
        %p461 = pneg %p131
        %p462 = pneg %p155
        %p463 = pneg %p152
        %p464 = pneg %p176
        %p465 = pneg %p173
        %p466 = pneg %p197
        %p467 = pneg %p194
        %p468 = pneg %p218
        %p469 = pneg %p215
        %p470 = pneg %p239
        %p471 = pneg %p236
        %p472 = pneg %p260
        %p473 = pneg %p257
        %p474 = pneg %p281
        %p475 = pneg %p278
        %p476 = pneg %p302
        %p477 = pneg %p299
        %p478 = pneg %p323
        %p479 = pneg %p320
        %p480 = pneg %p344
        %p481 = pneg %p341
        %p482 = pneg %p370
        %p483 = pneg %p367
        %s484 = sand.u32 %s357, 1
        %s485 = scalar_lea.sflag [#allocation3], %s484
        %s486 = sand.u32 %s357, 1
        %s487 = smul.addr %s486, 8
        %s488 = scalar_lea.vmem [#allocation2], %s487
        %s489 = smul.u32 16, %s29
        %p490 = scmp.lt.s32.totalorder %s489, 31
        %s491 = scalar_select %p490, %s489, 31
        %s492 = smul.addr %s491, 4
        %s493 = scalar_lea.vmem %s0, %s492
        %s494 = smul.u32 16, %s29
        %v496 = vld [vmem:[%s493] sm:$0xf]
        %v497 = vld [vmem:[%s493 + $0x4] sm:$0xf]
        %v498 = vld [vmem:[%s493 + $0x8] sm:$0xf]
        %v499 = vld [vmem:[%s493 + $0xc] sm:$0xf]
        %v500 = vld [vmem:[%s493 + $0x10] sm:$0xf]
        %v501 = vld [vmem:[%s493 + $0x14] sm:$0xf]
        %v502 = vld [vmem:[%s493 + $0x18] sm:$0xf]
        %v503 = vld [vmem:[%s493 + $0x1c] sm:$0xf]
        %v504 = vld [vmem:[%s493 + $0x20] sm:$0xf]
        %v505 = vld [vmem:[%s493 + $0x24] sm:$0xf]
        %v506 = vld [vmem:[%s493 + $0x28] sm:$0xf]
        %v507 = vld [vmem:[%s493 + $0x2c] sm:$0xf]
        %v508 = vld [vmem:[%s493 + $0x30] sm:$0xf]
        %v509 = vld [vmem:[%s493 + $0x34] sm:$0xf]
        %v510 = vld [vmem:[%s493 + $0x38] sm:$0xf]
        %v511 = vld [vmem:[%s493 + $0x3c] sm:$0xf]
        %v512 = vld [vmem:[%s13] sm:$0xf]
        %v513 = vld [vmem:[%s14] sm:$0xf]
        %v514 = vld [vmem:[%s14 + $0x4] sm:$0xf]
        %v515 = vld [vmem:[%s14 + $0x8] sm:$0xf]
        %v516 = vld [vmem:[%s14 + $0xc] sm:$0xf]
        %v517 = vld [vmem:[%s14 + $0x10] sm:$0xf]
        %v518 = vld [vmem:[%s14 + $0x14] sm:$0xf]
        %v519 = vld [vmem:[%s14 + $0x18] sm:$0xf]
        %v520 = vld [vmem:[%s14 + $0x1c] sm:$0xf]
        %v521 = vld [vmem:[%s14 + $0x20] sm:$0xf]
        %v522 = vld [vmem:[%s14 + $0x24] sm:$0xf]
        %v523 = vld [vmem:[%s14 + $0x28] sm:$0xf]
        %v524 = vld [vmem:[%s14 + $0x2c] sm:$0xf]
        %v525 = vld [vmem:[%s14 + $0x30] sm:$0xf]
        %v526 = vld [vmem:[%s14 + $0x34] sm:$0xf]
        %v527 = vld [vmem:[%s14 + $0x38] sm:$0xf]
        %v528 = vld [vmem:[%s14 + $0x3c] sm:$0xf]
        %v529 = vld [vmem:[%s11] sm:$0xf]
        %v530 = vld [vmem:[%s11 + $0x4] sm:$0xf]
        %v531 = vld [vmem:[%s11 + $0x8] sm:$0xf]
        %v532 = vld [vmem:[%s11 + $0xc] sm:$0xf]
        %v533 = vld [vmem:[%s12] sm:$0x3]
        %v550 = vunpack.c.l.b16 %v496
        %v551 = vunpack.c.l.b16 %v497
        %v552 = vunpack.c.l.b16 %v498
        %v553 = vunpack.c.l.b16 %v499
        %v554 = vunpack.c.l.b16 %v500
        %v555 = vunpack.c.l.b16 %v501
        %v556 = vunpack.c.l.b16 %v502
        %v557 = vunpack.c.l.b16 %v503
        %v558 = vunpack.c.l.b16 %v504
        %v559 = vunpack.c.l.b16 %v505
        %v560 = vunpack.c.l.b16 %v506
        %v561 = vunpack.c.l.b16 %v507
        %v562 = vunpack.c.l.b16 %v508
        %v563 = vunpack.c.l.b16 %v509
        %v564 = vunpack.c.l.b16 %v510
        %v565 = vunpack.c.l.b16 %v511
        %v566 = vpack.c.b16 %v551, %v550
        %v567 = vpack.c.b16 %v553, %v552
        %v568 = vpack.c.b16 %v555, %v554
        %v569 = vpack.c.b16 %v557, %v556
        %v570 = vpack.c.b16 %v559, %v558
        %v571 = vpack.c.b16 %v561, %v560
        %v572 = vpack.c.b16 %v563, %v562
        %v573 = vpack.c.b16 %v565, %v564
        %582 = vmatprep.subr.bf16.mxu0 0
        %583 = vmatpush1.bf16.msra.mxu0 %v573
        %584 = vmatprep.subr.bf16.mxu0 0
        %585 = vmatpush1.bf16.msra.mxu0 %v572
        %586 = vmatprep.subr.bf16.mxu0 0
        %587 = vmatpush1.bf16.msra.mxu0 %v571
        %588 = vmatprep.subr.bf16.mxu0 0
        %589 = vmatpush1.bf16.msra.mxu0 %v570
        %590 = vmatprep.subr.bf16.mxu0 0
        %591 = vmatpush1.bf16.msra.mxu0 %v569
        %592 = vmatprep.subr.bf16.mxu0 0
        %593 = vmatpush1.bf16.msra.mxu0 %v568
        %594 = vmatprep.subr.bf16.mxu0 0
        %595 = vmatpush1.bf16.msra.mxu0 %v567
        %596 = vmatprep.subr.bf16.mxu0 0
        %597 = vmatpush1.bf16.msra.mxu0 %v566
        %598 = vmatprep.subr.bf16.mxu0 0
        %599 = vmatpush2.bf16.msra.mxu0 0
        %600 = vmatprep.subr.bf16.mxu0 0
        %601 = vmatpush2.bf16.msra.mxu0 0
        %602 = vmatprep.subr.bf16.mxu0 0
        %603 = vmatpush2.bf16.msra.mxu0 0
        %604 = vmatprep.subr.bf16.mxu0 0
        %605 = vmatpush2.bf16.msra.mxu0 0
        %606 = vmatprep.subr.bf16.mxu0 0
        %607 = vmatpush2.bf16.msra.mxu0 0
        %608 = vmatprep.subr.bf16.mxu0 0
        %609 = vmatpush2.bf16.msra.mxu0 0
        %610 = vmatprep.subr.bf16.mxu0 0
        %611 = vmatpush2.bf16.msra.mxu0 0
        %612 = vmatprep.subr.bf16.mxu0 0
        %613 = vmatpush2.bf16.msra.mxu0 0
        %614 = vmatprep.mubr.bf16.mxu0 0
        %615 = vmatmul.mubr.bf16.gmra.mxu0 %v512
        %v616 = vpop.f32.mrf.mxu0
        %v617 = vadd.f32 0.0, %v616
        %v618 = vpop.f32.mrf.mxu0
        %v619 = vpop.f32.mrf.mxu0
        %v620 = vpop.f32.mrf.mxu0
        %621 = vdwg.mxu0
        %v622 = vmul.f32 %v617, 0.0625
        %v623 = vld [vmem:[%s1] sm:$0x1]
        %v625 = vlaneseq
        %v626 = vshrl.u32 %v625, 7
        %v627 = vsub.s32 0, %v626
        %v628 = vrot.slane %v623, %v627
        %v630 = vadd.f32 %v622, %v628
        %v631 = vpack.c.bf16 %v630, %v630
        %v632 = vld [vmem:[%s3] sm:$0xf]
        %v633 = vld [vmem:[%s3 + $0x4] sm:$0xf]
        %v634 = vld [vmem:[%s3 + $0x8] sm:$0xf]
        %v635 = vld [vmem:[%s3 + $0xc] sm:$0xf]
        %v636 = vld [vmem:[%s7] sm:$0x1]
        %v638 = vlaneseq
        %v639 = vshrl.u32 %v638, 7
        %v640 = vsub.s32 0, %v639
        %v641 = vrot.slane %v636, %v640
        %v647 = vunpack.c.l.b16 %v632
        %v648 = vunpack.c.l.b16 %v633
        %v649 = vunpack.c.l.b16 %v634
        %v650 = vunpack.c.l.b16 %v635
        %v651 = vpack.c.b16 %v648, %v647
        %v652 = vpack.c.b16 %v650, %v649
        %vm655 = vcmask 261120
        %v657 = vsel %vm655, %v631, 0
        %659 = vmatprep.subr.bf16.mxu0 0
        %660 = vmatpush1.bf16.msra.mxu0 0
        %661 = vmatprep.subr.bf16.mxu0 0
        %662 = vmatpush1.bf16.msra.mxu0 0
        %663 = vmatprep.subr.bf16.mxu0 0
        %664 = vmatpush1.bf16.msra.mxu0 0
        %665 = vmatprep.subr.bf16.mxu0 0
        %666 = vmatpush1.bf16.msra.mxu0 0
        %667 = vmatprep.subr.bf16.mxu0 0
        %668 = vmatpush1.bf16.msra.mxu0 0
        %669 = vmatprep.subr.bf16.mxu0 0
        %670 = vmatpush1.bf16.msra.mxu0 0
        %671 = vmatprep.subr.bf16.mxu0 0
        %672 = vmatpush1.bf16.msra.mxu0 %v652
        %673 = vmatprep.subr.bf16.mxu0 0
        %674 = vmatpush1.bf16.msra.mxu0 %v651
        %675 = vmatprep.subr.bf16.mxu0 0
        %676 = vmatpush2.bf16.msra.mxu0 0
        %677 = vmatprep.subr.bf16.mxu0 0
        %678 = vmatpush2.bf16.msra.mxu0 0
        %679 = vmatprep.subr.bf16.mxu0 0
        %680 = vmatpush2.bf16.msra.mxu0 0
        %681 = vmatprep.subr.bf16.mxu0 0
        %682 = vmatpush2.bf16.msra.mxu0 0
        %683 = vmatprep.subr.bf16.mxu0 0
        %684 = vmatpush2.bf16.msra.mxu0 0
        %685 = vmatprep.subr.bf16.mxu0 0
        %686 = vmatpush2.bf16.msra.mxu0 0
        %687 = vmatprep.subr.bf16.mxu0 0
        %688 = vmatpush2.bf16.msra.mxu0 0
        %689 = vmatprep.subr.bf16.mxu0 0
        %690 = vmatpush2.bf16.msra.mxu0 0
        %691 = vmatprep.mubr.bf16.mxu0 0
        %692 = vmatmul.mubr.bf16.gmra.mxu0 %v657
        %v693 = vpop.f32.mrf.mxu0
        %v694 = vadd.f32 %v641, %v693
        %v695 = vpop.f32.mrf.mxu0
        %v696 = vpop.f32.mrf.mxu0
        %v697 = vpop.f32.mrf.mxu0
        %698 = vdwg.mxu0
        %v699 = vld [vmem:[%s4] sm:$0xf]
        %v700 = vld [vmem:[%s4 + $0x4] sm:$0xf]
        %v701 = vld [vmem:[%s4 + $0x8] sm:$0xf]
        %v702 = vld [vmem:[%s4 + $0xc] sm:$0xf]
        %v703 = vld [vmem:[%s8] sm:$0x1]
        %v705 = vlaneseq
        %v706 = vshrl.u32 %v705, 7
        %v707 = vsub.s32 0, %v706
        %v708 = vrot.slane %v703, %v707
        %v714 = vunpack.c.l.b16 %v699
        %v715 = vunpack.c.l.b16 %v700
        %v716 = vunpack.c.l.b16 %v701
        %v717 = vunpack.c.l.b16 %v702
        %v718 = vpack.c.b16 %v715, %v714
        %v719 = vpack.c.b16 %v717, %v716
        %722 = vmatprep.subr.bf16.mxu0 0
        %723 = vmatpush1.bf16.msra.mxu0 0
        %724 = vmatprep.subr.bf16.mxu0 0
        %725 = vmatpush1.bf16.msra.mxu0 0
        %726 = vmatprep.subr.bf16.mxu0 0
        %727 = vmatpush1.bf16.msra.mxu0 0
        %728 = vmatprep.subr.bf16.mxu0 0
        %729 = vmatpush1.bf16.msra.mxu0 0
        %730 = vmatprep.subr.bf16.mxu0 0
        %731 = vmatpush1.bf16.msra.mxu0 0
        %732 = vmatprep.subr.bf16.mxu0 0
        %733 = vmatpush1.bf16.msra.mxu0 0
        %734 = vmatprep.subr.bf16.mxu0 0
        %735 = vmatpush1.bf16.msra.mxu0 %v719
        %736 = vmatprep.subr.bf16.mxu0 0
        %737 = vmatpush1.bf16.msra.mxu0 %v718
        %738 = vmatprep.subr.bf16.mxu0 0
        %739 = vmatpush2.bf16.msra.mxu0 0
        %740 = vmatprep.subr.bf16.mxu0 0
        %741 = vmatpush2.bf16.msra.mxu0 0
        %742 = vmatprep.subr.bf16.mxu0 0
        %743 = vmatpush2.bf16.msra.mxu0 0
        %744 = vmatprep.subr.bf16.mxu0 0
        %745 = vmatpush2.bf16.msra.mxu0 0
        %746 = vmatprep.subr.bf16.mxu0 0
        %747 = vmatpush2.bf16.msra.mxu0 0
        %748 = vmatprep.subr.bf16.mxu0 0
        %749 = vmatpush2.bf16.msra.mxu0 0
        %750 = vmatprep.subr.bf16.mxu0 0
        %751 = vmatpush2.bf16.msra.mxu0 0
        %752 = vmatprep.subr.bf16.mxu0 0
        %753 = vmatpush2.bf16.msra.mxu0 0
        %754 = vmatprep.mubr.bf16.mxu0 0
        %755 = vmatmul.mubr.bf16.gmra.mxu0 %v657
        %v756 = vpop.f32.mrf.mxu0
        %v757 = vadd.f32 %v708, %v756
        %v758 = vpop.f32.mrf.mxu0
        %v759 = vpop.f32.mrf.mxu0
        %v760 = vpop.f32.mrf.mxu0
        %761 = vdwg.mxu0
        %v762 = vld [vmem:[%s5] sm:$0xf]
        %v763 = vld [vmem:[%s5 + $0x4] sm:$0xf]
        %v764 = vld [vmem:[%s5 + $0x8] sm:$0xf]
        %v765 = vld [vmem:[%s5 + $0xc] sm:$0xf]
        %v766 = vld [vmem:[%s9] sm:$0x1]
        %v768 = vlaneseq
        %v769 = vshrl.u32 %v768, 7
        %v770 = vsub.s32 0, %v769
        %v771 = vrot.slane %v766, %v770
        %v777 = vunpack.c.l.b16 %v762
        %v778 = vunpack.c.l.b16 %v763
        %v779 = vunpack.c.l.b16 %v764
        %v780 = vunpack.c.l.b16 %v765
        %v781 = vpack.c.b16 %v778, %v777
        %v782 = vpack.c.b16 %v780, %v779
        %785 = vmatprep.subr.bf16.mxu0 0
        %786 = vmatpush1.bf16.msra.mxu0 0
        %787 = vmatprep.subr.bf16.mxu0 0
        %788 = vmatpush1.bf16.msra.mxu0 0
        %789 = vmatprep.subr.bf16.mxu0 0
        %790 = vmatpush1.bf16.msra.mxu0 0
        %791 = vmatprep.subr.bf16.mxu0 0
        %792 = vmatpush1.bf16.msra.mxu0 0
        %793 = vmatprep.subr.bf16.mxu0 0
        %794 = vmatpush1.bf16.msra.mxu0 0
        %795 = vmatprep.subr.bf16.mxu0 0
        %796 = vmatpush1.bf16.msra.mxu0 0
        %797 = vmatprep.subr.bf16.mxu0 0
        %798 = vmatpush1.bf16.msra.mxu0 %v782
        %799 = vmatprep.subr.bf16.mxu0 0
        %800 = vmatpush1.bf16.msra.mxu0 %v781
        %801 = vmatprep.subr.bf16.mxu0 0
        %802 = vmatpush2.bf16.msra.mxu0 0
        %803 = vmatprep.subr.bf16.mxu0 0
        %804 = vmatpush2.bf16.msra.mxu0 0
        %805 = vmatprep.subr.bf16.mxu0 0
        %806 = vmatpush2.bf16.msra.mxu0 0
        %807 = vmatprep.subr.bf16.mxu0 0
        %808 = vmatpush2.bf16.msra.mxu0 0
        %809 = vmatprep.subr.bf16.mxu0 0
        %810 = vmatpush2.bf16.msra.mxu0 0
        %811 = vmatprep.subr.bf16.mxu0 0
        %812 = vmatpush2.bf16.msra.mxu0 0
        %813 = vmatprep.subr.bf16.mxu0 0
        %814 = vmatpush2.bf16.msra.mxu0 0
        %815 = vmatprep.subr.bf16.mxu0 0
        %816 = vmatpush2.bf16.msra.mxu0 0
        %817 = vmatprep.mubr.bf16.mxu0 0
        %818 = vmatmul.mubr.bf16.gmra.mxu0 %v657
        %v819 = vpop.f32.mrf.mxu0
        %v820 = vadd.f32 %v771, %v819
        %v821 = vpop.f32.mrf.mxu0
        %v822 = vpop.f32.mrf.mxu0
        %v823 = vpop.f32.mrf.mxu0
        %824 = vdwg.mxu0
        %v825 = vpack.c.bf16 %v694, %v694
        %v826 = vld [vmem:[%s2] sm:$0xf]
        %v827 = vld [vmem:[%s2 + $0x4] sm:$0xf]
        %v828 = vld [vmem:[%s2 + $0x8] sm:$0xf]
        %v829 = vld [vmem:[%s2 + $0xc] sm:$0xf]
        %v830 = vld [vmem:[%s2 + $0x10] sm:$0xf]
        %v831 = vld [vmem:[%s2 + $0x14] sm:$0xf]
        %v832 = vld [vmem:[%s2 + $0x18] sm:$0xf]
        %v833 = vld [vmem:[%s2 + $0x1c] sm:$0xf]
        %v834 = vld [vmem:[%s2 + $0x20] sm:$0xf]
        %v835 = vld [vmem:[%s2 + $0x24] sm:$0xf]
        %v836 = vld [vmem:[%s2 + $0x28] sm:$0xf]
        %v837 = vld [vmem:[%s2 + $0x2c] sm:$0xf]
        %v838 = vld [vmem:[%s2 + $0x30] sm:$0xf]
        %v839 = vld [vmem:[%s2 + $0x34] sm:$0xf]
        %v840 = vld [vmem:[%s2 + $0x38] sm:$0xf]
        %v841 = vld [vmem:[%s2 + $0x3c] sm:$0xf]
        %v842 = vadd.bf16 %v496, %v826
        %v843 = vadd.bf16 %v497, %v827
        %v844 = vadd.bf16 %v498, %v828
        %v845 = vadd.bf16 %v499, %v829
        %v846 = vadd.bf16 %v500, %v830
        %v847 = vadd.bf16 %v501, %v831
        %v848 = vadd.bf16 %v502, %v832
        %v849 = vadd.bf16 %v503, %v833
        %v850 = vadd.bf16 %v504, %v834
        %v851 = vadd.bf16 %v505, %v835
        %v852 = vadd.bf16 %v506, %v836
        %v853 = vadd.bf16 %v507, %v837
        %v854 = vadd.bf16 %v508, %v838
        %v855 = vadd.bf16 %v509, %v839
        %v856 = vadd.bf16 %v510, %v840
        %v857 = vadd.bf16 %v511, %v841
        %v874 = vunpack.c.l.b16 %v842
        %v875 = vunpack.c.l.b16 %v843
        %v876 = vunpack.c.l.b16 %v844
        %v877 = vunpack.c.l.b16 %v845
        %v878 = vunpack.c.l.b16 %v846
        %v879 = vunpack.c.l.b16 %v847
        %v880 = vunpack.c.l.b16 %v848
        %v881 = vunpack.c.l.b16 %v849
        %v882 = vunpack.c.l.b16 %v850
        %v883 = vunpack.c.l.b16 %v851
        %v884 = vunpack.c.l.b16 %v852
        %v885 = vunpack.c.l.b16 %v853
        %v886 = vunpack.c.l.b16 %v854
        %v887 = vunpack.c.l.b16 %v855
        %v888 = vunpack.c.l.b16 %v856
        %v889 = vunpack.c.l.b16 %v857
        %v890 = vpack.c.b16 %v875, %v874
        %v891 = vpack.c.b16 %v877, %v876
        %v892 = vpack.c.b16 %v879, %v878
        %v893 = vpack.c.b16 %v881, %v880
        %v894 = vpack.c.b16 %v883, %v882
        %v895 = vpack.c.b16 %v885, %v884
        %v896 = vpack.c.b16 %v887, %v886
        %v897 = vpack.c.b16 %v889, %v888
        %v899 = vsel %vm655, %v890, 0
        %v902 = vsel %vm655, %v891, 0
        %v905 = vsel %vm655, %v892, 0
        %v908 = vsel %vm655, %v893, 0
        %v911 = vsel %vm655, %v894, 0
        %v914 = vsel %vm655, %v895, 0
        %v917 = vsel %vm655, %v896, 0
        %v920 = vsel %vm655, %v897, 0
        %922 = vmatprep.subr.bf16.mxu0 0
        %923 = vmatpush1.bf16.msra.mxu0 0
        %924 = vmatprep.subr.bf16.mxu0 0
        %925 = vmatpush1.bf16.msra.mxu0 0
        %926 = vmatprep.subr.bf16.mxu0 0
        %927 = vmatpush1.bf16.msra.mxu0 0
        %928 = vmatprep.subr.bf16.mxu0 0
        %929 = vmatpush1.bf16.msra.mxu0 0
        %930 = vmatprep.subr.bf16.mxu0 0
        %931 = vmatpush1.bf16.msra.mxu0 0
        %932 = vmatprep.subr.bf16.mxu0 0
        %933 = vmatpush1.bf16.msra.mxu0 0
        %934 = vmatprep.subr.bf16.mxu0 0
        %935 = vmatpush1.bf16.msra.mxu0 %v719
        %936 = vmatprep.subr.bf16.mxu0 0
        %937 = vmatpush1.bf16.msra.mxu0 %v718
        %938 = vmatprep.subr.bf16.mxu0 0
        %939 = vmatpush2.bf16.msra.mxu0 0
        %940 = vmatprep.subr.bf16.mxu0 0
        %941 = vmatpush2.bf16.msra.mxu0 0
        %942 = vmatprep.subr.bf16.mxu0 0
        %943 = vmatpush2.bf16.msra.mxu0 0
        %944 = vmatprep.subr.bf16.mxu0 0
        %945 = vmatpush2.bf16.msra.mxu0 0
        %946 = vmatprep.subr.bf16.mxu0 0
        %947 = vmatpush2.bf16.msra.mxu0 0
        %948 = vmatprep.subr.bf16.mxu0 0
        %949 = vmatpush2.bf16.msra.mxu0 0
        %950 = vmatprep.subr.bf16.mxu0 0
        %951 = vmatpush2.bf16.msra.mxu0 0
        %952 = vmatprep.subr.bf16.mxu0 0
        %953 = vmatpush2.bf16.msra.mxu0 0
        %954 = vmatprep.mubr.bf16.mxu0 0
        %955 = vmatmul.mubr.bf16.gmra.mxu0 %v899
        %v956 = vpop.f32.mrf.mxu0
        %v957 = vadd.f32 %v708, %v956
        %v958 = vpop.f32.mrf.mxu0
        %v959 = vpop.f32.mrf.mxu0
        %v960 = vadd.f32 %v708, %v959
        %v961 = vpop.f32.mrf.mxu0
        %962 = vmatprep.mubr.bf16.mxu0 0
        %963 = vmatmul.mubr.bf16.gmra.mxu0 %v902
        %v964 = vpop.f32.mrf.mxu0
        %v965 = vadd.f32 %v708, %v964
        %v966 = vpop.f32.mrf.mxu0
        %v967 = vpop.f32.mrf.mxu0
        %v968 = vadd.f32 %v708, %v967
        %v969 = vpop.f32.mrf.mxu0
        %970 = vmatprep.mubr.bf16.mxu0 0
        %971 = vmatmul.mubr.bf16.gmra.mxu0 %v905
        %v972 = vpop.f32.mrf.mxu0
        %v973 = vadd.f32 %v708, %v972
        %v974 = vpop.f32.mrf.mxu0
        %v975 = vpop.f32.mrf.mxu0
        %v976 = vadd.f32 %v708, %v975
        %v977 = vpop.f32.mrf.mxu0
        %978 = vmatprep.mubr.bf16.mxu0 0
        %979 = vmatmul.mubr.bf16.gmra.mxu0 %v908
        %v980 = vpop.f32.mrf.mxu0
        %v981 = vadd.f32 %v708, %v980
        %v982 = vpop.f32.mrf.mxu0
        %v983 = vpop.f32.mrf.mxu0
        %v984 = vadd.f32 %v708, %v983
        %v985 = vpop.f32.mrf.mxu0
        %986 = vmatprep.mubr.bf16.mxu0 0
        %987 = vmatmul.mubr.bf16.gmra.mxu0 %v911
        %v988 = vpop.f32.mrf.mxu0
        %v989 = vadd.f32 %v708, %v988
        %v990 = vpop.f32.mrf.mxu0
        %v991 = vpop.f32.mrf.mxu0
        %v992 = vadd.f32 %v708, %v991
        %v993 = vpop.f32.mrf.mxu0
        %994 = vmatprep.mubr.bf16.mxu0 0
        %995 = vmatmul.mubr.bf16.gmra.mxu0 %v914
        %v996 = vpop.f32.mrf.mxu0
        %v997 = vadd.f32 %v708, %v996
        %v998 = vpop.f32.mrf.mxu0
        %v999 = vpop.f32.mrf.mxu0
        %v1000 = vadd.f32 %v708, %v999
        %v1001 = vpop.f32.mrf.mxu0
        %1002 = vmatprep.mubr.bf16.mxu0 0
        %1003 = vmatmul.mubr.bf16.gmra.mxu0 %v917
        %v1004 = vpop.f32.mrf.mxu0
        %v1005 = vadd.f32 %v708, %v1004
        %v1006 = vpop.f32.mrf.mxu0
        %v1007 = vpop.f32.mrf.mxu0
        %v1008 = vadd.f32 %v708, %v1007
        %v1009 = vpop.f32.mrf.mxu0
        %1010 = vmatprep.mubr.bf16.mxu0 0
        %1011 = vmatmul.mubr.bf16.gmra.mxu0 %v920
        %v1012 = vpop.f32.mrf.mxu0
        %v1013 = vadd.f32 %v708, %v1012
        %v1014 = vpop.f32.mrf.mxu0
        %v1015 = vpop.f32.mrf.mxu0
        %v1016 = vadd.f32 %v708, %v1015
        %v1017 = vpop.f32.mrf.mxu0
        %1018 = vdwg.mxu0
        %1019 = vmatprep.subr.bf16.mxu0 0
        %1020 = vmatpush1.bf16.msra.mxu0 0
        %1021 = vmatprep.subr.bf16.mxu0 0
        %1022 = vmatpush1.bf16.msra.mxu0 0
        %1023 = vmatprep.subr.bf16.mxu0 0
        %1024 = vmatpush1.bf16.msra.mxu0 0
        %1025 = vmatprep.subr.bf16.mxu0 0
        %1026 = vmatpush1.bf16.msra.mxu0 0
        %1027 = vmatprep.subr.bf16.mxu0 0
        %1028 = vmatpush1.bf16.msra.mxu0 0
        %1029 = vmatprep.subr.bf16.mxu0 0
        %1030 = vmatpush1.bf16.msra.mxu0 0
        %1031 = vmatprep.subr.bf16.mxu0 0
        %1032 = vmatpush1.bf16.msra.mxu0 %v782
        %1033 = vmatprep.subr.bf16.mxu0 0
        %1034 = vmatpush1.bf16.msra.mxu0 %v781
        %1035 = vmatprep.subr.bf16.mxu0 0
        %1036 = vmatpush2.bf16.msra.mxu0 0
        %1037 = vmatprep.subr.bf16.mxu0 0
        %1038 = vmatpush2.bf16.msra.mxu0 0
        %1039 = vmatprep.subr.bf16.mxu0 0
        %1040 = vmatpush2.bf16.msra.mxu0 0
        %1041 = vmatprep.subr.bf16.mxu0 0
        %1042 = vmatpush2.bf16.msra.mxu0 0
        %1043 = vmatprep.subr.bf16.mxu0 0
        %1044 = vmatpush2.bf16.msra.mxu0 0
        %1045 = vmatprep.subr.bf16.mxu0 0
        %1046 = vmatpush2.bf16.msra.mxu0 0
        %1047 = vmatprep.subr.bf16.mxu0 0
        %1048 = vmatpush2.bf16.msra.mxu0 0
        %1049 = vmatprep.subr.bf16.mxu0 0
        %1050 = vmatpush2.bf16.msra.mxu0 0
        %1051 = vmatprep.mubr.bf16.mxu0 0
        %1052 = vmatmul.mubr.bf16.gmra.mxu0 %v899
        %v1053 = vpop.f32.mrf.mxu0
        %v1054 = vadd.f32 %v771, %v1053
        %v1055 = vpop.f32.mrf.mxu0
        %v1056 = vpop.f32.mrf.mxu0
        %v1057 = vadd.f32 %v771, %v1056
        %v1058 = vpop.f32.mrf.mxu0
        %1059 = vmatprep.mubr.bf16.mxu0 0
        %1060 = vmatmul.mubr.bf16.gmra.mxu0 %v902
        %v1061 = vpop.f32.mrf.mxu0
        %v1062 = vadd.f32 %v771, %v1061
        %v1063 = vpop.f32.mrf.mxu0
        %v1064 = vpop.f32.mrf.mxu0
        %v1065 = vadd.f32 %v771, %v1064
        %v1066 = vpop.f32.mrf.mxu0
        %1067 = vmatprep.mubr.bf16.mxu0 0
        %1068 = vmatmul.mubr.bf16.gmra.mxu0 %v905
        %v1069 = vpop.f32.mrf.mxu0
        %v1070 = vadd.f32 %v771, %v1069
        %v1071 = vpop.f32.mrf.mxu0
        %v1072 = vpop.f32.mrf.mxu0
        %v1073 = vadd.f32 %v771, %v1072
        %v1074 = vpop.f32.mrf.mxu0
        %1075 = vmatprep.mubr.bf16.mxu0 0
        %1076 = vmatmul.mubr.bf16.gmra.mxu0 %v908
        %v1077 = vpop.f32.mrf.mxu0
        %v1078 = vadd.f32 %v771, %v1077
        %v1079 = vpop.f32.mrf.mxu0
        %v1080 = vpop.f32.mrf.mxu0
        %v1081 = vadd.f32 %v771, %v1080
        %v1082 = vpop.f32.mrf.mxu0
        %1083 = vmatprep.mubr.bf16.mxu0 0
        %1084 = vmatmul.mubr.bf16.gmra.mxu0 %v911
        %v1085 = vpop.f32.mrf.mxu0
        %v1086 = vadd.f32 %v771, %v1085
        %v1087 = vpop.f32.mrf.mxu0
        %v1088 = vpop.f32.mrf.mxu0
        %v1089 = vadd.f32 %v771, %v1088
        %v1090 = vpop.f32.mrf.mxu0
        %1091 = vmatprep.mubr.bf16.mxu0 0
        %1092 = vmatmul.mubr.bf16.gmra.mxu0 %v914
        %v1093 = vpop.f32.mrf.mxu0
        %v1094 = vadd.f32 %v771, %v1093
        %v1095 = vpop.f32.mrf.mxu0
        %v1096 = vpop.f32.mrf.mxu0
        %v1097 = vadd.f32 %v771, %v1096
        %v1098 = vpop.f32.mrf.mxu0
        %1099 = vmatprep.mubr.bf16.mxu0 0
        %1100 = vmatmul.mubr.bf16.gmra.mxu0 %v917
        %v1101 = vpop.f32.mrf.mxu0
        %v1102 = vadd.f32 %v771, %v1101
        %v1103 = vpop.f32.mrf.mxu0
        %v1104 = vpop.f32.mrf.mxu0
        %v1105 = vadd.f32 %v771, %v1104
        %v1106 = vpop.f32.mrf.mxu0
        %1107 = vmatprep.mubr.bf16.mxu0 0
        %1108 = vmatmul.mubr.bf16.gmra.mxu0 %v920
        %v1109 = vpop.f32.mrf.mxu0
        %v1110 = vadd.f32 %v771, %v1109
        %v1111 = vpop.f32.mrf.mxu0
        %v1112 = vpop.f32.mrf.mxu0
        %v1113 = vadd.f32 %v771, %v1112
        %v1114 = vpop.f32.mrf.mxu0
        %1115 = vdwg.mxu0
        %v1132 = vunpack.c.l.b16 %v513
        %v1133 = vunpack.c.l.b16 %v514
        %v1134 = vunpack.c.l.b16 %v515
        %v1135 = vunpack.c.l.b16 %v516
        %v1136 = vunpack.c.l.b16 %v517
        %v1137 = vunpack.c.l.b16 %v518
        %v1138 = vunpack.c.l.b16 %v519
        %v1139 = vunpack.c.l.b16 %v520
        %v1140 = vunpack.c.l.b16 %v521
        %v1141 = vunpack.c.l.b16 %v522
        %v1142 = vunpack.c.l.b16 %v523
        %v1143 = vunpack.c.l.b16 %v524
        %v1144 = vunpack.c.l.b16 %v525
        %v1145 = vunpack.c.l.b16 %v526
        %v1146 = vunpack.c.l.b16 %v527
        %v1147 = vunpack.c.l.b16 %v528
        %v1148 = vpack.c.b16 %v1133, %v1132
        %v1149 = vpack.c.b16 %v1135, %v1134
        %v1150 = vpack.c.b16 %v1137, %v1136
        %v1151 = vpack.c.b16 %v1139, %v1138
        %v1152 = vpack.c.b16 %v1141, %v1140
        %v1153 = vpack.c.b16 %v1143, %v1142
        %v1154 = vpack.c.b16 %v1145, %v1144
        %v1155 = vpack.c.b16 %v1147, %v1146
        %vm1156 = vcmask 64512
        %v1158 = vsel %vm1156, %v1148, 0
        %v1161 = vsel %vm1156, %v1149, 0
        %v1164 = vsel %vm1156, %v1150, 0
        %v1167 = vsel %vm1156, %v1151, 0
        %v1170 = vsel %vm1156, %v1152, 0
        %v1173 = vsel %vm1156, %v1153, 0
        %v1176 = vsel %vm1156, %v1154, 0
        %v1179 = vsel %vm1156, %v1155, 0
        %vm1181 = vcmask 1043456
        %v1183 = vsel %vm1181, %v825, 0
        %1185 = vmatprep.subr.bf16.mxu0 0
        %1186 = vmatpush1.bf16.msra.mxu0 0
        %1187 = vmatprep.subr.bf16.mxu0 0
        %1188 = vmatpush1.bf16.msra.mxu0 0
        %1189 = vmatprep.subr.bf16.mxu0 0
        %1190 = vmatpush1.bf16.msra.mxu0 0
        %1191 = vmatprep.subr.bf16.mxu0 0
        %1192 = vmatpush1.bf16.msra.mxu0 0
        %1193 = vmatprep.subr.bf16.mxu0 0
        %1194 = vmatpush1.bf16.msra.mxu0 0
        %1195 = vmatprep.subr.bf16.mxu0 0
        %1196 = vmatpush1.bf16.msra.mxu0 0
        %1197 = vmatprep.subr.bf16.mxu0 0
        %1198 = vmatpush1.bf16.msra.mxu0 0
        %1199 = vmatprep.subr.bf16.mxu0 0
        %1200 = vmatpush1.bf16.msra.mxu0 %v1183
        %1201 = vmatprep.subr.bf16.mxu0 0
        %1202 = vmatpush2.bf16.msra.mxu0 0
        %1203 = vmatprep.subr.bf16.mxu0 0
        %1204 = vmatpush2.bf16.msra.mxu0 0
        %1205 = vmatprep.subr.bf16.mxu0 0
        %1206 = vmatpush2.bf16.msra.mxu0 0
        %1207 = vmatprep.subr.bf16.mxu0 0
        %1208 = vmatpush2.bf16.msra.mxu0 0
        %1209 = vmatprep.subr.bf16.mxu0 0
        %1210 = vmatpush2.bf16.msra.mxu0 0
        %1211 = vmatprep.subr.bf16.mxu0 0
        %1212 = vmatpush2.bf16.msra.mxu0 0
        %1213 = vmatprep.subr.bf16.mxu0 0
        %1214 = vmatpush2.bf16.msra.mxu0 0
        %1215 = vmatprep.subr.bf16.mxu0 0
        %1216 = vmatpush2.bf16.msra.mxu0 0
        %1217 = vmatprep.mubr.bf16.mxu0 0
        %1218 = vmatmul.mubr.bf16.gmra.mxu0 %v1158
        %v1219 = vpop.f32.mrf.mxu0
        %v1220 = vadd.f32 0.0, %v1219
        %v1221 = vpop.f32.mrf.mxu0
        %v1222 = vpop.f32.mrf.mxu0
        %v1223 = vadd.f32 0.0, %v1222
        %v1224 = vpop.f32.mrf.mxu0
        %1225 = vmatprep.mubr.bf16.mxu0 0
        %1226 = vmatmul.mubr.bf16.gmra.mxu0 %v1161
        %v1227 = vpop.f32.mrf.mxu0
        %v1228 = vadd.f32 0.0, %v1227
        %v1229 = vpop.f32.mrf.mxu0
        %v1230 = vpop.f32.mrf.mxu0
        %v1231 = vadd.f32 0.0, %v1230
        %v1232 = vpop.f32.mrf.mxu0
        %1233 = vmatprep.mubr.bf16.mxu0 0
        %1234 = vmatmul.mubr.bf16.gmra.mxu0 %v1164
        %v1235 = vpop.f32.mrf.mxu0
        %v1236 = vadd.f32 0.0, %v1235
        %v1237 = vpop.f32.mrf.mxu0
        %v1238 = vpop.f32.mrf.mxu0
        %v1239 = vadd.f32 0.0, %v1238
        %v1240 = vpop.f32.mrf.mxu0
        %1241 = vmatprep.mubr.bf16.mxu0 0
        %1242 = vmatmul.mubr.bf16.gmra.mxu0 %v1167
        %v1243 = vpop.f32.mrf.mxu0
        %v1244 = vadd.f32 0.0, %v1243
        %v1245 = vpop.f32.mrf.mxu0
        %v1246 = vpop.f32.mrf.mxu0
        %v1247 = vadd.f32 0.0, %v1246
        %v1248 = vpop.f32.mrf.mxu0
        %1249 = vmatprep.mubr.bf16.mxu0 0
        %1250 = vmatmul.mubr.bf16.gmra.mxu0 %v1170
        %v1251 = vpop.f32.mrf.mxu0
        %v1252 = vadd.f32 0.0, %v1251
        %v1253 = vpop.f32.mrf.mxu0
        %v1254 = vpop.f32.mrf.mxu0
        %v1255 = vadd.f32 0.0, %v1254
        %v1256 = vpop.f32.mrf.mxu0
        %1257 = vmatprep.mubr.bf16.mxu0 0
        %1258 = vmatmul.mubr.bf16.gmra.mxu0 %v1173
        %v1259 = vpop.f32.mrf.mxu0
        %v1260 = vadd.f32 0.0, %v1259
        %v1261 = vpop.f32.mrf.mxu0
        %v1262 = vpop.f32.mrf.mxu0
        %v1263 = vadd.f32 0.0, %v1262
        %v1264 = vpop.f32.mrf.mxu0
        %1265 = vmatprep.mubr.bf16.mxu0 0
        %1266 = vmatmul.mubr.bf16.gmra.mxu0 %v1176
        %v1267 = vpop.f32.mrf.mxu0
        %v1268 = vadd.f32 0.0, %v1267
        %v1269 = vpop.f32.mrf.mxu0
        %v1270 = vpop.f32.mrf.mxu0
        %v1271 = vadd.f32 0.0, %v1270
        %v1272 = vpop.f32.mrf.mxu0
        %1273 = vmatprep.mubr.bf16.mxu0 0
        %1274 = vmatmul.mubr.bf16.gmra.mxu0 %v1179
        %v1275 = vpop.f32.mrf.mxu0
        %v1276 = vadd.f32 0.0, %v1275
        %v1277 = vpop.f32.mrf.mxu0
        %v1278 = vpop.f32.mrf.mxu0
        %v1279 = vadd.f32 0.0, %v1278
        %v1280 = vpop.f32.mrf.mxu0
        %1281 = vdwg.mxu0
        %v1282 = vmul.f32 %v957, %v1220
        %v1283 = vmul.f32 %v960, %v1223
        %v1284 = vmul.f32 %v965, %v1228
        %v1285 = vmul.f32 %v968, %v1231
        %v1286 = vmul.f32 %v973, %v1236
        %v1287 = vmul.f32 %v976, %v1239
        %v1288 = vmul.f32 %v981, %v1244
        %v1289 = vmul.f32 %v984, %v1247
        %v1290 = vmul.f32 %v989, %v1252
        %v1291 = vmul.f32 %v992, %v1255
        %v1292 = vmul.f32 %v997, %v1260
        %v1293 = vmul.f32 %v1000, %v1263
        %v1294 = vmul.f32 %v1005, %v1268
        %v1295 = vmul.f32 %v1008, %v1271
        %v1296 = vmul.f32 %v1013, %v1276
        %v1297 = vmul.f32 %v1016, %v1279
        %v1298 = vpack.c.bf16 %v1283, %v1282
        %v1299 = vpack.c.bf16 %v1285, %v1284
        %v1300 = vpack.c.bf16 %v1287, %v1286
        %v1301 = vpack.c.bf16 %v1289, %v1288
        %v1302 = vpack.c.bf16 %v1291, %v1290
        %v1303 = vpack.c.bf16 %v1293, %v1292
        %v1304 = vpack.c.bf16 %v1295, %v1294
        %v1305 = vpack.c.bf16 %v1297, %v1296
        %v1310 = vunpack.c.l.b16 %v529
        %v1311 = vunpack.c.l.b16 %v530
        %v1312 = vunpack.c.l.b16 %v531
        %v1313 = vunpack.c.l.b16 %v532
        %v1314 = vpack.c.b16 %v1311, %v1310
        %v1315 = vpack.c.b16 %v1313, %v1312
        %v1319 = vsel %vm655, %v1298, 0
        %v1322 = vsel %vm655, %v1299, 0
        %v1325 = vsel %vm655, %v1300, 0
        %v1328 = vsel %vm655, %v1301, 0
        %v1331 = vsel %vm655, %v1302, 0
        %v1334 = vsel %vm655, %v1303, 0
        %v1337 = vsel %vm655, %v1304, 0
        %v1340 = vsel %vm655, %v1305, 0
        %1342 = vmatprep.subr.bf16.mxu0 0
        %1343 = vmatpush1.bf16.msra.mxu0 0
        %1344 = vmatprep.subr.bf16.mxu0 0
        %1345 = vmatpush1.bf16.msra.mxu0 0
        %1346 = vmatprep.subr.bf16.mxu0 0
        %1347 = vmatpush1.bf16.msra.mxu0 0
        %1348 = vmatprep.subr.bf16.mxu0 0
        %1349 = vmatpush1.bf16.msra.mxu0 0
        %1350 = vmatprep.subr.bf16.mxu0 0
        %1351 = vmatpush1.bf16.msra.mxu0 0
        %1352 = vmatprep.subr.bf16.mxu0 0
        %1353 = vmatpush1.bf16.msra.mxu0 0
        %1354 = vmatprep.subr.bf16.mxu0 0
        %1355 = vmatpush1.bf16.msra.mxu0 %v1315
        %1356 = vmatprep.subr.bf16.mxu0 0
        %1357 = vmatpush1.bf16.msra.mxu0 %v1314
        %1358 = vmatprep.subr.bf16.mxu0 0
        %1359 = vmatpush2.bf16.msra.mxu0 0
        %1360 = vmatprep.subr.bf16.mxu0 0
        %1361 = vmatpush2.bf16.msra.mxu0 0
        %1362 = vmatprep.subr.bf16.mxu0 0
        %1363 = vmatpush2.bf16.msra.mxu0 0
        %1364 = vmatprep.subr.bf16.mxu0 0
        %1365 = vmatpush2.bf16.msra.mxu0 0
        %1366 = vmatprep.subr.bf16.mxu0 0
        %1367 = vmatpush2.bf16.msra.mxu0 0
        %1368 = vmatprep.subr.bf16.mxu0 0
        %1369 = vmatpush2.bf16.msra.mxu0 0
        %1370 = vmatprep.subr.bf16.mxu0 0
        %1371 = vmatpush2.bf16.msra.mxu0 0
        %1372 = vmatprep.subr.bf16.mxu0 0
        %1373 = vmatpush2.bf16.msra.mxu0 0
        %1374 = vmatprep.mubr.bf16.mxu0 0
        %1375 = vmatmul.mubr.bf16.gmra.mxu0 %v1319
        %v1376 = vpop.f32.mrf.mxu0
        %v1377 = vadd.f32 0.0, %v1376
        %v1378 = vpop.f32.mrf.mxu0
        %v1379 = vpop.f32.mrf.mxu0
        %v1380 = vadd.f32 0.0, %v1379
        %v1381 = vpop.f32.mrf.mxu0
        %1382 = vmatprep.mubr.bf16.mxu0 0
        %1383 = vmatmul.mubr.bf16.gmra.mxu0 %v1322
        %v1384 = vpop.f32.mrf.mxu0
        %v1385 = vadd.f32 0.0, %v1384
        %v1386 = vpop.f32.mrf.mxu0
        %v1387 = vpop.f32.mrf.mxu0
        %v1388 = vadd.f32 0.0, %v1387
        %v1389 = vpop.f32.mrf.mxu0
        %1390 = vmatprep.mubr.bf16.mxu0 0
        %1391 = vmatmul.mubr.bf16.gmra.mxu0 %v1325
        %v1392 = vpop.f32.mrf.mxu0
        %v1393 = vadd.f32 0.0, %v1392
        %v1394 = vpop.f32.mrf.mxu0
        %v1395 = vpop.f32.mrf.mxu0
        %v1396 = vadd.f32 0.0, %v1395
        %v1397 = vpop.f32.mrf.mxu0
        %1398 = vmatprep.mubr.bf16.mxu0 0
        %1399 = vmatmul.mubr.bf16.gmra.mxu0 %v1328
        %v1400 = vpop.f32.mrf.mxu0
        %v1401 = vadd.f32 0.0, %v1400
        %v1402 = vpop.f32.mrf.mxu0
        %v1403 = vpop.f32.mrf.mxu0
        %v1404 = vadd.f32 0.0, %v1403
        %v1405 = vpop.f32.mrf.mxu0
        %1406 = vmatprep.mubr.bf16.mxu0 0
        %1407 = vmatmul.mubr.bf16.gmra.mxu0 %v1331
        %v1408 = vpop.f32.mrf.mxu0
        %v1409 = vadd.f32 0.0, %v1408
        %v1410 = vpop.f32.mrf.mxu0
        %v1411 = vpop.f32.mrf.mxu0
        %v1412 = vadd.f32 0.0, %v1411
        %v1413 = vpop.f32.mrf.mxu0
        %1414 = vmatprep.mubr.bf16.mxu0 0
        %1415 = vmatmul.mubr.bf16.gmra.mxu0 %v1334
        %v1416 = vpop.f32.mrf.mxu0
        %v1417 = vadd.f32 0.0, %v1416
        %v1418 = vpop.f32.mrf.mxu0
        %v1419 = vpop.f32.mrf.mxu0
        %v1420 = vadd.f32 0.0, %v1419
        %v1421 = vpop.f32.mrf.mxu0
        %1422 = vmatprep.mubr.bf16.mxu0 0
        %1423 = vmatmul.mubr.bf16.gmra.mxu0 %v1337
        %v1424 = vpop.f32.mrf.mxu0
        %v1425 = vadd.f32 0.0, %v1424
        %v1426 = vpop.f32.mrf.mxu0
        %v1427 = vpop.f32.mrf.mxu0
        %v1428 = vadd.f32 0.0, %v1427
        %v1429 = vpop.f32.mrf.mxu0
        %1430 = vmatprep.mubr.bf16.mxu0 0
        %1431 = vmatmul.mubr.bf16.gmra.mxu0 %v1340
        %v1432 = vpop.f32.mrf.mxu0
        %v1433 = vadd.f32 0.0, %v1432
        %v1434 = vpop.f32.mrf.mxu0
        %v1435 = vpop.f32.mrf.mxu0
        %v1436 = vadd.f32 0.0, %v1435
        %v1437 = vpop.f32.mrf.mxu0
        %1438 = vdwg.mxu0
        %v1439 = vunpack.c.l.bf16 %v825
        %v1440 = vmul.f32 %v757, %v1439
        %v1441 = vpack.c.bf16 %v1440, %v1440
        %v1443 = vsel %vm655, %v1441, 0
        %1445 = vmatprep.subr.bf16.mxu0 0
        %1446 = vmatpush1.bf16.msra.mxu0 0
        %1447 = vmatprep.subr.bf16.mxu0 0
        %1448 = vmatpush1.bf16.msra.mxu0 0
        %1449 = vmatprep.subr.bf16.mxu0 0
        %1450 = vmatpush1.bf16.msra.mxu0 0
        %1451 = vmatprep.subr.bf16.mxu0 0
        %1452 = vmatpush1.bf16.msra.mxu0 0
        %1453 = vmatprep.subr.bf16.mxu0 0
        %1454 = vmatpush1.bf16.msra.mxu0 0
        %1455 = vmatprep.subr.bf16.mxu0 0
        %1456 = vmatpush1.bf16.msra.mxu0 0
        %1457 = vmatprep.subr.bf16.mxu0 0
        %1458 = vmatpush1.bf16.msra.mxu0 %v1315
        %1459 = vmatprep.subr.bf16.mxu0 0
        %1460 = vmatpush1.bf16.msra.mxu0 %v1314
        %1461 = vmatprep.subr.bf16.mxu0 0
        %1462 = vmatpush2.bf16.msra.mxu0 0
        %1463 = vmatprep.subr.bf16.mxu0 0
        %1464 = vmatpush2.bf16.msra.mxu0 0
        %1465 = vmatprep.subr.bf16.mxu0 0
        %1466 = vmatpush2.bf16.msra.mxu0 0
        %1467 = vmatprep.subr.bf16.mxu0 0
        %1468 = vmatpush2.bf16.msra.mxu0 0
        %1469 = vmatprep.subr.bf16.mxu0 0
        %1470 = vmatpush2.bf16.msra.mxu0 0
        %1471 = vmatprep.subr.bf16.mxu0 0
        %1472 = vmatpush2.bf16.msra.mxu0 0
        %1473 = vmatprep.subr.bf16.mxu0 0
        %1474 = vmatpush2.bf16.msra.mxu0 0
        %1475 = vmatprep.subr.bf16.mxu0 0
        %1476 = vmatpush2.bf16.msra.mxu0 0
        %1477 = vmatprep.mubr.bf16.mxu0 0
        %1478 = vmatmul.mubr.bf16.gmra.mxu0 %v1443
        %v1479 = vpop.f32.mrf.mxu0
        %v1480 = vadd.f32 0.0, %v1479
        %v1481 = vpop.f32.mrf.mxu0
        %v1482 = vpop.f32.mrf.mxu0
        %v1483 = vpop.f32.mrf.mxu0
        %1484 = vdwg.mxu0
        %vm1485 = vcmask 31744
        %v1486 = vsel %vm1485, %v1377, -inf
        %v1487 = vsel %vm1485, %v1380, -inf
        %v1488 = vmax.f32 %v1486, %v1487
        %v1489 = vrot.slane %v1488, 4
        %v1490 = vmax.f32 %v1488, %v1489
        %v1491 = vrot.slane %v1490, 2
        %v1492 = vmax.f32 %v1490, %v1491
        %v1493 = vrot.slane %v1492, 1
        %v1494 = vmax.f32 %v1492, %v1493
        %v1495 = vsel %vm1485, %v1385, -inf
        %v1496 = vsel %vm1485, %v1388, -inf
        %v1497 = vmax.f32 %v1495, %v1496
        %v1498 = vrot.slane %v1497, 4
        %v1499 = vmax.f32 %v1497, %v1498
        %v1500 = vrot.slane %v1499, 2
        %v1501 = vmax.f32 %v1499, %v1500
        %v1502 = vrot.slane %v1501, 1
        %v1503 = vmax.f32 %v1501, %v1502
        %v1504 = vsel %vm1485, %v1393, -inf
        %v1505 = vsel %vm1485, %v1396, -inf
        %v1506 = vmax.f32 %v1504, %v1505
        %v1507 = vrot.slane %v1506, 4
        %v1508 = vmax.f32 %v1506, %v1507
        %v1509 = vrot.slane %v1508, 2
        %v1510 = vmax.f32 %v1508, %v1509
        %v1511 = vrot.slane %v1510, 1
        %v1512 = vmax.f32 %v1510, %v1511
        %v1513 = vsel %vm1485, %v1401, -inf
        %v1514 = vsel %vm1485, %v1404, -inf
        %v1515 = vmax.f32 %v1513, %v1514
        %v1516 = vrot.slane %v1515, 4
        %v1517 = vmax.f32 %v1515, %v1516
        %v1518 = vrot.slane %v1517, 2
        %v1519 = vmax.f32 %v1517, %v1518
        %v1520 = vrot.slane %v1519, 1
        %v1521 = vmax.f32 %v1519, %v1520
        %v1522 = vsel %vm1485, %v1409, -inf
        %v1523 = vsel %vm1485, %v1412, -inf
        %v1524 = vmax.f32 %v1522, %v1523
        %v1525 = vrot.slane %v1524, 4
        %v1526 = vmax.f32 %v1524, %v1525
        %v1527 = vrot.slane %v1526, 2
        %v1528 = vmax.f32 %v1526, %v1527
        %v1529 = vrot.slane %v1528, 1
        %v1530 = vmax.f32 %v1528, %v1529
        %v1531 = vsel %vm1485, %v1417, -inf
        %v1532 = vsel %vm1485, %v1420, -inf
        %v1533 = vmax.f32 %v1531, %v1532
        %v1534 = vrot.slane %v1533, 4
        %v1535 = vmax.f32 %v1533, %v1534
        %v1536 = vrot.slane %v1535, 2
        %v1537 = vmax.f32 %v1535, %v1536
        %v1538 = vrot.slane %v1537, 1
        %v1539 = vmax.f32 %v1537, %v1538
        %v1540 = vsel %vm1485, %v1425, -inf
        %v1541 = vsel %vm1485, %v1428, -inf
        %v1542 = vmax.f32 %v1540, %v1541
        %v1543 = vrot.slane %v1542, 4
        %v1544 = vmax.f32 %v1542, %v1543
        %v1545 = vrot.slane %v1544, 2
        %v1546 = vmax.f32 %v1544, %v1545
        %v1547 = vrot.slane %v1546, 1
        %v1548 = vmax.f32 %v1546, %v1547
        %v1549 = vsel %vm1485, %v1433, -inf
        %v1550 = vsel %vm1485, %v1436, -inf
        %v1551 = vmax.f32 %v1549, %v1550
        %v1552 = vrot.slane %v1551, 4
        %v1553 = vmax.f32 %v1551, %v1552
        %v1554 = vrot.slane %v1553, 2
        %v1555 = vmax.f32 %v1553, %v1554
        %v1556 = vrot.slane %v1555, 1
        %v1557 = vmax.f32 %v1555, %v1556
        %v1559 = vrot.slane %v1480, 1
        %v1560 = vrot.slane %v1480, 2
        %v1561 = vrot.slane %v1480, 3
        %v1562 = vrot.slane %v1480, 4
        %v1563 = vrot.slane %v1480, 5
        %v1564 = vrot.slane %v1480, 6
        %v1565 = vrot.slane %v1480, 7
        %v1574 = vmax.f32 %v1494, %v1480
        %v1575 = vmax.f32 %v1503, %v1559
        %v1576 = vmax.f32 %v1512, %v1560
        %v1577 = vmax.f32 %v1521, %v1561
        %v1578 = vmax.f32 %v1530, %v1562
        %v1579 = vmax.f32 %v1539, %v1563
        %v1580 = vmax.f32 %v1548, %v1564
        %v1581 = vmax.f32 %v1557, %v1565
        %v1582 = vlaneseq
        %v1583 = vshrl.u32 %v1582, 7
        %v1584 = vsub.s32 0, %v1583
        %v1585 = vrot.slane %v1574, %v1584
        %v1586 = vlaneseq
        %v1587 = vshrl.u32 %v1586, 7
        %v1588 = vsub.s32 0, %v1587
        %v1589 = vrot.slane %v1575, %v1588
        %v1590 = vlaneseq
        %v1591 = vshrl.u32 %v1590, 7
        %v1592 = vsub.s32 0, %v1591
        %v1593 = vrot.slane %v1576, %v1592
        %v1594 = vlaneseq
        %v1595 = vshrl.u32 %v1594, 7
        %v1596 = vsub.s32 0, %v1595
        %v1597 = vrot.slane %v1577, %v1596
        %v1598 = vlaneseq
        %v1599 = vshrl.u32 %v1598, 7
        %v1600 = vsub.s32 0, %v1599
        %v1601 = vrot.slane %v1578, %v1600
        %v1602 = vlaneseq
        %v1603 = vshrl.u32 %v1602, 7
        %v1604 = vsub.s32 0, %v1603
        %v1605 = vrot.slane %v1579, %v1604
        %v1606 = vlaneseq
        %v1607 = vshrl.u32 %v1606, 7
        %v1608 = vsub.s32 0, %v1607
        %v1609 = vrot.slane %v1580, %v1608
        %v1610 = vlaneseq
        %v1611 = vshrl.u32 %v1610, 7
        %v1612 = vsub.s32 0, %v1611
        %v1613 = vrot.slane %v1581, %v1612
        %v1614 = vsub.f32 %v1377, %v1585
        %v1615 = vsub.f32 %v1380, %v1585
        %v1616 = vsub.f32 %v1385, %v1589
        %v1617 = vsub.f32 %v1388, %v1589
        %v1618 = vsub.f32 %v1393, %v1593
        %v1619 = vsub.f32 %v1396, %v1593
        %v1620 = vsub.f32 %v1401, %v1597
        %v1621 = vsub.f32 %v1404, %v1597
        %v1622 = vsub.f32 %v1409, %v1601
        %v1623 = vsub.f32 %v1412, %v1601
        %v1624 = vsub.f32 %v1417, %v1605
        %v1625 = vsub.f32 %v1420, %v1605
        %v1626 = vsub.f32 %v1425, %v1609
        %v1627 = vsub.f32 %v1428, %v1609
        %v1628 = vsub.f32 %v1433, %v1613
        %v1629 = vsub.f32 %v1436, %v1613
        %v1630 = vmul.f32 %v1614, 1.442695
        %v1631 = vpow.pop %v1630
        %v1632 = vmul.f32 %v1615, 1.442695
        %v1633 = vpow.pop %v1632
        %v1634 = vmul.f32 %v1616, 1.442695
        %v1635 = vpow.pop %v1634
        %v1636 = vmul.f32 %v1617, 1.442695
        %v1637 = vpow.pop %v1636
        %v1638 = vmul.f32 %v1618, 1.442695
        %v1639 = vpow.pop %v1638
        %v1640 = vmul.f32 %v1619, 1.442695
        %v1641 = vpow.pop %v1640
        %v1642 = vmul.f32 %v1620, 1.442695
        %v1643 = vpow.pop %v1642
        %v1644 = vmul.f32 %v1621, 1.442695
        %v1645 = vpow.pop %v1644
        %v1646 = vmul.f32 %v1622, 1.442695
        %v1647 = vpow.pop %v1646
        %v1648 = vmul.f32 %v1623, 1.442695
        %v1649 = vpow.pop %v1648
        %v1650 = vmul.f32 %v1624, 1.442695
        %v1651 = vpow.pop %v1650
        %v1652 = vmul.f32 %v1625, 1.442695
        %v1653 = vpow.pop %v1652
        %v1654 = vmul.f32 %v1626, 1.442695
        %v1655 = vpow.pop %v1654
        %v1656 = vmul.f32 %v1627, 1.442695
        %v1657 = vpow.pop %v1656
        %v1658 = vmul.f32 %v1628, 1.442695
        %v1659 = vpow.pop %v1658
        %v1660 = vmul.f32 %v1629, 1.442695
        %v1661 = vpow.pop %v1660
        %v1670 = vrot.slane %v1575, 7
        %vm1671 = vcmask 1041409
        %v1672 = vsel %vm1671, %v1670, %v1574
        %v1673 = vrot.slane %v1576, 6
        %vm1674 = vcmask 1042434
        %v1675 = vsel %vm1674, %v1673, %v1672
        %v1676 = vrot.slane %v1577, 5
        %vm1677 = vcmask 1043459
        %v1678 = vsel %vm1677, %v1676, %v1675
        %v1679 = vrot.slane %v1578, 4
        %vm1680 = vcmask 1044484
        %v1681 = vsel %vm1680, %v1679, %v1678
        %v1682 = vrot.slane %v1579, 3
        %vm1683 = vcmask 1045509
        %v1684 = vsel %vm1683, %v1682, %v1681
        %v1685 = vrot.slane %v1580, 2
        %vm1686 = vcmask 1046534
        %v1687 = vsel %vm1686, %v1685, %v1684
        %v1688 = vrot.slane %v1581, 1
        %vm1689 = vcmask 1047559
        %v1690 = vsel %vm1689, %v1688, %v1687
        %v1692 = vsub.f32 %v1480, %v1690
        %v1693 = vmul.f32 %v1692, 1.442695
        %v1694 = vpow.pop %v1693
        %v1695 = vsel %vm1485, %v1631, 0.0
        %v1696 = vsel %vm1485, %v1633, 0.0
        %v1697 = vadd.f32 %v1695, %v1696
        %v1698 = vrot.slane %v1697, 4
        %v1699 = vadd.f32 %v1697, %v1698
        %v1700 = vrot.slane %v1699, 2
        %v1701 = vadd.f32 %v1699, %v1700
        %v1702 = vrot.slane %v1701, 1
        %v1703 = vadd.f32 %v1701, %v1702
        %v1704 = vsel %vm1485, %v1635, 0.0
        %v1705 = vsel %vm1485, %v1637, 0.0
        %v1706 = vadd.f32 %v1704, %v1705
        %v1707 = vrot.slane %v1706, 4
        %v1708 = vadd.f32 %v1706, %v1707
        %v1709 = vrot.slane %v1708, 2
        %v1710 = vadd.f32 %v1708, %v1709
        %v1711 = vrot.slane %v1710, 1
        %v1712 = vadd.f32 %v1710, %v1711
        %v1713 = vsel %vm1485, %v1639, 0.0
        %v1714 = vsel %vm1485, %v1641, 0.0
        %v1715 = vadd.f32 %v1713, %v1714
        %v1716 = vrot.slane %v1715, 4
        %v1717 = vadd.f32 %v1715, %v1716
        %v1718 = vrot.slane %v1717, 2
        %v1719 = vadd.f32 %v1717, %v1718
        %v1720 = vrot.slane %v1719, 1
        %v1721 = vadd.f32 %v1719, %v1720
        %v1722 = vsel %vm1485, %v1643, 0.0
        %v1723 = vsel %vm1485, %v1645, 0.0
        %v1724 = vadd.f32 %v1722, %v1723
        %v1725 = vrot.slane %v1724, 4
        %v1726 = vadd.f32 %v1724, %v1725
        %v1727 = vrot.slane %v1726, 2
        %v1728 = vadd.f32 %v1726, %v1727
        %v1729 = vrot.slane %v1728, 1
        %v1730 = vadd.f32 %v1728, %v1729
        %v1731 = vsel %vm1485, %v1647, 0.0
        %v1732 = vsel %vm1485, %v1649, 0.0
        %v1733 = vadd.f32 %v1731, %v1732
        %v1734 = vrot.slane %v1733, 4
        %v1735 = vadd.f32 %v1733, %v1734
        %v1736 = vrot.slane %v1735, 2
        %v1737 = vadd.f32 %v1735, %v1736
        %v1738 = vrot.slane %v1737, 1
        %v1739 = vadd.f32 %v1737, %v1738
        %v1740 = vsel %vm1485, %v1651, 0.0
        %v1741 = vsel %vm1485, %v1653, 0.0
        %v1742 = vadd.f32 %v1740, %v1741
        %v1743 = vrot.slane %v1742, 4
        %v1744 = vadd.f32 %v1742, %v1743
        %v1745 = vrot.slane %v1744, 2
        %v1746 = vadd.f32 %v1744, %v1745
        %v1747 = vrot.slane %v1746, 1
        %v1748 = vadd.f32 %v1746, %v1747
        %v1749 = vsel %vm1485, %v1655, 0.0
        %v1750 = vsel %vm1485, %v1657, 0.0
        %v1751 = vadd.f32 %v1749, %v1750
        %v1752 = vrot.slane %v1751, 4
        %v1753 = vadd.f32 %v1751, %v1752
        %v1754 = vrot.slane %v1753, 2
        %v1755 = vadd.f32 %v1753, %v1754
        %v1756 = vrot.slane %v1755, 1
        %v1757 = vadd.f32 %v1755, %v1756
        %v1758 = vsel %vm1485, %v1659, 0.0
        %v1759 = vsel %vm1485, %v1661, 0.0
        %v1760 = vadd.f32 %v1758, %v1759
        %v1761 = vrot.slane %v1760, 4
        %v1762 = vadd.f32 %v1760, %v1761
        %v1763 = vrot.slane %v1762, 2
        %v1764 = vadd.f32 %v1762, %v1763
        %v1765 = vrot.slane %v1764, 1
        %v1766 = vadd.f32 %v1764, %v1765
        %v1768 = vrot.slane %v1694, 1
        %v1769 = vrot.slane %v1694, 2
        %v1770 = vrot.slane %v1694, 3
        %v1771 = vrot.slane %v1694, 4
        %v1772 = vrot.slane %v1694, 5
        %v1773 = vrot.slane %v1694, 6
        %v1774 = vrot.slane %v1694, 7
        %v1783 = vadd.f32 %v1703, %v1694
        %v1784 = vadd.f32 %v1712, %v1768
        %v1785 = vadd.f32 %v1721, %v1769
        %v1786 = vadd.f32 %v1730, %v1770
        %v1787 = vadd.f32 %v1739, %v1771
        %v1788 = vadd.f32 %v1748, %v1772
        %v1789 = vadd.f32 %v1757, %v1773
        %v1790 = vadd.f32 %v1766, %v1774
        %v1791 = vrcp.pop %v1783
        %v1792 = vrcp.pop %v1784
        %v1793 = vrcp.pop %v1785
        %v1794 = vrcp.pop %v1786
        %v1795 = vrcp.pop %v1787
        %v1796 = vrcp.pop %v1788
        %v1797 = vrcp.pop %v1789
        %v1798 = vrcp.pop %v1790
        %v1799 = vlaneseq
        %v1800 = vshrl.u32 %v1799, 7
        %v1801 = vsub.s32 0, %v1800
        %v1802 = vrot.slane %v1791, %v1801
        %v1803 = vlaneseq
        %v1804 = vshrl.u32 %v1803, 7
        %v1805 = vsub.s32 0, %v1804
        %v1806 = vrot.slane %v1792, %v1805
        %v1807 = vlaneseq
        %v1808 = vshrl.u32 %v1807, 7
        %v1809 = vsub.s32 0, %v1808
        %v1810 = vrot.slane %v1793, %v1809
        %v1811 = vlaneseq
        %v1812 = vshrl.u32 %v1811, 7
        %v1813 = vsub.s32 0, %v1812
        %v1814 = vrot.slane %v1794, %v1813
        %v1815 = vlaneseq
        %v1816 = vshrl.u32 %v1815, 7
        %v1817 = vsub.s32 0, %v1816
        %v1818 = vrot.slane %v1795, %v1817
        %v1819 = vlaneseq
        %v1820 = vshrl.u32 %v1819, 7
        %v1821 = vsub.s32 0, %v1820
        %v1822 = vrot.slane %v1796, %v1821
        %v1823 = vlaneseq
        %v1824 = vshrl.u32 %v1823, 7
        %v1825 = vsub.s32 0, %v1824
        %v1826 = vrot.slane %v1797, %v1825
        %v1827 = vlaneseq
        %v1828 = vshrl.u32 %v1827, 7
        %v1829 = vsub.s32 0, %v1828
        %v1830 = vrot.slane %v1798, %v1829
        %v1831 = vmul.f32 %v1631, %v1802
        %v1832 = vmul.f32 %v1633, %v1802
        %v1833 = vmul.f32 %v1635, %v1806
        %v1834 = vmul.f32 %v1637, %v1806
        %v1835 = vmul.f32 %v1639, %v1810
        %v1836 = vmul.f32 %v1641, %v1810
        %v1837 = vmul.f32 %v1643, %v1814
        %v1838 = vmul.f32 %v1645, %v1814
        %v1839 = vmul.f32 %v1647, %v1818
        %v1840 = vmul.f32 %v1649, %v1818
        %v1841 = vmul.f32 %v1651, %v1822
        %v1842 = vmul.f32 %v1653, %v1822
        %v1843 = vmul.f32 %v1655, %v1826
        %v1844 = vmul.f32 %v1657, %v1826
        %v1845 = vmul.f32 %v1659, %v1830
        %v1846 = vmul.f32 %v1661, %v1830
        %v1855 = vrot.slane %v1792, 7
        %v1856 = vsel %vm1671, %v1855, %v1791
        %v1857 = vrot.slane %v1793, 6
        %v1858 = vsel %vm1674, %v1857, %v1856
        %v1859 = vrot.slane %v1794, 5
        %v1860 = vsel %vm1677, %v1859, %v1858
        %v1861 = vrot.slane %v1795, 4
        %v1862 = vsel %vm1680, %v1861, %v1860
        %v1863 = vrot.slane %v1796, 3
        %v1864 = vsel %vm1683, %v1863, %v1862
        %v1865 = vrot.slane %v1797, 2
        %v1866 = vsel %vm1686, %v1865, %v1864
        %v1867 = vrot.slane %v1798, 1
        %v1868 = vsel %vm1689, %v1867, %v1866
        %v1870 = vmul.f32 %v1694, %v1868
        %v1871 = vpack.c.bf16 %v1832, %v1831
        %v1872 = vpack.c.bf16 %v1834, %v1833
        %v1873 = vpack.c.bf16 %v1836, %v1835
        %v1874 = vpack.c.bf16 %v1838, %v1837
        %v1875 = vpack.c.bf16 %v1840, %v1839
        %v1876 = vpack.c.bf16 %v1842, %v1841
        %v1877 = vpack.c.bf16 %v1844, %v1843
        %v1878 = vpack.c.bf16 %v1846, %v1845
        %v1880 = vsel %vm1485, %v1871, 0
        %v1883 = vsel %vm1485, %v1872, 0
        %v1886 = vsel %vm1485, %v1873, 0
        %v1889 = vsel %vm1485, %v1874, 0
        %v1892 = vsel %vm1485, %v1875, 0
        %v1895 = vsel %vm1485, %v1876, 0
        %v1898 = vsel %vm1485, %v1877, 0
        %v1901 = vsel %vm1485, %v1878, 0
        %vm1903 = vcmask 1041408
        %v1905 = vsel %vm1903, %v533, 0
        %1907 = vmatprep.subr.bf16.mxu0 0
        %1908 = vmatpush1.bf16.msra.mxu0 0
        %1909 = vmatprep.subr.bf16.mxu0 0
        %1910 = vmatpush1.bf16.msra.mxu0 0
        %1911 = vmatprep.subr.bf16.mxu0 0
        %1912 = vmatpush1.bf16.msra.mxu0 0
        %1913 = vmatprep.subr.bf16.mxu0 0
        %1914 = vmatpush1.bf16.msra.mxu0 0
        %1915 = vmatprep.subr.bf16.mxu0 0
        %1916 = vmatpush1.bf16.msra.mxu0 0
        %1917 = vmatprep.subr.bf16.mxu0 0
        %1918 = vmatpush1.bf16.msra.mxu0 0
        %1919 = vmatprep.subr.bf16.mxu0 0
        %1920 = vmatpush1.bf16.msra.mxu0 0
        %1921 = vmatprep.subr.bf16.mxu0 0
        %1922 = vmatpush1.bf16.msra.mxu0 %v1905
        %1923 = vmatprep.subr.bf16.mxu0 0
        %1924 = vmatpush2.bf16.msra.mxu0 0
        %1925 = vmatprep.subr.bf16.mxu0 0
        %1926 = vmatpush2.bf16.msra.mxu0 0
        %1927 = vmatprep.subr.bf16.mxu0 0
        %1928 = vmatpush2.bf16.msra.mxu0 0
        %1929 = vmatprep.subr.bf16.mxu0 0
        %1930 = vmatpush2.bf16.msra.mxu0 0
        %1931 = vmatprep.subr.bf16.mxu0 0
        %1932 = vmatpush2.bf16.msra.mxu0 0
        %1933 = vmatprep.subr.bf16.mxu0 0
        %1934 = vmatpush2.bf16.msra.mxu0 0
        %1935 = vmatprep.subr.bf16.mxu0 0
        %1936 = vmatpush2.bf16.msra.mxu0 0
        %1937 = vmatprep.subr.bf16.mxu0 0
        %1938 = vmatpush2.bf16.msra.mxu0 0
        %1939 = vmatprep.mubr.bf16.mxu0 0
        %1940 = vmatmul.mubr.bf16.gmra.mxu0 %v1880
        %v1941 = vpop.f32.mrf.mxu0
        %v1942 = vadd.f32 0.0, %v1941
        %v1943 = vpop.f32.mrf.mxu0
        %v1944 = vpop.f32.mrf.mxu0
        %v1945 = vadd.f32 0.0, %v1944
        %v1946 = vpop.f32.mrf.mxu0
        %1947 = vmatprep.mubr.bf16.mxu0 0
        %1948 = vmatmul.mubr.bf16.gmra.mxu0 %v1883
        %v1949 = vpop.f32.mrf.mxu0
        %v1950 = vadd.f32 0.0, %v1949
        %v1951 = vpop.f32.mrf.mxu0
        %v1952 = vpop.f32.mrf.mxu0
        %v1953 = vadd.f32 0.0, %v1952
        %v1954 = vpop.f32.mrf.mxu0
        %1955 = vmatprep.mubr.bf16.mxu0 0
        %1956 = vmatmul.mubr.bf16.gmra.mxu0 %v1886
        %v1957 = vpop.f32.mrf.mxu0
        %v1958 = vadd.f32 0.0, %v1957
        %v1959 = vpop.f32.mrf.mxu0
        %v1960 = vpop.f32.mrf.mxu0
        %v1961 = vadd.f32 0.0, %v1960
        %v1962 = vpop.f32.mrf.mxu0
        %1963 = vmatprep.mubr.bf16.mxu0 0
        %1964 = vmatmul.mubr.bf16.gmra.mxu0 %v1889
        %v1965 = vpop.f32.mrf.mxu0
        %v1966 = vadd.f32 0.0, %v1965
        %v1967 = vpop.f32.mrf.mxu0
        %v1968 = vpop.f32.mrf.mxu0
        %v1969 = vadd.f32 0.0, %v1968
        %v1970 = vpop.f32.mrf.mxu0
        %1971 = vmatprep.mubr.bf16.mxu0 0
        %1972 = vmatmul.mubr.bf16.gmra.mxu0 %v1892
        %v1973 = vpop.f32.mrf.mxu0
        %v1974 = vadd.f32 0.0, %v1973
        %v1975 = vpop.f32.mrf.mxu0
        %v1976 = vpop.f32.mrf.mxu0
        %v1977 = vadd.f32 0.0, %v1976
        %v1978 = vpop.f32.mrf.mxu0
        %1979 = vmatprep.mubr.bf16.mxu0 0
        %1980 = vmatmul.mubr.bf16.gmra.mxu0 %v1895
        %v1981 = vpop.f32.mrf.mxu0
        %v1982 = vadd.f32 0.0, %v1981
        %v1983 = vpop.f32.mrf.mxu0
        %v1984 = vpop.f32.mrf.mxu0
        %v1985 = vadd.f32 0.0, %v1984
        %v1986 = vpop.f32.mrf.mxu0
        %1987 = vmatprep.mubr.bf16.mxu0 0
        %1988 = vmatmul.mubr.bf16.gmra.mxu0 %v1898
        %v1989 = vpop.f32.mrf.mxu0
        %v1990 = vadd.f32 0.0, %v1989
        %v1991 = vpop.f32.mrf.mxu0
        %v1992 = vpop.f32.mrf.mxu0
        %v1993 = vadd.f32 0.0, %v1992
        %v1994 = vpop.f32.mrf.mxu0
        %1995 = vmatprep.mubr.bf16.mxu0 0
        %1996 = vmatmul.mubr.bf16.gmra.mxu0 %v1901
        %v1997 = vpop.f32.mrf.mxu0
        %v1998 = vadd.f32 0.0, %v1997
        %v1999 = vpop.f32.mrf.mxu0
        %v2000 = vpop.f32.mrf.mxu0
        %v2001 = vadd.f32 0.0, %v2000
        %v2002 = vpop.f32.mrf.mxu0
        %2003 = vdwg.mxu0
        %v2004 = vpack.c.bf16 %v1870, %v1870
        %v2006 = vsel %vm1485, %v2004, 0
        %2008 = vmatprep.subr.bf16.mxu0 0
        %2009 = vmatpush1.bf16.msra.mxu0 0
        %2010 = vmatprep.subr.bf16.mxu0 0
        %2011 = vmatpush1.bf16.msra.mxu0 0
        %2012 = vmatprep.subr.bf16.mxu0 0
        %2013 = vmatpush1.bf16.msra.mxu0 0
        %2014 = vmatprep.subr.bf16.mxu0 0
        %2015 = vmatpush1.bf16.msra.mxu0 0
        %2016 = vmatprep.subr.bf16.mxu0 0
        %2017 = vmatpush1.bf16.msra.mxu0 0
        %2018 = vmatprep.subr.bf16.mxu0 0
        %2019 = vmatpush1.bf16.msra.mxu0 0
        %2020 = vmatprep.subr.bf16.mxu0 0
        %2021 = vmatpush1.bf16.msra.mxu0 0
        %2022 = vmatprep.subr.bf16.mxu0 0
        %2023 = vmatpush1.bf16.msra.mxu0 %v1905
        %2024 = vmatprep.subr.bf16.mxu0 0
        %2025 = vmatpush2.bf16.msra.mxu0 0
        %2026 = vmatprep.subr.bf16.mxu0 0
        %2027 = vmatpush2.bf16.msra.mxu0 0
        %2028 = vmatprep.subr.bf16.mxu0 0
        %2029 = vmatpush2.bf16.msra.mxu0 0
        %2030 = vmatprep.subr.bf16.mxu0 0
        %2031 = vmatpush2.bf16.msra.mxu0 0
        %2032 = vmatprep.subr.bf16.mxu0 0
        %2033 = vmatpush2.bf16.msra.mxu0 0
        %2034 = vmatprep.subr.bf16.mxu0 0
        %2035 = vmatpush2.bf16.msra.mxu0 0
        %2036 = vmatprep.subr.bf16.mxu0 0
        %2037 = vmatpush2.bf16.msra.mxu0 0
        %2038 = vmatprep.subr.bf16.mxu0 0
        %2039 = vmatpush2.bf16.msra.mxu0 0
        %2040 = vmatprep.mubr.bf16.mxu0 0
        %2041 = vmatmul.mubr.bf16.gmra.mxu0 %v2006
        %v2042 = vpop.f32.mrf.mxu0
        %v2043 = vadd.f32 0.0, %v2042
        %v2044 = vpop.f32.mrf.mxu0
        %v2045 = vpop.f32.mrf.mxu0
        %v2046 = vpop.f32.mrf.mxu0
        %2047 = vdwg.mxu0
        %v2048 = vmul.f32 %v1942, %v1054
        %v2049 = vmul.f32 %v1945, %v1057
        %v2050 = vmul.f32 %v1950, %v1062
        %v2051 = vmul.f32 %v1953, %v1065
        %v2052 = vmul.f32 %v1958, %v1070
        %v2053 = vmul.f32 %v1961, %v1073
        %v2054 = vmul.f32 %v1966, %v1078
        %v2055 = vmul.f32 %v1969, %v1081
        %v2056 = vmul.f32 %v1974, %v1086
        %v2057 = vmul.f32 %v1977, %v1089
        %v2058 = vmul.f32 %v1982, %v1094
        %v2059 = vmul.f32 %v1985, %v1097
        %v2060 = vmul.f32 %v1990, %v1102
        %v2061 = vmul.f32 %v1993, %v1105
        %v2062 = vmul.f32 %v1998, %v1110
        %v2063 = vmul.f32 %v2001, %v1113
        %v2064 = vpack.c.bf16 %v2049, %v2048
        %v2065 = vpack.c.bf16 %v2051, %v2050
        %v2066 = vpack.c.bf16 %v2053, %v2052
        %v2067 = vpack.c.bf16 %v2055, %v2054
        %v2068 = vpack.c.bf16 %v2057, %v2056
        %v2069 = vpack.c.bf16 %v2059, %v2058
        %v2070 = vpack.c.bf16 %v2061, %v2060
        %v2071 = vpack.c.bf16 %v2063, %v2062
        %v2072 = vmul.f32 %v2043, %v820
        %2073 = vmatprep.subr.bf16.mxu0 0
        %2074 = vmatpush1.bf16.msra.mxu0 %v2071
        %2075 = vmatprep.subr.bf16.mxu0 0
        %2076 = vmatpush1.bf16.msra.mxu0 %v2070
        %2077 = vmatprep.subr.bf16.mxu0 0
        %2078 = vmatpush1.bf16.msra.mxu0 %v2069
        %2079 = vmatprep.subr.bf16.mxu0 0
        %2080 = vmatpush1.bf16.msra.mxu0 %v2068
        %2081 = vmatprep.subr.bf16.mxu0 0
        %2082 = vmatpush1.bf16.msra.mxu0 %v2067
        %2083 = vmatprep.subr.bf16.mxu0 0
        %2084 = vmatpush1.bf16.msra.mxu0 %v2066
        %2085 = vmatprep.subr.bf16.mxu0 0
        %2086 = vmatpush1.bf16.msra.mxu0 %v2065
        %2087 = vmatprep.subr.bf16.mxu0 0
        %2088 = vmatpush1.bf16.msra.mxu0 %v2064
        %2089 = vmatprep.subr.bf16.mxu0 0
        %2090 = vmatpush2.bf16.msra.mxu0 0
        %2091 = vmatprep.subr.bf16.mxu0 0
        %2092 = vmatpush2.bf16.msra.mxu0 0
        %2093 = vmatprep.subr.bf16.mxu0 0
        %2094 = vmatpush2.bf16.msra.mxu0 0
        %2095 = vmatprep.subr.bf16.mxu0 0
        %2096 = vmatpush2.bf16.msra.mxu0 0
        %2097 = vmatprep.subr.bf16.mxu0 0
        %2098 = vmatpush2.bf16.msra.mxu0 0
        %2099 = vmatprep.subr.bf16.mxu0 0
        %2100 = vmatpush2.bf16.msra.mxu0 0
        %2101 = vmatprep.subr.bf16.mxu0 0
        %2102 = vmatpush2.bf16.msra.mxu0 0
        %2103 = vmatprep.subr.bf16.mxu0 0
        %2104 = vmatpush2.bf16.msra.mxu0 0
        %2105 = vmatprep.mubr.bf16.mxu0 0
        %2106 = vmatmul.mubr.bf16.gmra.mxu0 %v512
        %v2107 = vpop.f32.mrf.mxu0
        %v2108 = vadd.f32 %v2072, %v2107
        %v2109 = vpop.f32.mrf.mxu0
        %v2110 = vpop.f32.mrf.mxu0
        %v2111 = vpop.f32.mrf.mxu0
        %2112 = vdwg.mxu0
        %v2113 = vpack.c.bf16 %v2108, %v2108
        %v2114 = vld [vmem:[%s6] sm:$0xf]
        %v2115 = vld [vmem:[%s6 + $0x4] sm:$0xf]
        %v2116 = vld [vmem:[%s6 + $0x8] sm:$0xf]
        %v2117 = vld [vmem:[%s6 + $0xc] sm:$0xf]
        %v2118 = vld [vmem:[%s10] sm:$0x1]
        %v2120 = vlaneseq
        %v2121 = vshrl.u32 %v2120, 7
        %v2122 = vsub.s32 0, %v2121
        %v2123 = vrot.slane %v2118, %v2122
        %v2129 = vunpack.c.l.b16 %v2114
        %v2130 = vunpack.c.l.b16 %v2115
        %v2131 = vunpack.c.l.b16 %v2116
        %v2132 = vunpack.c.l.b16 %v2117
        %v2133 = vpack.c.b16 %v2130, %v2129
        %v2134 = vpack.c.b16 %v2132, %v2131
        %v2138 = vsel %vm655, %v2113, 0
        %2140 = vmatprep.subr.bf16.mxu0 0
        %2141 = vmatpush1.bf16.msra.mxu0 0
        %2142 = vmatprep.subr.bf16.mxu0 0
        %2143 = vmatpush1.bf16.msra.mxu0 0
        %2144 = vmatprep.subr.bf16.mxu0 0
        %2145 = vmatpush1.bf16.msra.mxu0 0
        %2146 = vmatprep.subr.bf16.mxu0 0
        %2147 = vmatpush1.bf16.msra.mxu0 0
        %2148 = vmatprep.subr.bf16.mxu0 0
        %2149 = vmatpush1.bf16.msra.mxu0 0
        %2150 = vmatprep.subr.bf16.mxu0 0
        %2151 = vmatpush1.bf16.msra.mxu0 0
        %2152 = vmatprep.subr.bf16.mxu0 0
        %2153 = vmatpush1.bf16.msra.mxu0 %v2134
        %2154 = vmatprep.subr.bf16.mxu0 0
        %2155 = vmatpush1.bf16.msra.mxu0 %v2133
        %2156 = vmatprep.subr.bf16.mxu0 0
        %2157 = vmatpush2.bf16.msra.mxu0 0
        %2158 = vmatprep.subr.bf16.mxu0 0
        %2159 = vmatpush2.bf16.msra.mxu0 0
        %2160 = vmatprep.subr.bf16.mxu0 0
        %2161 = vmatpush2.bf16.msra.mxu0 0
        %2162 = vmatprep.subr.bf16.mxu0 0
        %2163 = vmatpush2.bf16.msra.mxu0 0
        %2164 = vmatprep.subr.bf16.mxu0 0
        %2165 = vmatpush2.bf16.msra.mxu0 0
        %2166 = vmatprep.subr.bf16.mxu0 0
        %2167 = vmatpush2.bf16.msra.mxu0 0
        %2168 = vmatprep.subr.bf16.mxu0 0
        %2169 = vmatpush2.bf16.msra.mxu0 0
        %2170 = vmatprep.subr.bf16.mxu0 0
        %2171 = vmatpush2.bf16.msra.mxu0 0
        %2172 = vmatprep.mubr.bf16.mxu0 0
        %2173 = vmatmul.mubr.bf16.gmra.mxu0 %v2138
        %v2174 = vpop.f32.mrf.mxu0
        %v2175 = vadd.f32 %v2123, %v2174
        %v2176 = vpop.f32.mrf.mxu0
        %v2177 = vpop.f32.mrf.mxu0
        %v2178 = vpop.f32.mrf.mxu0
        %2179 = vdwg.mxu0
        %2180 = vst.msk [vmem:[%s488] sm:$0xff] %vm655, %v2175
        %s2181 = sand.u32 %s357, 1
        %s2182 = scalar_lea.sflag [#allocation3], %s2181
        %s2183 = sand.u32 %s357, 1
        %s2184 = smul.addr %s2183, 8
        %s2185 = scalar_lea.vmem [#allocation2], %s2184
        // Predicated region
        $region81: #{tpu_custom_call.1} parent=79 // pred_check
          %p2186 = pneg %p367
        $region82: #{tpu_custom_call.1} parent=79 // pred_check_branch
          %2188 = sbr.rel (%p2186) target = $region84
        $region83: #{tpu_custom_call.1} parent=79 // pred_region
          %s2190 = ssub.s32 128, 128
          %2191 = vsyncadd %s2182, %s2190
          %s2192 = smul.addr %s29, 128
          %s2193 = scalar_lea.hbm %s15, %s2192
          %s2195 = sshll.u32 %s2185, 4
          %s2196 = int_to_ptr.vmem [resolvable:$true] %s2195
          %2198 = dma.vmem_to_hbm [thread:$0]  %s2196, 128, %s2193, %s2182
        $region84: #{tpu_custom_call.1} parent=79 // pred_fallthru
          _
      $region80: #{tpu_custom_call.1} parent=5 // pred_fallthru
        _
      %p2199 = scmp.le.s32.totalorder 2, %s24
      // Predicated region
      $region85: #{tpu_custom_call.1} parent=5 // pred_check
        %p2200 = pneg %p2199
      $region86: #{tpu_custom_call.1} parent=5 // pred_check_branch
        %2202 = sbr.rel (%p2200) target = $region88
      $region87: #{tpu_custom_call.1} parent=5 // pred_region
        %s2203 = ssub.s32 %s24, 2
        // Predicated region
        $region89: #{tpu_custom_call.1} parent=87 // pred_check
          %p2204 = pneg %p373
        $region90: #{tpu_custom_call.1} parent=87 // pred_check_branch
          %2206 = sbr.rel (%p2204) target = $region92
        $region91: #{tpu_custom_call.1} parent=87 // pred_region
          %s2207 = sand.u32 %s358, 1
          %s2208 = scalar_lea.sflag [#allocation3], %s2207
          %s2209 = sand.u32 %s358, 1
          %s2210 = smul.addr %s2209, 8
          %s2211 = scalar_lea.vmem [#allocation2], %s2210
          %2212 = dma.done %s2208, 128
        $region92: #{tpu_custom_call.1} parent=87 // pred_fallthru
          _
      $region88: #{tpu_custom_call.1} parent=5 // pred_fallthru
        _
    $region6: #{tpu_custom_call.1} parent=1 // loop_footer
      %s28 = sadd.s32 1, %s24
    $region7: #{tpu_custom_call.1} parent=1 // loop_footer_branch
      %23 = sbr.rel target = $region3
    $region8: #{tpu_custom_call.1} parent=1 // loop_exit
      _
    %2213 = vsyncpa [#allocation3], 1
    %s2214 = scalar_lea.sflag [#allocation3], 1
    %2215 = vsyncpa %s2214, 1

// kernel: tpu_custom_call.1
$region0: #{tpu_custom_call.1}
  #allocation0 [shape = 'u32[]', space=smem, size = 0x4, offset = 0x4, fixed_abs, tag = 'smem constant byte address 0x4 - core index']
  #allocation1 [shape = 'u32[144,128]{1,0:T(1,128)}', space=vmem, size = 0x12000, scoped, tag = 'internal scratch']
  %s0 = inlined_call_operand.vmem [shape: bf16[256,32], index: 0, kind: input, shape index: {}]
  %s1 = inlined_call_operand.vmem [shape: f32[1,32], index: 1, kind: input, shape index: {}]
  %s2 = inlined_call_operand.vmem [shape: bf16[128,32], index: 2, kind: input, shape index: {}]
  %s3 = inlined_call_operand.vmem [shape: bf16[32,32], index: 3, kind: input, shape index: {}]
  %s4 = inlined_call_operand.vmem [shape: bf16[32,32], index: 4, kind: input, shape index: {}]
  %s5 = inlined_call_operand.vmem [shape: bf16[32,32], index: 5, kind: input, shape index: {}]
  %s6 = inlined_call_operand.vmem [shape: bf16[32,32], index: 6, kind: input, shape index: {}]
  %s7 = inlined_call_operand.vmem [shape: f32[1,32], index: 7, kind: input, shape index: {}]
  %s8 = inlined_call_operand.vmem [shape: f32[1,32], index: 8, kind: input, shape index: {}]
  %s9 = inlined_call_operand.vmem [shape: f32[1,32], index: 9, kind: input, shape index: {}]
  %s10 = inlined_call_operand.vmem [shape: f32[1,32], index: 10, kind: input, shape index: {}]
  %s11 = inlined_call_operand.vmem [shape: bf16[32,4], index: 11, kind: input, shape index: {}]
  %s12 = inlined_call_operand.vmem [shape: bf16[4,32], index: 12, kind: input, shape index: {}]
  %s13 = inlined_call_operand.vmem [shape: bf16[8,128], index: 13, kind: input, shape index: {}]
  %s14 = inlined_call_operand.vmem [shape: bf16[128,8], index: 14, kind: input, shape index: {}]
  %s15 = inlined_call_operand.hbm [shape: f32[16,32], index: 15, kind: output, shape index: {}]
  %s16 = sld [smem:[#allocation0]]
  $region93: #{tpu_custom_call.1} parent=0
    _
  %s18 = ssub.s32 1, %s16
  %s19 = scalar_select 0, %s18, %s16
  $region1: #{tpu_custom_call.1} parent=0
    #allocation2 [shape = 'u8[8192]{0}', space=vmem, size = 0x2000, scoped, tag = 'output window, operand 0']
    #allocation3 [shape = 's32[2]{0}', space=sflag, size = 0x8, scoped, tag = 'scoped memory for tpu_custom_call.1']
    %20 = vsyncpa [#allocation3], 0
    %s21 = scalar_lea.sflag [#allocation3], 1
    %22 = vsyncpa %s21, 0
    loop: start=0, step=1, limit=4
    $region2: #{tpu_custom_call.1} parent=1 // loop_pre_header
      _
    $region3: #{tpu_custom_call.1} parent=1 // loop_header
      %s24 = sphi 0, %s28
      %p25 = scmp.ge.s32.totalorder %s24, 4
      %s34 = sphi 0, %s36
      %s37 = sphi 0, %s34
      %s38 = sphi 0, %s37
      %s54 = sphi 0, %s38
      %s58 = sphi 0, %s58
      %s60 = sphi 0, %s58
      %s61 = sphi 0, %s60
      %s75 = sphi 0, %s61
      %s79 = sphi 0, %s79
      %s81 = sphi 0, %s79
      %s82 = sphi 0, %s81
      %s96 = sphi 0, %s82
      %s100 = sphi 0, %s100
      %s102 = sphi 0, %s100
      %s103 = sphi 0, %s102
      %s117 = sphi 0, %s103
      %s121 = sphi 0, %s121
      %s123 = sphi 0, %s121
      %s124 = sphi 0, %s123
      %s138 = sphi 0, %s124
      %s142 = sphi 0, %s142
      %s144 = sphi 0, %s142
      %s145 = sphi 0, %s144
      %s159 = sphi 0, %s145
      %s163 = sphi 0, %s163
      %s165 = sphi 0, %s163
      %s166 = sphi 0, %s165
      %s180 = sphi 0, %s166
      %s184 = sphi 0, %s184
      %s186 = sphi 0, %s184
      %s187 = sphi 0, %s186
      %s201 = sphi 0, %s187
      %s205 = sphi 0, %s205
      %s207 = sphi 0, %s205
      %s208 = sphi 0, %s207
      %s222 = sphi 0, %s208
      %s226 = sphi 0, %s226
      %s228 = sphi 0, %s226
      %s229 = sphi 0, %s228
      %s243 = sphi 0, %s229
      %s247 = sphi 0, %s247
      %s249 = sphi 0, %s247
      %s250 = sphi 0, %s249
      %s264 = sphi 0, %s250
      %s268 = sphi 0, %s268
      %s270 = sphi 0, %s268
      %s271 = sphi 0, %s270
      %s285 = sphi 0, %s271
      %s289 = sphi 0, %s289
      %s291 = sphi 0, %s289
      %s292 = sphi 0, %s291
      %s306 = sphi 0, %s292
      %s310 = sphi 0, %s310
      %s312 = sphi 0, %s310
      %s313 = sphi 0, %s312
      %s327 = sphi 0, %s313
      %s331 = sphi 0, %s331
      %s333 = sphi 0, %s331
      %s334 = sphi 0, %s333
      %s348 = sphi 0, %s334
      %s354 = sphi 0, %s356
      %s357 = sphi 0, %s354
      %s358 = sphi 0, %s357
      %s374 = sphi 0, %s358
    $region4: #{tpu_custom_call.1} parent=1 // loop_header_branch
      %27 = sbr.rel (%p25) target = $region8
    $region5: #{tpu_custom_call.1} parent=1 // loop_body
      %s29 = ssub.s32 %s24, 1
      %s30 = ssub.s32 %s24, 2
      %s31 = sadd.s32 %s24, 1
      %s32 = ssub.s32 %s24, %s31
      %p33 = scmp.eq.s32.totalorder %s32, 0
      %s35 = sadd.s32 %s34, 1
      %s36 = scalar_select %p33, %s34, %s35
      %p39 = pneg %p33
      %p40 = scmp.eq.s32.totalorder %s24, 1
      %p41 = por %p39, %p40
      %p42 = scmp.ne.s32.totalorder %s34, %s37
      %p43 = scmp.eq.s32.totalorder %s24, 0
      %p44 = por %p42, %p43
      %p45 = scmp.ne.s32.totalorder %s34, %s37
      %p46 = scmp.eq.s32.totalorder %s29, 1
      %p47 = por %p45, %p46
      %p48 = scmp.ne.s32.totalorder %s37, %s38
      %p49 = scmp.eq.s32.totalorder %s29, 0
      %p50 = por %p48, %p49
      %p51 = scmp.ne.s32.totalorder %s37, %s38
      %p52 = scmp.eq.s32.totalorder %s30, 1
      %p53 = por %p51, %p52
      %p55 = scmp.ne.s32.totalorder %s38, %s54
      %p56 = scmp.eq.s32.totalorder %s30, 0
      %p57 = por %p55, %p56
      %s59 = sadd.s32 %s58, 1
      %p62 = scmp.eq.s32.totalorder %s24, 1
      %p63 = scmp.ne.s32.totalorder %s58, %s60
      %p64 = scmp.eq.s32.totalorder %s24, 0
      %p65 = por %p63, %p64
      %p66 = scmp.ne.s32.totalorder %s58, %s60
      %p67 = scmp.eq.s32.totalorder %s29, 1
      %p68 = por %p66, %p67
      %p69 = scmp.ne.s32.totalorder %s60, %s61
      %p70 = scmp.eq.s32.totalorder %s29, 0
      %p71 = por %p69, %p70
      %p72 = scmp.ne.s32.totalorder %s60, %s61
      %p73 = scmp.eq.s32.totalorder %s30, 1
      %p74 = por %p72, %p73
      %p76 = scmp.ne.s32.totalorder %s61, %s75
      %p77 = scmp.eq.s32.totalorder %s30, 0
      %p78 = por %p76, %p77
      %s80 = sadd.s32 %s79, 1
      %p83 = scmp.eq.s32.totalorder %s24, 1
      %p84 = scmp.ne.s32.totalorder %s79, %s81
      %p85 = scmp.eq.s32.totalorder %s24, 0
      %p86 = por %p84, %p85
      %p87 = scmp.ne.s32.totalorder %s79, %s81
      %p88 = scmp.eq.s32.totalorder %s29, 1
      %p89 = por %p87, %p88
      %p90 = scmp.ne.s32.totalorder %s81, %s82
      %p91 = scmp.eq.s32.totalorder %s29, 0
      %p92 = por %p90, %p91
      %p93 = scmp.ne.s32.totalorder %s81, %s82
      %p94 = scmp.eq.s32.totalorder %s30, 1
      %p95 = por %p93, %p94
      %p97 = scmp.ne.s32.totalorder %s82, %s96
      %p98 = scmp.eq.s32.totalorder %s30, 0
      %p99 = por %p97, %p98
      %s101 = sadd.s32 %s100, 1
      %p104 = scmp.eq.s32.totalorder %s24, 1
      %p105 = scmp.ne.s32.totalorder %s100, %s102
      %p106 = scmp.eq.s32.totalorder %s24, 0
      %p107 = por %p105, %p106
      %p108 = scmp.ne.s32.totalorder %s100, %s102
      %p109 = scmp.eq.s32.totalorder %s29, 1
      %p110 = por %p108, %p109
      %p111 = scmp.ne.s32.totalorder %s102, %s103
      %p112 = scmp.eq.s32.totalorder %s29, 0
      %p113 = por %p111, %p112
      %p114 = scmp.ne.s32.totalorder %s102, %s103
      %p115 = scmp.eq.s32.totalorder %s30, 1
      %p116 = por %p114, %p115
      %p118 = scmp.ne.s32.totalorder %s103, %s117
      %p119 = scmp.eq.s32.totalorder %s30, 0
      %p120 = por %p118, %p119
      %s122 = sadd.s32 %s121, 1
      %p125 = scmp.eq.s32.totalorder %s24, 1
      %p126 = scmp.ne.s32.totalorder %s121, %s123
      %p127 = scmp.eq.s32.totalorder %s24, 0
      %p128 = por %p126, %p127
      %p129 = scmp.ne.s32.totalorder %s121, %s123
      %p130 = scmp.eq.s32.totalorder %s29, 1
      %p131 = por %p129, %p130
      %p132 = scmp.ne.s32.totalorder %s123, %s124
      %p133 = scmp.eq.s32.totalorder %s29, 0
      %p134 = por %p132, %p133
      %p135 = scmp.ne.s32.totalorder %s123, %s124
      %p136 = scmp.eq.s32.totalorder %s30, 1
      %p137 = por %p135, %p136
      %p139 = scmp.ne.s32.totalorder %s124, %s138
      %p140 = scmp.eq.s32.totalorder %s30, 0
      %p141 = por %p139, %p140
      %s143 = sadd.s32 %s142, 1
      %p146 = scmp.eq.s32.totalorder %s24, 1
      %p147 = scmp.ne.s32.totalorder %s142, %s144
      %p148 = scmp.eq.s32.totalorder %s24, 0
      %p149 = por %p147, %p148
      %p150 = scmp.ne.s32.totalorder %s142, %s144
      %p151 = scmp.eq.s32.totalorder %s29, 1
      %p152 = por %p150, %p151
      %p153 = scmp.ne.s32.totalorder %s144, %s145
      %p154 = scmp.eq.s32.totalorder %s29, 0
      %p155 = por %p153, %p154
      %p156 = scmp.ne.s32.totalorder %s144, %s145
      %p157 = scmp.eq.s32.totalorder %s30, 1
      %p158 = por %p156, %p157
      %p160 = scmp.ne.s32.totalorder %s145, %s159
      %p161 = scmp.eq.s32.totalorder %s30, 0
      %p162 = por %p160, %p161
      %s164 = sadd.s32 %s163, 1
      %p167 = scmp.eq.s32.totalorder %s24, 1
      %p168 = scmp.ne.s32.totalorder %s163, %s165
      %p169 = scmp.eq.s32.totalorder %s24, 0
      %p170 = por %p168, %p169
      %p171 = scmp.ne.s32.totalorder %s163, %s165
      %p172 = scmp.eq.s32.totalorder %s29, 1
      %p173 = por %p171, %p172
      %p174 = scmp.ne.s32.totalorder %s165, %s166
      %p175 = scmp.eq.s32.totalorder %s29, 0
      %p176 = por %p174, %p175
      %p177 = scmp.ne.s32.totalorder %s165, %s166
      %p178 = scmp.eq.s32.totalorder %s30, 1
      %p179 = por %p177, %p178
      %p181 = scmp.ne.s32.totalorder %s166, %s180
      %p182 = scmp.eq.s32.totalorder %s30, 0
      %p183 = por %p181, %p182
      %s185 = sadd.s32 %s184, 1
      %p188 = scmp.eq.s32.totalorder %s24, 1
      %p189 = scmp.ne.s32.totalorder %s184, %s186
      %p190 = scmp.eq.s32.totalorder %s24, 0
      %p191 = por %p189, %p190
      %p192 = scmp.ne.s32.totalorder %s184, %s186
      %p193 = scmp.eq.s32.totalorder %s29, 1
      %p194 = por %p192, %p193
      %p195 = scmp.ne.s32.totalorder %s186, %s187
      %p196 = scmp.eq.s32.totalorder %s29, 0
      %p197 = por %p195, %p196
      %p198 = scmp.ne.s32.totalorder %s186, %s187
      %p199 = scmp.eq.s32.totalorder %s30, 1
      %p200 = por %p198, %p199
      %p202 = scmp.ne.s32.totalorder %s187, %s201
      %p203 = scmp.eq.s32.totalorder %s30, 0
      %p204 = por %p202, %p203
      %s206 = sadd.s32 %s205, 1
      %p209 = scmp.eq.s32.totalorder %s24, 1
      %p210 = scmp.ne.s32.totalorder %s205, %s207
      %p211 = scmp.eq.s32.totalorder %s24, 0
      %p212 = por %p210, %p211
      %p213 = scmp.ne.s32.totalorder %s205, %s207
      %p214 = scmp.eq.s32.totalorder %s29, 1
      %p215 = por %p213, %p214
      %p216 = scmp.ne.s32.totalorder %s207, %s208
      %p217 = scmp.eq.s32.totalorder %s29, 0
      %p218 = por %p216, %p217
      %p219 = scmp.ne.s32.totalorder %s207, %s208
      %p220 = scmp.eq.s32.totalorder %s30, 1
      %p221 = por %p219, %p220
      %p223 = scmp.ne.s32.totalorder %s208, %s222
      %p224 = scmp.eq.s32.totalorder %s30, 0
      %p225 = por %p223, %p224
      %s227 = sadd.s32 %s226, 1
      %p230 = scmp.eq.s32.totalorder %s24, 1
      %p231 = scmp.ne.s32.totalorder %s226, %s228
      %p232 = scmp.eq.s32.totalorder %s24, 0
      %p233 = por %p231, %p232
      %p234 = scmp.ne.s32.totalorder %s226, %s228
      %p235 = scmp.eq.s32.totalorder %s29, 1
      %p236 = por %p234, %p235
      %p237 = scmp.ne.s32.totalorder %s228, %s229
      %p238 = scmp.eq.s32.totalorder %s29, 0
      %p239 = por %p237, %p238
      %p240 = scmp.ne.s32.totalorder %s228, %s229
      %p241 = scmp.eq.s32.totalorder %s30, 1
      %p242 = por %p240, %p241
      %p244 = scmp.ne.s32.totalorder %s229, %s243
      %p245 = scmp.eq.s32.totalorder %s30, 0
      %p246 = por %p244, %p245
      %s248 = sadd.s32 %s247, 1
      %p251 = scmp.eq.s32.totalorder %s24, 1
      %p252 = scmp.ne.s32.totalorder %s247, %s249
      %p253 = scmp.eq.s32.totalorder %s24, 0
      %p254 = por %p252, %p253
      %p255 = scmp.ne.s32.totalorder %s247, %s249
      %p256 = scmp.eq.s32.totalorder %s29, 1
      %p257 = por %p255, %p256
      %p258 = scmp.ne.s32.totalorder %s249, %s250
      %p259 = scmp.eq.s32.totalorder %s29, 0
      %p260 = por %p258, %p259
      %p261 = scmp.ne.s32.totalorder %s249, %s250
      %p262 = scmp.eq.s32.totalorder %s30, 1
      %p263 = por %p261, %p262
      %p265 = scmp.ne.s32.totalorder %s250, %s264
      %p266 = scmp.eq.s32.totalorder %s30, 0
      %p267 = por %p265, %p266
      %s269 = sadd.s32 %s268, 1
      %p272 = scmp.eq.s32.totalorder %s24, 1
      %p273 = scmp.ne.s32.totalorder %s268, %s270
      %p274 = scmp.eq.s32.totalorder %s24, 0
      %p275 = por %p273, %p274
      %p276 = scmp.ne.s32.totalorder %s268, %s270
      %p277 = scmp.eq.s32.totalorder %s29, 1
      %p278 = por %p276, %p277
      %p279 = scmp.ne.s32.totalorder %s270, %s271
      %p280 = scmp.eq.s32.totalorder %s29, 0
      %p281 = por %p279, %p280
      %p282 = scmp.ne.s32.totalorder %s270, %s271
      %p283 = scmp.eq.s32.totalorder %s30, 1
      %p284 = por %p282, %p283
      %p286 = scmp.ne.s32.totalorder %s271, %s285
      %p287 = scmp.eq.s32.totalorder %s30, 0
      %p288 = por %p286, %p287
      %s290 = sadd.s32 %s289, 1
      %p293 = scmp.eq.s32.totalorder %s24, 1
      %p294 = scmp.ne.s32.totalorder %s289, %s291
      %p295 = scmp.eq.s32.totalorder %s24, 0
      %p296 = por %p294, %p295
      %p297 = scmp.ne.s32.totalorder %s289, %s291
      %p298 = scmp.eq.s32.totalorder %s29, 1
      %p299 = por %p297, %p298
      %p300 = scmp.ne.s32.totalorder %s291, %s292
      %p301 = scmp.eq.s32.totalorder %s29, 0
      %p302 = por %p300, %p301
      %p303 = scmp.ne.s32.totalorder %s291, %s292
      %p304 = scmp.eq.s32.totalorder %s30, 1
      %p305 = por %p303, %p304
      %p307 = scmp.ne.s32.totalorder %s292, %s306
      %p308 = scmp.eq.s32.totalorder %s30, 0
      %p309 = por %p307, %p308
      %s311 = sadd.s32 %s310, 1
      %p314 = scmp.eq.s32.totalorder %s24, 1
      %p315 = scmp.ne.s32.totalorder %s310, %s312
      %p316 = scmp.eq.s32.totalorder %s24, 0
      %p317 = por %p315, %p316
      %p318 = scmp.ne.s32.totalorder %s310, %s312
      %p319 = scmp.eq.s32.totalorder %s29, 1
      %p320 = por %p318, %p319
      %p321 = scmp.ne.s32.totalorder %s312, %s313
      %p322 = scmp.eq.s32.totalorder %s29, 0
      %p323 = por %p321, %p322
      %p324 = scmp.ne.s32.totalorder %s312, %s313
      %p325 = scmp.eq.s32.totalorder %s30, 1
      %p326 = por %p324, %p325
      %p328 = scmp.ne.s32.totalorder %s313, %s327
      %p329 = scmp.eq.s32.totalorder %s30, 0
      %p330 = por %p328, %p329
      %s332 = sadd.s32 %s331, 1
      %p335 = scmp.eq.s32.totalorder %s24, 1
      %p336 = scmp.ne.s32.totalorder %s331, %s333
      %p337 = scmp.eq.s32.totalorder %s24, 0
      %p338 = por %p336, %p337
      %p339 = scmp.ne.s32.totalorder %s331, %s333
      %p340 = scmp.eq.s32.totalorder %s29, 1
      %p341 = por %p339, %p340
      %p342 = scmp.ne.s32.totalorder %s333, %s334
      %p343 = scmp.eq.s32.totalorder %s29, 0
      %p344 = por %p342, %p343
      %p345 = scmp.ne.s32.totalorder %s333, %s334
      %p346 = scmp.eq.s32.totalorder %s30, 1
      %p347 = por %p345, %p346
      %p349 = scmp.ne.s32.totalorder %s334, %s348
      %p350 = scmp.eq.s32.totalorder %s30, 0
      %p351 = por %p349, %p350
      %s352 = ssub.s32 %s24, %s31
      %p353 = scmp.eq.s32.totalorder %s352, 0
      %s355 = sadd.s32 %s354, 1
      %s356 = scalar_select %p353, %s354, %s355
      %p359 = pneg %p353
      %p360 = scmp.eq.s32.totalorder %s24, 1
      %p361 = por %p359, %p360
      %p362 = scmp.ne.s32.totalorder %s354, %s357
      %p363 = scmp.eq.s32.totalorder %s24, 0
      %p364 = por %p362, %p363
      %p365 = scmp.ne.s32.totalorder %s354, %s357
      %p366 = scmp.eq.s32.totalorder %s29, 1
      %p367 = por %p365, %p366
      %p368 = scmp.ne.s32.totalorder %s357, %s358
      %p369 = scmp.eq.s32.totalorder %s29, 0
      %p370 = por %p368, %p369
      %p371 = scmp.ne.s32.totalorder %s357, %s358
      %p372 = scmp.eq.s32.totalorder %s30, 1
      %p373 = por %p371, %p372
      %p375 = scmp.ne.s32.totalorder %s358, %s374
      %p376 = scmp.eq.s32.totalorder %s30, 0
      %p377 = por %p375, %p376
      %p378 = scmp.le.s32.totalorder 1, %s24
      %p379 = scmp.lt.s32.totalorder %s24, 3
      %p380 = pnand %p378, %p379
      %p381 = pneg %p380
      // Predicated region
      $region9: #{tpu_custom_call.1} parent=5 // pred_check
        _
      $region10: #{tpu_custom_call.1} parent=5 // pred_check_branch
        %383 = sbr.rel (%p380) target = $region12
      $region11: #{tpu_custom_call.1} parent=5 // pred_region
        %s384 = ssub.s32 %s24, 1
        // Predicated region
        $region13: #{tpu_custom_call.1} parent=11 // pred_check
          %p385 = pneg %p71
        $region14: #{tpu_custom_call.1} parent=11 // pred_check_branch
          %387 = sbr.rel (%p385) target = $region16
        $region15: #{tpu_custom_call.1} parent=11 // pred_region
          _
        $region16: #{tpu_custom_call.1} parent=11 // pred_fallthru
          _
        // Predicated region
        $region17: #{tpu_custom_call.1} parent=11 // pred_check
          %p388 = pneg %p92
        $region18: #{tpu_custom_call.1} parent=11 // pred_check_branch
          %390 = sbr.rel (%p388) target = $region20
        $region19: #{tpu_custom_call.1} parent=11 // pred_region
          _
        $region20: #{tpu_custom_call.1} parent=11 // pred_fallthru
          _
        // Predicated region
        $region21: #{tpu_custom_call.1} parent=11 // pred_check
          %p391 = pneg %p113
        $region22: #{tpu_custom_call.1} parent=11 // pred_check_branch
          %393 = sbr.rel (%p391) target = $region24
        $region23: #{tpu_custom_call.1} parent=11 // pred_region
          _
        $region24: #{tpu_custom_call.1} parent=11 // pred_fallthru
          _
        // Predicated region
        $region25: #{tpu_custom_call.1} parent=11 // pred_check
          %p394 = pneg %p134
        $region26: #{tpu_custom_call.1} parent=11 // pred_check_branch
          %396 = sbr.rel (%p394) target = $region28
        $region27: #{tpu_custom_call.1} parent=11 // pred_region
          _
        $region28: #{tpu_custom_call.1} parent=11 // pred_fallthru
          _
        // Predicated region
        $region29: #{tpu_custom_call.1} parent=11 // pred_check
          %p397 = pneg %p155
        $region30: #{tpu_custom_call.1} parent=11 // pred_check_branch
          %399 = sbr.rel (%p397) target = $region32
        $region31: #{tpu_custom_call.1} parent=11 // pred_region
          _
        $region32: #{tpu_custom_call.1} parent=11 // pred_fallthru
          _
        // Predicated region
        $region33: #{tpu_custom_call.1} parent=11 // pred_check
          %p400 = pneg %p176
        $region34: #{tpu_custom_call.1} parent=11 // pred_check_branch
          %402 = sbr.rel (%p400) target = $region36
        $region35: #{tpu_custom_call.1} parent=11 // pred_region
          _
        $region36: #{tpu_custom_call.1} parent=11 // pred_fallthru
          _
        // Predicated region
        $region37: #{tpu_custom_call.1} parent=11 // pred_check
          %p403 = pneg %p197
        $region38: #{tpu_custom_call.1} parent=11 // pred_check_branch
          %405 = sbr.rel (%p403) target = $region40
        $region39: #{tpu_custom_call.1} parent=11 // pred_region
          _
        $region40: #{tpu_custom_call.1} parent=11 // pred_fallthru
          _
        // Predicated region
        $region41: #{tpu_custom_call.1} parent=11 // pred_check
          %p406 = pneg %p218
        $region42: #{tpu_custom_call.1} parent=11 // pred_check_branch
          %408 = sbr.rel (%p406) target = $region44
        $region43: #{tpu_custom_call.1} parent=11 // pred_region
          _
        $region44: #{tpu_custom_call.1} parent=11 // pred_fallthru
          _
        // Predicated region
        $region45: #{tpu_custom_call.1} parent=11 // pred_check
          %p409 = pneg %p239
        $region46: #{tpu_custom_call.1} parent=11 // pred_check_branch
          %411 = sbr.rel (%p409) target = $region48
        $region47: #{tpu_custom_call.1} parent=11 // pred_region
          _
        $region48: #{tpu_custom_call.1} parent=11 // pred_fallthru
          _
        // Predicated region
        $region49: #{tpu_custom_call.1} parent=11 // pred_check
          %p412 = pneg %p260
        $region50: #{tpu_custom_call.1} parent=11 // pred_check_branch
          %414 = sbr.rel (%p412) target = $region52
        $region51: #{tpu_custom_call.1} parent=11 // pred_region
          _
        $region52: #{tpu_custom_call.1} parent=11 // pred_fallthru
          _
        // Predicated region
        $region53: #{tpu_custom_call.1} parent=11 // pred_check
          %p415 = pneg %p281
        $region54: #{tpu_custom_call.1} parent=11 // pred_check_branch
          %417 = sbr.rel (%p415) target = $region56
        $region55: #{tpu_custom_call.1} parent=11 // pred_region
          _
        $region56: #{tpu_custom_call.1} parent=11 // pred_fallthru
          _
        // Predicated region
        $region57: #{tpu_custom_call.1} parent=11 // pred_check
          %p418 = pneg %p302
        $region58: #{tpu_custom_call.1} parent=11 // pred_check_branch
          %420 = sbr.rel (%p418) target = $region60
        $region59: #{tpu_custom_call.1} parent=11 // pred_region
          _
        $region60: #{tpu_custom_call.1} parent=11 // pred_fallthru
          _
        // Predicated region
        $region61: #{tpu_custom_call.1} parent=11 // pred_check
          %p421 = pneg %p323
        $region62: #{tpu_custom_call.1} parent=11 // pred_check_branch
          %423 = sbr.rel (%p421) target = $region64
        $region63: #{tpu_custom_call.1} parent=11 // pred_region
          _
        $region64: #{tpu_custom_call.1} parent=11 // pred_fallthru
          _
        // Predicated region
        $region65: #{tpu_custom_call.1} parent=11 // pred_check
          %p424 = pneg %p344
        $region66: #{tpu_custom_call.1} parent=11 // pred_check_branch
          %426 = sbr.rel (%p424) target = $region68
        $region67: #{tpu_custom_call.1} parent=11 // pred_region
          _
        $region68: #{tpu_custom_call.1} parent=11 // pred_fallthru
          _
      $region12: #{tpu_custom_call.1} parent=5 // pred_fallthru
        _
      %p427 = scmp.lt.s32.totalorder %s24, 2
      // Predicated region
      $region69: #{tpu_custom_call.1} parent=5 // pred_check
        %p428 = pneg %p427
      $region70: #{tpu_custom_call.1} parent=5 // pred_check_branch
        %430 = sbr.rel (%p428) target = $region72
      $region71: #{tpu_custom_call.1} parent=5 // pred_region
        // Predicated region
        $region73: #{tpu_custom_call.1} parent=71 // pred_check
          %p431 = pneg %p44
        $region74: #{tpu_custom_call.1} parent=71 // pred_check_branch
          %433 = sbr.rel (%p431) target = $region76
        $region75: #{tpu_custom_call.1} parent=71 // pred_region
          %s434 = smul.u32 16, %s24
          %p435 = scmp.lt.s32.totalorder %s434, 31
          %s436 = scalar_select %p435, %s434, 31
          %s437 = smul.addr %s436, 4
          %s438 = scalar_lea.vmem %s0, %s437
          %s439 = smul.u32 16, %s24
        $region76: #{tpu_custom_call.1} parent=71 // pred_fallthru
          _
      $region72: #{tpu_custom_call.1} parent=5 // pred_fallthru
        _
      %p440 = scmp.le.s32.totalorder 1, %s24
      %p441 = scmp.lt.s32.totalorder %s24, 3
      %p442 = pnand %p440, %p441
      %p443 = pneg %p442
      // Predicated region
      $region77: #{tpu_custom_call.1} parent=5 // pred_check
        _
      $region78: #{tpu_custom_call.1} parent=5 // pred_check_branch
        %445 = sbr.rel (%p442) target = $region80
      $region79: #{tpu_custom_call.1} parent=5 // pred_region
        %s446 = ssub.s32 %s24, 1
        %s447 = smul.u32 16, %s29
        %p448 = scmp.lt.s32.totalorder %s447, 31
        %s449 = scalar_select %p448, %s447, 31
        %s450 = smul.addr %s449, 4
        %s451 = scalar_lea.vmem %s0, %s450
        %p452 = pneg %p50
        %p453 = pneg %p47
        %p454 = pneg %p71
        %p455 = pneg %p68
        %p456 = pneg %p92
        %p457 = pneg %p89
        %p458 = pneg %p113
        %p459 = pneg %p110
        %p460 = pneg %p134
        %p461 = pneg %p131
        %p462 = pneg %p155
        %p463 = pneg %p152
        %p464 = pneg %p176
        %p465 = pneg %p173
        %p466 = pneg %p197
        %p467 = pneg %p194
        %p468 = pneg %p218
        %p469 = pneg %p215
        %p470 = pneg %p239
        %p471 = pneg %p236
        %p472 = pneg %p260
        %p473 = pneg %p257
        %p474 = pneg %p281
        %p475 = pneg %p278
        %p476 = pneg %p302
        %p477 = pneg %p299
        %p478 = pneg %p323
        %p479 = pneg %p320
        %p480 = pneg %p344
        %p481 = pneg %p341
        %p482 = pneg %p370
        %p483 = pneg %p367
        %s484 = sand.u32 %s357, 1
        %s485 = scalar_lea.sflag [#allocation3], %s484
        %s486 = sand.u32 %s357, 1
        %s487 = smul.addr %s486, 8
        %s488 = scalar_lea.vmem [#allocation2], %s487
        %s489 = smul.u32 16, %s29
        %p490 = scmp.lt.s32.totalorder %s489, 31
        %s491 = scalar_select %p490, %s489, 31
        %s492 = smul.addr %s491, 4
        %s493 = scalar_lea.vmem %s0, %s492
        %s494 = smul.u32 16, %s29
        %v496 = vld [vmem:[%s493] sm:$0xf]
        %v497 = vld [vmem:[%s493 + $0x4] sm:$0xf]
        %v498 = vld [vmem:[%s493 + $0x8] sm:$0xf]
        %v499 = vld [vmem:[%s493 + $0xc] sm:$0xf]
        %v500 = vld [vmem:[%s493 + $0x10] sm:$0xf]
        %v501 = vld [vmem:[%s493 + $0x14] sm:$0xf]
        %v502 = vld [vmem:[%s493 + $0x18] sm:$0xf]
        %v503 = vld [vmem:[%s493 + $0x1c] sm:$0xf]
        %v504 = vld [vmem:[%s493 + $0x20] sm:$0xf]
        %v505 = vld [vmem:[%s493 + $0x24] sm:$0xf]
        %v506 = vld [vmem:[%s493 + $0x28] sm:$0xf]
        %v507 = vld [vmem:[%s493 + $0x2c] sm:$0xf]
        %v508 = vld [vmem:[%s493 + $0x30] sm:$0xf]
        %v509 = vld [vmem:[%s493 + $0x34] sm:$0xf]
        %v510 = vld [vmem:[%s493 + $0x38] sm:$0xf]
        %v511 = vld [vmem:[%s493 + $0x3c] sm:$0xf]
        %v512 = vld [vmem:[%s13] sm:$0xf]
        %v513 = vld [vmem:[%s14] sm:$0xf]
        %v514 = vld [vmem:[%s14 + $0x4] sm:$0xf]
        %v515 = vld [vmem:[%s14 + $0x8] sm:$0xf]
        %v516 = vld [vmem:[%s14 + $0xc] sm:$0xf]
        %v517 = vld [vmem:[%s14 + $0x10] sm:$0xf]
        %v518 = vld [vmem:[%s14 + $0x14] sm:$0xf]
        %v519 = vld [vmem:[%s14 + $0x18] sm:$0xf]
        %v520 = vld [vmem:[%s14 + $0x1c] sm:$0xf]
        %v521 = vld [vmem:[%s14 + $0x20] sm:$0xf]
        %v522 = vld [vmem:[%s14 + $0x24] sm:$0xf]
        %v523 = vld [vmem:[%s14 + $0x28] sm:$0xf]
        %v524 = vld [vmem:[%s14 + $0x2c] sm:$0xf]
        %v525 = vld [vmem:[%s14 + $0x30] sm:$0xf]
        %v526 = vld [vmem:[%s14 + $0x34] sm:$0xf]
        %v527 = vld [vmem:[%s14 + $0x38] sm:$0xf]
        %v528 = vld [vmem:[%s14 + $0x3c] sm:$0xf]
        %v529 = vld [vmem:[%s11] sm:$0xf]
        %v530 = vld [vmem:[%s11 + $0x4] sm:$0xf]
        %v531 = vld [vmem:[%s11 + $0x8] sm:$0xf]
        %v532 = vld [vmem:[%s11 + $0xc] sm:$0xf]
        %v533 = vld [vmem:[%s12] sm:$0x3]
        %v550 = vunpack.c.l.b16 %v496
        %v551 = vunpack.c.l.b16 %v497
        %v552 = vunpack.c.l.b16 %v498
        %v553 = vunpack.c.l.b16 %v499
        %v554 = vunpack.c.l.b16 %v500
        %v555 = vunpack.c.l.b16 %v501
        %v556 = vunpack.c.l.b16 %v502
        %v557 = vunpack.c.l.b16 %v503
        %v558 = vunpack.c.l.b16 %v504
        %v559 = vunpack.c.l.b16 %v505
        %v560 = vunpack.c.l.b16 %v506
        %v561 = vunpack.c.l.b16 %v507
        %v562 = vunpack.c.l.b16 %v508
        %v563 = vunpack.c.l.b16 %v509
        %v564 = vunpack.c.l.b16 %v510
        %v565 = vunpack.c.l.b16 %v511
        %v566 = vpack.c.b16 %v551, %v550
        %v567 = vpack.c.b16 %v553, %v552
        %v568 = vpack.c.b16 %v555, %v554
        %v569 = vpack.c.b16 %v557, %v556
        %v570 = vpack.c.b16 %v559, %v558
        %v571 = vpack.c.b16 %v561, %v560
        %v572 = vpack.c.b16 %v563, %v562
        %v573 = vpack.c.b16 %v565, %v564
        %582 = vmatprep.subr.bf16.mxu0 0
        %583 = vmatpush1.bf16.msra.mxu0 %v573
        %584 = vmatprep.subr.bf16.mxu0 0
        %585 = vmatpush1.bf16.msra.mxu0 %v572
        %586 = vmatprep.subr.bf16.mxu0 0
        %587 = vmatpush1.bf16.msra.mxu0 %v571
        %588 = vmatprep.subr.bf16.mxu0 0
        %589 = vmatpush1.bf16.msra.mxu0 %v570
        %590 = vmatprep.subr.bf16.mxu0 0
        %591 = vmatpush1.bf16.msra.mxu0 %v569
        %592 = vmatprep.subr.bf16.mxu0 0
        %593 = vmatpush1.bf16.msra.mxu0 %v568
        %594 = vmatprep.subr.bf16.mxu0 0
        %595 = vmatpush1.bf16.msra.mxu0 %v567
        %596 = vmatprep.subr.bf16.mxu0 0
        %597 = vmatpush1.bf16.msra.mxu0 %v566
        %598 = vmatprep.subr.bf16.mxu0 0
        %599 = vmatpush2.bf16.msra.mxu0 0
        %600 = vmatprep.subr.bf16.mxu0 0
        %601 = vmatpush2.bf16.msra.mxu0 0
        %602 = vmatprep.subr.bf16.mxu0 0
        %603 = vmatpush2.bf16.msra.mxu0 0
        %604 = vmatprep.subr.bf16.mxu0 0
        %605 = vmatpush2.bf16.msra.mxu0 0
        %606 = vmatprep.subr.bf16.mxu0 0
        %607 = vmatpush2.bf16.msra.mxu0 0
        %608 = vmatprep.subr.bf16.mxu0 0
        %609 = vmatpush2.bf16.msra.mxu0 0
        %610 = vmatprep.subr.bf16.mxu0 0
        %611 = vmatpush2.bf16.msra.mxu0 0
        %612 = vmatprep.subr.bf16.mxu0 0
        %613 = vmatpush2.bf16.msra.mxu0 0
        %614 = vmatprep.mubr.bf16.mxu0 0
        %615 = vmatmul.mubr.bf16.gmra.mxu0 %v512
        %v616 = vpop.f32.mrf.mxu0
        %v617 = vadd.f32 0.0, %v616
        %v618 = vpop.f32.mrf.mxu0
        %v619 = vpop.f32.mrf.mxu0
        %v620 = vpop.f32.mrf.mxu0
        %621 = vdwg.mxu0
        %v622 = vmul.f32 %v617, 0.0625
        %v623 = vld [vmem:[%s1] sm:$0x1]
        %v625 = vlaneseq
        %v626 = vshrl.u32 %v625, 7
        %v627 = vsub.s32 0, %v626
        %v628 = vrot.slane %v623, %v627
        %v630 = vadd.f32 %v622, %v628
        %v631 = vpack.c.bf16 %v630, %v630
        %v632 = vld [vmem:[%s3] sm:$0xf]
        %v633 = vld [vmem:[%s3 + $0x4] sm:$0xf]
        %v634 = vld [vmem:[%s3 + $0x8] sm:$0xf]
        %v635 = vld [vmem:[%s3 + $0xc] sm:$0xf]
        %v636 = vld [vmem:[%s7] sm:$0x1]
        %v638 = vlaneseq
        %v639 = vshrl.u32 %v638, 7
        %v640 = vsub.s32 0, %v639
        %v641 = vrot.slane %v636, %v640
        %v647 = vunpack.c.l.b16 %v632
        %v648 = vunpack.c.l.b16 %v633
        %v649 = vunpack.c.l.b16 %v634
        %v650 = vunpack.c.l.b16 %v635
        %v651 = vpack.c.b16 %v648, %v647
        %v652 = vpack.c.b16 %v650, %v649
        %vm655 = vcmask 261120
        %v657 = vsel %vm655, %v631, 0
        %659 = vmatprep.subr.bf16.mxu0 0
        %660 = vmatpush1.bf16.msra.mxu0 0
        %661 = vmatprep.subr.bf16.mxu0 0
        %662 = vmatpush1.bf16.msra.mxu0 0
        %663 = vmatprep.subr.bf16.mxu0 0
        %664 = vmatpush1.bf16.msra.mxu0 0
        %665 = vmatprep.subr.bf16.mxu0 0
        %666 = vmatpush1.bf16.msra.mxu0 0
        %667 = vmatprep.subr.bf16.mxu0 0
        %668 = vmatpush1.bf16.msra.mxu0 0
        %669 = vmatprep.subr.bf16.mxu0 0
        %670 = vmatpush1.bf16.msra.mxu0 0
        %671 = vmatprep.subr.bf16.mxu0 0
        %672 = vmatpush1.bf16.msra.mxu0 %v652
        %673 = vmatprep.subr.bf16.mxu0 0
        %674 = vmatpush1.bf16.msra.mxu0 %v651
        %675 = vmatprep.subr.bf16.mxu0 0
        %676 = vmatpush2.bf16.msra.mxu0 0
        %677 = vmatprep.subr.bf16.mxu0 0
        %678 = vmatpush2.bf16.msra.mxu0 0
        %679 = vmatprep.subr.bf16.mxu0 0
        %680 = vmatpush2.bf16.msra.mxu0 0
        %681 = vmatprep.subr.bf16.mxu0 0
        %682 = vmatpush2.bf16.msra.mxu0 0
        %683 = vmatprep.subr.bf16.mxu0 0
        %684 = vmatpush2.bf16.msra.mxu0 0
        %685 = vmatprep.subr.bf16.mxu0 0
        %686 = vmatpush2.bf16.msra.mxu0 0
        %687 = vmatprep.subr.bf16.mxu0 0
        %688 = vmatpush2.bf16.msra.mxu0 0
        %689 = vmatprep.subr.bf16.mxu0 0
        %690 = vmatpush2.bf16.msra.mxu0 0
        %691 = vmatprep.mubr.bf16.mxu0 0
        %692 = vmatmul.mubr.bf16.gmra.mxu0 %v657
        %v693 = vpop.f32.mrf.mxu0
        %v694 = vadd.f32 %v641, %v693
        %v695 = vpop.f32.mrf.mxu0
        %v696 = vpop.f32.mrf.mxu0
        %v697 = vpop.f32.mrf.mxu0
        %698 = vdwg.mxu0
        %v699 = vld [vmem:[%s4] sm:$0xf]
        %v700 = vld [vmem:[%s4 + $0x4] sm:$0xf]
        %v701 = vld [vmem:[%s4 + $0x8] sm:$0xf]
        %v702 = vld [vmem:[%s4 + $0xc] sm:$0xf]
        %v703 = vld [vmem:[%s8] sm:$0x1]
        %v705 = vlaneseq
        %v706 = vshrl.u32 %v705, 7
        %v707 = vsub.s32 0, %v706
        %v708 = vrot.slane %v703, %v707
        %v714 = vunpack.c.l.b16 %v699
        %v715 = vunpack.c.l.b16 %v700
        %v716 = vunpack.c.l.b16 %v701
        %v717 = vunpack.c.l.b16 %v702
        %v718 = vpack.c.b16 %v715, %v714
        %v719 = vpack.c.b16 %v717, %v716
        %722 = vmatprep.subr.bf16.mxu0 0
        %723 = vmatpush1.bf16.msra.mxu0 0
        %724 = vmatprep.subr.bf16.mxu0 0
        %725 = vmatpush1.bf16.msra.mxu0 0
        %726 = vmatprep.subr.bf16.mxu0 0
        %727 = vmatpush1.bf16.msra.mxu0 0
        %728 = vmatprep.subr.bf16.mxu0 0
        %729 = vmatpush1.bf16.msra.mxu0 0
        %730 = vmatprep.subr.bf16.mxu0 0
        %731 = vmatpush1.bf16.msra.mxu0 0
        %732 = vmatprep.subr.bf16.mxu0 0
        %733 = vmatpush1.bf16.msra.mxu0 0
        %734 = vmatprep.subr.bf16.mxu0 0
        %735 = vmatpush1.bf16.msra.mxu0 %v719
        %736 = vmatprep.subr.bf16.mxu0 0
        %737 = vmatpush1.bf16.msra.mxu0 %v718
        %738 = vmatprep.subr.bf16.mxu0 0
        %739 = vmatpush2.bf16.msra.mxu0 0
        %740 = vmatprep.subr.bf16.mxu0 0
        %741 = vmatpush2.bf16.msra.mxu0 0
        %742 = vmatprep.subr.bf16.mxu0 0
        %743 = vmatpush2.bf16.msra.mxu0 0
        %744 = vmatprep.subr.bf16.mxu0 0
        %745 = vmatpush2.bf16.msra.mxu0 0
        %746 = vmatprep.subr.bf16.mxu0 0
        %747 = vmatpush2.bf16.msra.mxu0 0
        %748 = vmatprep.subr.bf16.mxu0 0
        %749 = vmatpush2.bf16.msra.mxu0 0
        %750 = vmatprep.subr.bf16.mxu0 0
        %751 = vmatpush2.bf16.msra.mxu0 0
        %752 = vmatprep.subr.bf16.mxu0 0
        %753 = vmatpush2.bf16.msra.mxu0 0
        %754 = vmatprep.mubr.bf16.mxu0 0
        %755 = vmatmul.mubr.bf16.gmra.mxu0 %v657
        %v756 = vpop.f32.mrf.mxu0
        %v757 = vadd.f32 %v708, %v756
        %v758 = vpop.f32.mrf.mxu0
        %v759 = vpop.f32.mrf.mxu0
        %v760 = vpop.f32.mrf.mxu0
        %761 = vdwg.mxu0
        %v762 = vld [vmem:[%s5] sm:$0xf]
        %v763 = vld [vmem:[%s5 + $0x4] sm:$0xf]
        %v764 = vld [vmem:[%s5 + $0x8] sm:$0xf]
        %v765 = vld [vmem:[%s5 + $0xc] sm:$0xf]
        %v766 = vld [vmem:[%s9] sm:$0x1]
        %v768 = vlaneseq
        %v769 = vshrl.u32 %v768, 7
        %v770 = vsub.s32 0, %v769
        %v771 = vrot.slane %v766, %v770
        %v777 = vunpack.c.l.b16 %v762
        %v778 = vunpack.c.l.b16 %v763
        %v779 = vunpack.c.l.b16 %v764
        %v780 = vunpack.c.l.b16 %v765
        %v781 = vpack.c.b16 %v778, %v777
        %v782 = vpack.c.b16 %v780, %v779
        %785 = vmatprep.subr.bf16.mxu0 0
        %786 = vmatpush1.bf16.msra.mxu0 0
        %787 = vmatprep.subr.bf16.mxu0 0
        %788 = vmatpush1.bf16.msra.mxu0 0
        %789 = vmatprep.subr.bf16.mxu0 0
        %790 = vmatpush1.bf16.msra.mxu0 0
        %791 = vmatprep.subr.bf16.mxu0 0
        %792 = vmatpush1.bf16.msra.mxu0 0
        %793 = vmatprep.subr.bf16.mxu0 0
        %794 = vmatpush1.bf16.msra.mxu0 0
        %795 = vmatprep.subr.bf16.mxu0 0
        %796 = vmatpush1.bf16.msra.mxu0 0
        %797 = vmatprep.subr.bf16.mxu0 0
        %798 = vmatpush1.bf16.msra.mxu0 %v782
        %799 = vmatprep.subr.bf16.mxu0 0
        %800 = vmatpush1.bf16.msra.mxu0 %v781
        %801 = vmatprep.subr.bf16.mxu0 0
        %802 = vmatpush2.bf16.msra.mxu0 0
        %803 = vmatprep.subr.bf16.mxu0 0
        %804 = vmatpush2.bf16.msra.mxu0 0
        %805 = vmatprep.subr.bf16.mxu0 0
        %806 = vmatpush2.bf16.msra.mxu0 0
        %807 = vmatprep.subr.bf16.mxu0 0
        %808 = vmatpush2.bf16.msra.mxu0 0
        %809 = vmatprep.subr.bf16.mxu0 0
        %810 = vmatpush2.bf16.msra.mxu0 0
        %811 = vmatprep.subr.bf16.mxu0 0
        %812 = vmatpush2.bf16.msra.mxu0 0
        %813 = vmatprep.subr.bf16.mxu0 0
        %814 = vmatpush2.bf16.msra.mxu0 0
        %815 = vmatprep.subr.bf16.mxu0 0
        %816 = vmatpush2.bf16.msra.mxu0 0
        %817 = vmatprep.mubr.bf16.mxu0 0
        %818 = vmatmul.mubr.bf16.gmra.mxu0 %v657
        %v819 = vpop.f32.mrf.mxu0
        %v820 = vadd.f32 %v771, %v819
        %v821 = vpop.f32.mrf.mxu0
        %v822 = vpop.f32.mrf.mxu0
        %v823 = vpop.f32.mrf.mxu0
        %824 = vdwg.mxu0
        %v825 = vpack.c.bf16 %v694, %v694
        %v826 = vld [vmem:[%s2] sm:$0xf]
        %v827 = vld [vmem:[%s2 + $0x4] sm:$0xf]
        %v828 = vld [vmem:[%s2 + $0x8] sm:$0xf]
        %v829 = vld [vmem:[%s2 + $0xc] sm:$0xf]
        %v830 = vld [vmem:[%s2 + $0x10] sm:$0xf]
        %v831 = vld [vmem:[%s2 + $0x14] sm:$0xf]
        %v832 = vld [vmem:[%s2 + $0x18] sm:$0xf]
        %v833 = vld [vmem:[%s2 + $0x1c] sm:$0xf]
        %v834 = vld [vmem:[%s2 + $0x20] sm:$0xf]
        %v835 = vld [vmem:[%s2 + $0x24] sm:$0xf]
        %v836 = vld [vmem:[%s2 + $0x28] sm:$0xf]
        %v837 = vld [vmem:[%s2 + $0x2c] sm:$0xf]
        %v838 = vld [vmem:[%s2 + $0x30] sm:$0xf]
        %v839 = vld [vmem:[%s2 + $0x34] sm:$0xf]
        %v840 = vld [vmem:[%s2 + $0x38] sm:$0xf]
        %v841 = vld [vmem:[%s2 + $0x3c] sm:$0xf]
        %v842 = vadd.bf16 %v496, %v826
        %v843 = vadd.bf16 %v497, %v827
        %v844 = vadd.bf16 %v498, %v828
        %v845 = vadd.bf16 %v499, %v829
        %v846 = vadd.bf16 %v500, %v830
        %v847 = vadd.bf16 %v501, %v831
        %v848 = vadd.bf16 %v502, %v832
        %v849 = vadd.bf16 %v503, %v833
        %v850 = vadd.bf16 %v504, %v834
        %v851 = vadd.bf16 %v505, %v835
        %v852 = vadd.bf16 %v506, %v836
        %v853 = vadd.bf16 %v507, %v837
        %v854 = vadd.bf16 %v508, %v838
        %v855 = vadd.bf16 %v509, %v839
        %v856 = vadd.bf16 %v510, %v840
        %v857 = vadd.bf16 %v511, %v841
        %v874 = vunpack.c.l.b16 %v842
        %v875 = vunpack.c.l.b16 %v843
        %v876 = vunpack.c.l.b16 %v844
        %v877 = vunpack.c.l.b16 %v845
        %v878 = vunpack.c.l.b16 %v846
        %v879 = vunpack.c.l.b16 %v847
        %v880 = vunpack.c.l.b16 %v848
        %v881 = vunpack.c.l.b16 %v849
        %v882 = vunpack.c.l.b16 %v850
        %v883 = vunpack.c.l.b16 %v851
        %v884 = vunpack.c.l.b16 %v852
        %v885 = vunpack.c.l.b16 %v853
        %v886 = vunpack.c.l.b16 %v854
        %v887 = vunpack.c.l.b16 %v855
        %v888 = vunpack.c.l.b16 %v856
        %v889 = vunpack.c.l.b16 %v857
        %v890 = vpack.c.b16 %v875, %v874
        %v891 = vpack.c.b16 %v877, %v876
        %v892 = vpack.c.b16 %v879, %v878
        %v893 = vpack.c.b16 %v881, %v880
        %v894 = vpack.c.b16 %v883, %v882
        %v895 = vpack.c.b16 %v885, %v884
        %v896 = vpack.c.b16 %v887, %v886
        %v897 = vpack.c.b16 %v889, %v888
        %v899 = vsel %vm655, %v890, 0
        %v902 = vsel %vm655, %v891, 0
        %v905 = vsel %vm655, %v892, 0
        %v908 = vsel %vm655, %v893, 0
        %v911 = vsel %vm655, %v894, 0
        %v914 = vsel %vm655, %v895, 0
        %v917 = vsel %vm655, %v896, 0
        %v920 = vsel %vm655, %v897, 0
        %922 = vmatprep.subr.bf16.mxu0 0
        %923 = vmatpush1.bf16.msra.mxu0 0
        %924 = vmatprep.subr.bf16.mxu0 0
        %925 = vmatpush1.bf16.msra.mxu0 0
        %926 = vmatprep.subr.bf16.mxu0 0
        %927 = vmatpush1.bf16.msra.mxu0 0
        %928 = vmatprep.subr.bf16.mxu0 0
        %929 = vmatpush1.bf16.msra.mxu0 0
        %930 = vmatprep.subr.bf16.mxu0 0
        %931 = vmatpush1.bf16.msra.mxu0 0
        %932 = vmatprep.subr.bf16.mxu0 0
        %933 = vmatpush1.bf16.msra.mxu0 0
        %934 = vmatprep.subr.bf16.mxu0 0
        %935 = vmatpush1.bf16.msra.mxu0 %v719
        %936 = vmatprep.subr.bf16.mxu0 0
        %937 = vmatpush1.bf16.msra.mxu0 %v718
        %938 = vmatprep.subr.bf16.mxu0 0
        %939 = vmatpush2.bf16.msra.mxu0 0
        %940 = vmatprep.subr.bf16.mxu0 0
        %941 = vmatpush2.bf16.msra.mxu0 0
        %942 = vmatprep.subr.bf16.mxu0 0
        %943 = vmatpush2.bf16.msra.mxu0 0
        %944 = vmatprep.subr.bf16.mxu0 0
        %945 = vmatpush2.bf16.msra.mxu0 0
        %946 = vmatprep.subr.bf16.mxu0 0
        %947 = vmatpush2.bf16.msra.mxu0 0
        %948 = vmatprep.subr.bf16.mxu0 0
        %949 = vmatpush2.bf16.msra.mxu0 0
        %950 = vmatprep.subr.bf16.mxu0 0
        %951 = vmatpush2.bf16.msra.mxu0 0
        %952 = vmatprep.subr.bf16.mxu0 0
        %953 = vmatpush2.bf16.msra.mxu0 0
        %954 = vmatprep.mubr.bf16.mxu0 0
        %955 = vmatmul.mubr.bf16.gmra.mxu0 %v899
        %v956 = vpop.f32.mrf.mxu0
        %v957 = vadd.f32 %v708, %v956
        %v958 = vpop.f32.mrf.mxu0
        %v959 = vpop.f32.mrf.mxu0
        %v960 = vadd.f32 %v708, %v959
        %v961 = vpop.f32.mrf.mxu0
        %962 = vmatprep.mubr.bf16.mxu0 0
        %963 = vmatmul.mubr.bf16.gmra.mxu0 %v902
        %v964 = vpop.f32.mrf.mxu0
        %v965 = vadd.f32 %v708, %v964
        %v966 = vpop.f32.mrf.mxu0
        %v967 = vpop.f32.mrf.mxu0
        %v968 = vadd.f32 %v708, %v967
        %v969 = vpop.f32.mrf.mxu0
        %970 = vmatprep.mubr.bf16.mxu0 0
        %971 = vmatmul.mubr.bf16.gmra.mxu0 %v905
        %v972 = vpop.f32.mrf.mxu0
        %v973 = vadd.f32 %v708, %v972
        %v974 = vpop.f32.mrf.mxu0
        %v975 = vpop.f32.mrf.mxu0
        %v976 = vadd.f32 %v708, %v975
        %v977 = vpop.f32.mrf.mxu0
        %978 = vmatprep.mubr.bf16.mxu0 0
        %979 = vmatmul.mubr.bf16.gmra.mxu0 %v908
        %v980 = vpop.f32.mrf.mxu0
        %v981 = vadd.f32 %v708, %v980
        %v982 = vpop.f32.mrf.mxu0
        %v983 = vpop.f32.mrf.mxu0
        %v984 = vadd.f32 %v708, %v983
        %v985 = vpop.f32.mrf.mxu0
        %986 = vmatprep.mubr.bf16.mxu0 0
        %987 = vmatmul.mubr.bf16.gmra.mxu0 %v911
        %v988 = vpop.f32.mrf.mxu0
        %v989 = vadd.f32 %v708, %v988
        %v990 = vpop.f32.mrf.mxu0
        %v991 = vpop.f32.mrf.mxu0
        %v992 = vadd.f32 %v708, %v991
        %v993 = vpop.f32.mrf.mxu0
        %994 = vmatprep.mubr.bf16.mxu0 0
        %995 = vmatmul.mubr.bf16.gmra.mxu0 %v914
        %v996 = vpop.f32.mrf.mxu0
        %v997 = vadd.f32 %v708, %v996
        %v998 = vpop.f32.mrf.mxu0
        %v999 = vpop.f32.mrf.mxu0
        %v1000 = vadd.f32 %v708, %v999
        %v1001 = vpop.f32.mrf.mxu0
        %1002 = vmatprep.mubr.bf16.mxu0 0
        %1003 = vmatmul.mubr.bf16.gmra.mxu0 %v917
        %v1004 = vpop.f32.mrf.mxu0
        %v1005 = vadd.f32 %v708, %v1004
        %v1006 = vpop.f32.mrf.mxu0
        %v1007 = vpop.f32.mrf.mxu0
        %v1008 = vadd.f32 %v708, %v1007
        %v1009 = vpop.f32.mrf.mxu0
        %1010 = vmatprep.mubr.bf16.mxu0 0
        %1011 = vmatmul.mubr.bf16.gmra.mxu0 %v920
        %v1012 = vpop.f32.mrf.mxu0
        %v1013 = vadd.f32 %v708, %v1012
        %v1014 = vpop.f32.mrf.mxu0
        %v1015 = vpop.f32.mrf.mxu0
        %v1016 = vadd.f32 %v708, %v1015
        %v1017 = vpop.f32.mrf.mxu0
        %1018 = vdwg.mxu0
        %1019 = vmatprep.subr.bf16.mxu0 0
        %1020 = vmatpush1.bf16.msra.mxu0 0
        %1021 = vmatprep.subr.bf16.mxu0 0
        %1022 = vmatpush1.bf16.msra.mxu0 0
        %1023 = vmatprep.subr.bf16.mxu0 0
        %1024 = vmatpush1.bf16.msra.mxu0 0
        %1025 = vmatprep.subr.bf16.mxu0 0
        %1026 = vmatpush1.bf16.msra.mxu0 0
        %1027 = vmatprep.subr.bf16.mxu0 0
        %1028 = vmatpush1.bf16.msra.mxu0 0
        %1029 = vmatprep.subr.bf16.mxu0 0
        %1030 = vmatpush1.bf16.msra.mxu0 0
        %1031 = vmatprep.subr.bf16.mxu0 0
        %1032 = vmatpush1.bf16.msra.mxu0 %v782
        %1033 = vmatprep.subr.bf16.mxu0 0
        %1034 = vmatpush1.bf16.msra.mxu0 %v781
        %1035 = vmatprep.subr.bf16.mxu0 0
        %1036 = vmatpush2.bf16.msra.mxu0 0
        %1037 = vmatprep.subr.bf16.mxu0 0
        %1038 = vmatpush2.bf16.msra.mxu0 0
        %1039 = vmatprep.subr.bf16.mxu0 0
        %1040 = vmatpush2.bf16.msra.mxu0 0
        %1041 = vmatprep.subr.bf16.mxu0 0
        %1042 = vmatpush2.bf16.msra.mxu0 0
        %1043 = vmatprep.subr.bf16.mxu0 0
        %1044 = vmatpush2.bf16.msra.mxu0 0
        %1045 = vmatprep.subr.bf16.mxu0 0
        %1046 = vmatpush2.bf16.msra.mxu0 0
        %1047 = vmatprep.subr.bf16.mxu0 0
        %1048 = vmatpush2.bf16.msra.mxu0 0
        %1049 = vmatprep.subr.bf16.mxu0 0
        %1050 = vmatpush2.bf16.msra.mxu0 0
        %1051 = vmatprep.mubr.bf16.mxu0 0
        %1052 = vmatmul.mubr.bf16.gmra.mxu0 %v899
        %v1053 = vpop.f32.mrf.mxu0
        %v1054 = vadd.f32 %v771, %v1053
        %v1055 = vpop.f32.mrf.mxu0
        %v1056 = vpop.f32.mrf.mxu0
        %v1057 = vadd.f32 %v771, %v1056
        %v1058 = vpop.f32.mrf.mxu0
        %1059 = vmatprep.mubr.bf16.mxu0 0
        %1060 = vmatmul.mubr.bf16.gmra.mxu0 %v902
        %v1061 = vpop.f32.mrf.mxu0
        %v1062 = vadd.f32 %v771, %v1061
        %v1063 = vpop.f32.mrf.mxu0
        %v1064 = vpop.f32.mrf.mxu0
        %v1065 = vadd.f32 %v771, %v1064
        %v1066 = vpop.f32.mrf.mxu0
        %1067 = vmatprep.mubr.bf16.mxu0 0
        %1068 = vmatmul.mubr.bf16.gmra.mxu0 %v905
        %v1069 = vpop.f32.mrf.mxu0
        %v1070 = vadd.f32 %v771, %v1069
        %v1071 = vpop.f32.mrf.mxu0
        %v1072 = vpop.f32.mrf.mxu0
        %v1073 = vadd.f32 %v771, %v1072
        %v1074 = vpop.f32.mrf.mxu0
        %1075 = vmatprep.mubr.bf16.mxu0 0
        %1076 = vmatmul.mubr.bf16.gmra.mxu0 %v908
        %v1077 = vpop.f32.mrf.mxu0
        %v1078 = vadd.f32 %v771, %v1077
        %v1079 = vpop.f32.mrf.mxu0
        %v1080 = vpop.f32.mrf.mxu0
        %v1081 = vadd.f32 %v771, %v1080
        %v1082 = vpop.f32.mrf.mxu0
        %1083 = vmatprep.mubr.bf16.mxu0 0
        %1084 = vmatmul.mubr.bf16.gmra.mxu0 %v911
        %v1085 = vpop.f32.mrf.mxu0
        %v1086 = vadd.f32 %v771, %v1085
        %v1087 = vpop.f32.mrf.mxu0
        %v1088 = vpop.f32.mrf.mxu0
        %v1089 = vadd.f32 %v771, %v1088
        %v1090 = vpop.f32.mrf.mxu0
        %1091 = vmatprep.mubr.bf16.mxu0 0
        %1092 = vmatmul.mubr.bf16.gmra.mxu0 %v914
        %v1093 = vpop.f32.mrf.mxu0
        %v1094 = vadd.f32 %v771, %v1093
        %v1095 = vpop.f32.mrf.mxu0
        %v1096 = vpop.f32.mrf.mxu0
        %v1097 = vadd.f32 %v771, %v1096
        %v1098 = vpop.f32.mrf.mxu0
        %1099 = vmatprep.mubr.bf16.mxu0 0
        %1100 = vmatmul.mubr.bf16.gmra.mxu0 %v917
        %v1101 = vpop.f32.mrf.mxu0
        %v1102 = vadd.f32 %v771, %v1101
        %v1103 = vpop.f32.mrf.mxu0
        %v1104 = vpop.f32.mrf.mxu0
        %v1105 = vadd.f32 %v771, %v1104
        %v1106 = vpop.f32.mrf.mxu0
        %1107 = vmatprep.mubr.bf16.mxu0 0
        %1108 = vmatmul.mubr.bf16.gmra.mxu0 %v920
        %v1109 = vpop.f32.mrf.mxu0
        %v1110 = vadd.f32 %v771, %v1109
        %v1111 = vpop.f32.mrf.mxu0
        %v1112 = vpop.f32.mrf.mxu0
        %v1113 = vadd.f32 %v771, %v1112
        %v1114 = vpop.f32.mrf.mxu0
        %1115 = vdwg.mxu0
        %v1132 = vunpack.c.l.b16 %v513
        %v1133 = vunpack.c.l.b16 %v514
        %v1134 = vunpack.c.l.b16 %v515
        %v1135 = vunpack.c.l.b16 %v516
        %v1136 = vunpack.c.l.b16 %v517
        %v1137 = vunpack.c.l.b16 %v518
        %v1138 = vunpack.c.l.b16 %v519
        %v1139 = vunpack.c.l.b16 %v520
        %v1140 = vunpack.c.l.b16 %v521
        %v1141 = vunpack.c.l.b16 %v522
        %v1142 = vunpack.c.l.b16 %v523
        %v1143 = vunpack.c.l.b16 %v524
        %v1144 = vunpack.c.l.b16 %v525
        %v1145 = vunpack.c.l.b16 %v526
        %v1146 = vunpack.c.l.b16 %v527
        %v1147 = vunpack.c.l.b16 %v528
        %v1148 = vpack.c.b16 %v1133, %v1132
        %v1149 = vpack.c.b16 %v1135, %v1134
        %v1150 = vpack.c.b16 %v1137, %v1136
        %v1151 = vpack.c.b16 %v1139, %v1138
        %v1152 = vpack.c.b16 %v1141, %v1140
        %v1153 = vpack.c.b16 %v1143, %v1142
        %v1154 = vpack.c.b16 %v1145, %v1144
        %v1155 = vpack.c.b16 %v1147, %v1146
        %vm1156 = vcmask 64512
        %v1158 = vsel %vm1156, %v1148, 0
        %v1161 = vsel %vm1156, %v1149, 0
        %v1164 = vsel %vm1156, %v1150, 0
        %v1167 = vsel %vm1156, %v1151, 0
        %v1170 = vsel %vm1156, %v1152, 0
        %v1173 = vsel %vm1156, %v1153, 0
        %v1176 = vsel %vm1156, %v1154, 0
        %v1179 = vsel %vm1156, %v1155, 0
        %vm1181 = vcmask 1043456
        %v1183 = vsel %vm1181, %v825, 0
        %1185 = vmatprep.subr.bf16.mxu0 0
        %1186 = vmatpush1.bf16.msra.mxu0 0
        %1187 = vmatprep.subr.bf16.mxu0 0
        %1188 = vmatpush1.bf16.msra.mxu0 0
        %1189 = vmatprep.subr.bf16.mxu0 0
        %1190 = vmatpush1.bf16.msra.mxu0 0
        %1191 = vmatprep.subr.bf16.mxu0 0
        %1192 = vmatpush1.bf16.msra.mxu0 0
        %1193 = vmatprep.subr.bf16.mxu0 0
        %1194 = vmatpush1.bf16.msra.mxu0 0
        %1195 = vmatprep.subr.bf16.mxu0 0
        %1196 = vmatpush1.bf16.msra.mxu0 0
        %1197 = vmatprep.subr.bf16.mxu0 0
        %1198 = vmatpush1.bf16.msra.mxu0 0
        %1199 = vmatprep.subr.bf16.mxu0 0
        %1200 = vmatpush1.bf16.msra.mxu0 %v1183
        %1201 = vmatprep.subr.bf16.mxu0 0
        %1202 = vmatpush2.bf16.msra.mxu0 0
        %1203 = vmatprep.subr.bf16.mxu0 0
        %1204 = vmatpush2.bf16.msra.mxu0 0
        %1205 = vmatprep.subr.bf16.mxu0 0
        %1206 = vmatpush2.bf16.msra.mxu0 0
        %1207 = vmatprep.subr.bf16.mxu0 0
        %1208 = vmatpush2.bf16.msra.mxu0 0
        %1209 = vmatprep.subr.bf16.mxu0 0
        %1210 = vmatpush2.bf16.msra.mxu0 0
        %1211 = vmatprep.subr.bf16.mxu0 0
        %1212 = vmatpush2.bf16.msra.mxu0 0
        %1213 = vmatprep.subr.bf16.mxu0 0
        %1214 = vmatpush2.bf16.msra.mxu0 0
        %1215 = vmatprep.subr.bf16.mxu0 0
        %1216 = vmatpush2.bf16.msra.mxu0 0
        %1217 = vmatprep.mubr.bf16.mxu0 0
        %1218 = vmatmul.mubr.bf16.gmra.mxu0 %v1158
        %v1219 = vpop.f32.mrf.mxu0
        %v1220 = vadd.f32 0.0, %v1219
        %v1221 = vpop.f32.mrf.mxu0
        %v1222 = vpop.f32.mrf.mxu0
        %v1223 = vadd.f32 0.0, %v1222
        %v1224 = vpop.f32.mrf.mxu0
        %1225 = vmatprep.mubr.bf16.mxu0 0
        %1226 = vmatmul.mubr.bf16.gmra.mxu0 %v1161
        %v1227 = vpop.f32.mrf.mxu0
        %v1228 = vadd.f32 0.0, %v1227
        %v1229 = vpop.f32.mrf.mxu0
        %v1230 = vpop.f32.mrf.mxu0
        %v1231 = vadd.f32 0.0, %v1230
        %v1232 = vpop.f32.mrf.mxu0
        %1233 = vmatprep.mubr.bf16.mxu0 0
        %1234 = vmatmul.mubr.bf16.gmra.mxu0 %v1164
        %v1235 = vpop.f32.mrf.mxu0
        %v1236 = vadd.f32 0.0, %v1235
        %v1237 = vpop.f32.mrf.mxu0
        %v1238 = vpop.f32.mrf.mxu0
        %v1239 = vadd.f32 0.0, %v1238
        %v1240 = vpop.f32.mrf.mxu0
        %1241 = vmatprep.mubr.bf16.mxu0 0
        %1242 = vmatmul.mubr.bf16.gmra.mxu0 %v1167
        %v1243 = vpop.f32.mrf.mxu0
        %v1244 = vadd.f32 0.0, %v1243
        %v1245 = vpop.f32.mrf.mxu0
        %v1246 = vpop.f32.mrf.mxu0
        %v1247 = vadd.f32 0.0, %v1246
        %v1248 = vpop.f32.mrf.mxu0
        %1249 = vmatprep.mubr.bf16.mxu0 0
        %1250 = vmatmul.mubr.bf16.gmra.mxu0 %v1170
        %v1251 = vpop.f32.mrf.mxu0
        %v1252 = vadd.f32 0.0, %v1251
        %v1253 = vpop.f32.mrf.mxu0
        %v1254 = vpop.f32.mrf.mxu0
        %v1255 = vadd.f32 0.0, %v1254
        %v1256 = vpop.f32.mrf.mxu0
        %1257 = vmatprep.mubr.bf16.mxu0 0
        %1258 = vmatmul.mubr.bf16.gmra.mxu0 %v1173
        %v1259 = vpop.f32.mrf.mxu0
        %v1260 = vadd.f32 0.0, %v1259
        %v1261 = vpop.f32.mrf.mxu0
        %v1262 = vpop.f32.mrf.mxu0
        %v1263 = vadd.f32 0.0, %v1262
        %v1264 = vpop.f32.mrf.mxu0
        %1265 = vmatprep.mubr.bf16.mxu0 0
        %1266 = vmatmul.mubr.bf16.gmra.mxu0 %v1176
        %v1267 = vpop.f32.mrf.mxu0
        %v1268 = vadd.f32 0.0, %v1267
        %v1269 = vpop.f32.mrf.mxu0
        %v1270 = vpop.f32.mrf.mxu0
        %v1271 = vadd.f32 0.0, %v1270
        %v1272 = vpop.f32.mrf.mxu0
        %1273 = vmatprep.mubr.bf16.mxu0 0
        %1274 = vmatmul.mubr.bf16.gmra.mxu0 %v1179
        %v1275 = vpop.f32.mrf.mxu0
        %v1276 = vadd.f32 0.0, %v1275
        %v1277 = vpop.f32.mrf.mxu0
        %v1278 = vpop.f32.mrf.mxu0
        %v1279 = vadd.f32 0.0, %v1278
        %v1280 = vpop.f32.mrf.mxu0
        %1281 = vdwg.mxu0
        %v1282 = vmul.f32 %v957, %v1220
        %v1283 = vmul.f32 %v960, %v1223
        %v1284 = vmul.f32 %v965, %v1228
        %v1285 = vmul.f32 %v968, %v1231
        %v1286 = vmul.f32 %v973, %v1236
        %v1287 = vmul.f32 %v976, %v1239
        %v1288 = vmul.f32 %v981, %v1244
        %v1289 = vmul.f32 %v984, %v1247
        %v1290 = vmul.f32 %v989, %v1252
        %v1291 = vmul.f32 %v992, %v1255
        %v1292 = vmul.f32 %v997, %v1260
        %v1293 = vmul.f32 %v1000, %v1263
        %v1294 = vmul.f32 %v1005, %v1268
        %v1295 = vmul.f32 %v1008, %v1271
        %v1296 = vmul.f32 %v1013, %v1276
        %v1297 = vmul.f32 %v1016, %v1279
        %v1298 = vpack.c.bf16 %v1283, %v1282
        %v1299 = vpack.c.bf16 %v1285, %v1284
        %v1300 = vpack.c.bf16 %v1287, %v1286
        %v1301 = vpack.c.bf16 %v1289, %v1288
        %v1302 = vpack.c.bf16 %v1291, %v1290
        %v1303 = vpack.c.bf16 %v1293, %v1292
        %v1304 = vpack.c.bf16 %v1295, %v1294
        %v1305 = vpack.c.bf16 %v1297, %v1296
        %v1310 = vunpack.c.l.b16 %v529
        %v1311 = vunpack.c.l.b16 %v530
        %v1312 = vunpack.c.l.b16 %v531
        %v1313 = vunpack.c.l.b16 %v532
        %v1314 = vpack.c.b16 %v1311, %v1310
        %v1315 = vpack.c.b16 %v1313, %v1312
        %v1319 = vsel %vm655, %v1298, 0
        %v1322 = vsel %vm655, %v1299, 0
        %v1325 = vsel %vm655, %v1300, 0
        %v1328 = vsel %vm655, %v1301, 0
        %v1331 = vsel %vm655, %v1302, 0
        %v1334 = vsel %vm655, %v1303, 0
        %v1337 = vsel %vm655, %v1304, 0
        %v1340 = vsel %vm655, %v1305, 0
        %1342 = vmatprep.subr.bf16.mxu0 0
        %1343 = vmatpush1.bf16.msra.mxu0 0
        %1344 = vmatprep.subr.bf16.mxu0 0
        %1345 = vmatpush1.bf16.msra.mxu0 0
        %1346 = vmatprep.subr.bf16.mxu0 0
        %1347 = vmatpush1.bf16.msra.mxu0 0
        %1348 = vmatprep.subr.bf16.mxu0 0
        %1349 = vmatpush1.bf16.msra.mxu0 0
        %1350 = vmatprep.subr.bf16.mxu0 0
        %1351 = vmatpush1.bf16.msra.mxu0 0
        %1352 = vmatprep.subr.bf16.mxu0 0
        %1353 = vmatpush1.bf16.msra.mxu0 0
        %1354 = vmatprep.subr.bf16.mxu0 0
        %1355 = vmatpush1.bf16.msra.mxu0 %v1315
        %1356 = vmatprep.subr.bf16.mxu0 0
        %1357 = vmatpush1.bf16.msra.mxu0 %v1314
        %1358 = vmatprep.subr.bf16.mxu0 0
        %1359 = vmatpush2.bf16.msra.mxu0 0
        %1360 = vmatprep.subr.bf16.mxu0 0
        %1361 = vmatpush2.bf16.msra.mxu0 0
        %1362 = vmatprep.subr.bf16.mxu0 0
        %1363 = vmatpush2.bf16.msra.mxu0 0
        %1364 = vmatprep.subr.bf16.mxu0 0
        %1365 = vmatpush2.bf16.msra.mxu0 0
        %1366 = vmatprep.subr.bf16.mxu0 0
        %1367 = vmatpush2.bf16.msra.mxu0 0
        %1368 = vmatprep.subr.bf16.mxu0 0
        %1369 = vmatpush2.bf16.msra.mxu0 0
        %1370 = vmatprep.subr.bf16.mxu0 0
        %1371 = vmatpush2.bf16.msra.mxu0 0
        %1372 = vmatprep.subr.bf16.mxu0 0
        %1373 = vmatpush2.bf16.msra.mxu0 0
        %1374 = vmatprep.mubr.bf16.mxu0 0
        %1375 = vmatmul.mubr.bf16.gmra.mxu0 %v1319
        %v1376 = vpop.f32.mrf.mxu0
        %v1377 = vadd.f32 0.0, %v1376
        %v1378 = vpop.f32.mrf.mxu0
        %v1379 = vpop.f32.mrf.mxu0
        %v1380 = vadd.f32 0.0, %v1379
        %v1381 = vpop.f32.mrf.mxu0
        %1382 = vmatprep.mubr.bf16.mxu0 0
        %1383 = vmatmul.mubr.bf16.gmra.mxu0 %v1322
        %v1384 = vpop.f32.mrf.mxu0
        %v1385 = vadd.f32 0.0, %v1384
        %v1386 = vpop.f32.mrf.mxu0
        %v1387 = vpop.f32.mrf.mxu0
        %v1388 = vadd.f32 0.0, %v1387
        %v1389 = vpop.f32.mrf.mxu0
        %1390 = vmatprep.mubr.bf16.mxu0 0
        %1391 = vmatmul.mubr.bf16.gmra.mxu0 %v1325
        %v1392 = vpop.f32.mrf.mxu0
        %v1393 = vadd.f32 0.0, %v1392
        %v1394 = vpop.f32.mrf.mxu0
        %v1395 = vpop.f32.mrf.mxu0
        %v1396 = vadd.f32 0.0, %v1395
        %v1397 = vpop.f32.mrf.mxu0
        %1398 = vmatprep.mubr.bf16.mxu0 0
        %1399 = vmatmul.mubr.bf16.gmra.mxu0 %v1328
        %v1400 = vpop.f32.mrf.mxu0
        %v1401 = vadd.f32 0.0, %v1400
        %v1402 = vpop.f32.mrf.mxu0
        %v1403 = vpop.f32.mrf.mxu0
        %v1404 = vadd.f32 0.0, %v1403
        %v1405 = vpop.f32.mrf.mxu0
        %1406 = vmatprep.mubr.bf16.mxu0 0
        %1407 = vmatmul.mubr.bf16.gmra.mxu0 %v1331
        %v1408 = vpop.f32.mrf.mxu0
        %v1409 = vadd.f32 0.0, %v1408
        %v1410 = vpop.f32.mrf.mxu0
        %v1411 = vpop.f32.mrf.mxu0
        %v1412 = vadd.f32 0.0, %v1411
        %v1413 = vpop.f32.mrf.mxu0
        %1414 = vmatprep.mubr.bf16.mxu0 0
        %1415 = vmatmul.mubr.bf16.gmra.mxu0 %v1334
        %v1416 = vpop.f32.mrf.mxu0
        %v1417 = vadd.f32 0.0, %v1416
        %v1418 = vpop.f32.mrf.mxu0
        %v1419 = vpop.f32.mrf.mxu0
        %v1420 = vadd.f32 0.0, %v1419
        %v1421 = vpop.f32.mrf.mxu0
        %1422 = vmatprep.mubr.bf16.mxu0 0
        %1423 = vmatmul.mubr.bf16.gmra.mxu0 %v1337
        %v1424 = vpop.f32.mrf.mxu0
        %v1425 = vadd.f32 0.0, %v1424
        %v1426 = vpop.f32.mrf.mxu0
        %v1427 = vpop.f32.mrf.mxu0
        %v1428 = vadd.f32 0.0, %v1427
        %v1429 = vpop.f32.mrf.mxu0
        %1430 = vmatprep.mubr.bf16.mxu0 0
        %1431 = vmatmul.mubr.bf16.gmra.mxu0 %v1340
        %v1432 = vpop.f32.mrf.mxu0
        %v1433 = vadd.f32 0.0, %v1432
        %v1434 = vpop.f32.mrf.mxu0
        %v1435 = vpop.f32.mrf.mxu0
        %v1436 = vadd.f32 0.0, %v1435
        %v1437 = vpop.f32.mrf.mxu0
        %1438 = vdwg.mxu0
        %v1439 = vunpack.c.l.bf16 %v825
        %v1440 = vmul.f32 %v757, %v1439
        %v1441 = vpack.c.bf16 %v1440, %v1440
        %v1443 = vsel %vm655, %v1441, 0
        %1445 = vmatprep.subr.bf16.mxu0 0
        %1446 = vmatpush1.bf16.msra.mxu0 0
        %1447 = vmatprep.subr.bf16.mxu0 0
        %1448 = vmatpush1.bf16.msra.mxu0 0
        %1449 = vmatprep.subr.bf16.mxu0 0
        %1450 = vmatpush1.bf16.msra.mxu0 0
        %1451 = vmatprep.subr.bf16.mxu0 0
        %1452 = vmatpush1.bf16.msra.mxu0 0
        %1453 = vmatprep.subr.bf16.mxu0 0
        %1454 = vmatpush1.bf16.msra.mxu0 0
        %1455 = vmatprep.subr.bf16.mxu0 0
        %1456 = vmatpush1.bf16.msra.mxu0 0
        %1457 = vmatprep.subr.bf16.mxu0 0
        %1458 = vmatpush1.bf16.msra.mxu0 %v1315
        %1459 = vmatprep.subr.bf16.mxu0 0
        %1460 = vmatpush1.bf16.msra.mxu0 %v1314
        %1461 = vmatprep.subr.bf16.mxu0 0
        %1462 = vmatpush2.bf16.msra.mxu0 0
        %1463 = vmatprep.subr.bf16.mxu0 0
        %1464 = vmatpush2.bf16.msra.mxu0 0
        %1465 = vmatprep.subr.bf16.mxu0 0
        %1466 = vmatpush2.bf16.msra.mxu0 0
        %1467 = vmatprep.subr.bf16.mxu0 0
        %1468 = vmatpush2.bf16.msra.mxu0 0
        %1469 = vmatprep.subr.bf16.mxu0 0
        %1470 = vmatpush2.bf16.msra.mxu0 0
        %1471 = vmatprep.subr.bf16.mxu0 0
        %1472 = vmatpush2.bf16.msra.mxu0 0
        %1473 = vmatprep.subr.bf16.mxu0 0
        %1474 = vmatpush2.bf16.msra.mxu0 0
        %1475 = vmatprep.subr.bf16.mxu0 0
        %1476 = vmatpush2.bf16.msra.mxu0 0
        %1477 = vmatprep.mubr.bf16.mxu0 0
        %1478 = vmatmul.mubr.bf16.gmra.mxu0 %v1443
        %v1479 = vpop.f32.mrf.mxu0
        %v1480 = vadd.f32 0.0, %v1479
        %v1481 = vpop.f32.mrf.mxu0
        %v1482 = vpop.f32.mrf.mxu0
        %v1483 = vpop.f32.mrf.mxu0
        %1484 = vdwg.mxu0
        %vm1485 = vcmask 31744
        %v1486 = vsel %vm1485, %v1377, -inf
        %v1487 = vsel %vm1485, %v1380, -inf
        %v1488 = vmax.f32 %v1486, %v1487
        %v1489 = vrot.slane %v1488, 4
        %v1490 = vmax.f32 %v1488, %v1489
        %v1491 = vrot.slane %v1490, 2
        %v1492 = vmax.f32 %v1490, %v1491
        %v1493 = vrot.slane %v1492, 1
        %v1494 = vmax.f32 %v1492, %v1493
        %v1495 = vsel %vm1485, %v1385, -inf
        %v1496 = vsel %vm1485, %v1388, -inf
        %v1497 = vmax.f32 %v1495, %v1496
        %v1498 = vrot.slane %v1497, 4
        %v1499 = vmax.f32 %v1497, %v1498
        %v1500 = vrot.slane %v1499, 2
        %v1501 = vmax.f32 %v1499, %v1500
        %v1502 = vrot.slane %v1501, 1
        %v1503 = vmax.f32 %v1501, %v1502
        %v1504 = vsel %vm1485, %v1393, -inf
        %v1505 = vsel %vm1485, %v1396, -inf
        %v1506 = vmax.f32 %v1504, %v1505
        %v1507 = vrot.slane %v1506, 4
        %v1508 = vmax.f32 %v1506, %v1507
        %v1509 = vrot.slane %v1508, 2
        %v1510 = vmax.f32 %v1508, %v1509
        %v1511 = vrot.slane %v1510, 1
        %v1512 = vmax.f32 %v1510, %v1511
        %v1513 = vsel %vm1485, %v1401, -inf
        %v1514 = vsel %vm1485, %v1404, -inf
        %v1515 = vmax.f32 %v1513, %v1514
        %v1516 = vrot.slane %v1515, 4
        %v1517 = vmax.f32 %v1515, %v1516
        %v1518 = vrot.slane %v1517, 2
        %v1519 = vmax.f32 %v1517, %v1518
        %v1520 = vrot.slane %v1519, 1
        %v1521 = vmax.f32 %v1519, %v1520
        %v1522 = vsel %vm1485, %v1409, -inf
        %v1523 = vsel %vm1485, %v1412, -inf
        %v1524 = vmax.f32 %v1522, %v1523
        %v1525 = vrot.slane %v1524, 4
        %v1526 = vmax.f32 %v1524, %v1525
        %v1527 = vrot.slane %v1526, 2
        %v1528 = vmax.f32 %v1526, %v1527
        %v1529 = vrot.slane %v1528, 1
        %v1530 = vmax.f32 %v1528, %v1529
        %v1531 = vsel %vm1485, %v1417, -inf
        %v1532 = vsel %vm1485, %v1420, -inf
        %v1533 = vmax.f32 %v1531, %v1532
        %v1534 = vrot.slane %v1533, 4
        %v1535 = vmax.f32 %v1533, %v1534
        %v1536 = vrot.slane %v1535, 2
        %v1537 = vmax.f32 %v1535, %v1536
        %v1538 = vrot.slane %v1537, 1
        %v1539 = vmax.f32 %v1537, %v1538
        %v1540 = vsel %vm1485, %v1425, -inf
        %v1541 = vsel %vm1485, %v1428, -inf
        %v1542 = vmax.f32 %v1540, %v1541
        %v1543 = vrot.slane %v1542, 4
        %v1544 = vmax.f32 %v1542, %v1543
        %v1545 = vrot.slane %v1544, 2
        %v1546 = vmax.f32 %v1544, %v1545
        %v1547 = vrot.slane %v1546, 1
        %v1548 = vmax.f32 %v1546, %v1547
        %v1549 = vsel %vm1485, %v1433, -inf
        %v1550 = vsel %vm1485, %v1436, -inf
        %v1551 = vmax.f32 %v1549, %v1550
        %v1552 = vrot.slane %v1551, 4
        %v1553 = vmax.f32 %v1551, %v1552
        %v1554 = vrot.slane %v1553, 2
        %v1555 = vmax.f32 %v1553, %v1554
        %v1556 = vrot.slane %v1555, 1
        %v1557 = vmax.f32 %v1555, %v1556
        %v1559 = vrot.slane %v1480, 1
        %v1560 = vrot.slane %v1480, 2
        %v1561 = vrot.slane %v1480, 3
        %v1562 = vrot.slane %v1480, 4
        %v1563 = vrot.slane %v1480, 5
        %v1564 = vrot.slane %v1480, 6
        %v1565 = vrot.slane %v1480, 7
        %v1574 = vmax.f32 %v1494, %v1480
        %v1575 = vmax.f32 %v1503, %v1559
        %v1576 = vmax.f32 %v1512, %v1560
        %v1577 = vmax.f32 %v1521, %v1561
        %v1578 = vmax.f32 %v1530, %v1562
        %v1579 = vmax.f32 %v1539, %v1563
        %v1580 = vmax.f32 %v1548, %v1564
        %v1581 = vmax.f32 %v1557, %v1565
        %v1582 = vlaneseq
        %v1583 = vshrl.u32 %v1582, 7
        %v1584 = vsub.s32 0, %v1583
        %v1585 = vrot.slane %v1574, %v1584
        %v1586 = vlaneseq
        %v1587 = vshrl.u32 %v1586, 7
        %v1588 = vsub.s32 0, %v1587
        %v1589 = vrot.slane %v1575, %v1588
        %v1590 = vlaneseq
        %v1591 = vshrl.u32 %v1590, 7
        %v1592 = vsub.s32 0, %v1591
        %v1593 = vrot.slane %v1576, %v1592
        %v1594 = vlaneseq
        %v1595 = vshrl.u32 %v1594, 7
        %v1596 = vsub.s32 0, %v1595
        %v1597 = vrot.slane %v1577, %v1596
        %v1598 = vlaneseq
        %v1599 = vshrl.u32 %v1598, 7
        %v1600 = vsub.s32 0, %v1599
        %v1601 = vrot.slane %v1578, %v1600
        %v1602 = vlaneseq
        %v1603 = vshrl.u32 %v1602, 7
        %v1604 = vsub.s32 0, %v1603
        %v1605 = vrot.slane %v1579, %v1604
        %v1606 = vlaneseq
        %v1607 = vshrl.u32 %v1606, 7
        %v1608 = vsub.s32 0, %v1607
        %v1609 = vrot.slane %v1580, %v1608
        %v1610 = vlaneseq
        %v1611 = vshrl.u32 %v1610, 7
        %v1612 = vsub.s32 0, %v1611
        %v1613 = vrot.slane %v1581, %v1612
        %v1614 = vsub.f32 %v1377, %v1585
        %v1615 = vsub.f32 %v1380, %v1585
        %v1616 = vsub.f32 %v1385, %v1589
        %v1617 = vsub.f32 %v1388, %v1589
        %v1618 = vsub.f32 %v1393, %v1593
        %v1619 = vsub.f32 %v1396, %v1593
        %v1620 = vsub.f32 %v1401, %v1597
        %v1621 = vsub.f32 %v1404, %v1597
        %v1622 = vsub.f32 %v1409, %v1601
        %v1623 = vsub.f32 %v1412, %v1601
        %v1624 = vsub.f32 %v1417, %v1605
        %v1625 = vsub.f32 %v1420, %v1605
        %v1626 = vsub.f32 %v1425, %v1609
        %v1627 = vsub.f32 %v1428, %v1609
        %v1628 = vsub.f32 %v1433, %v1613
        %v1629 = vsub.f32 %v1436, %v1613
        %v1630 = vmul.f32 %v1614, 1.442695
        %v1631 = vpow.pop %v1630
        %v1632 = vmul.f32 %v1615, 1.442695
        %v1633 = vpow.pop %v1632
        %v1634 = vmul.f32 %v1616, 1.442695
        %v1635 = vpow.pop %v1634
        %v1636 = vmul.f32 %v1617, 1.442695
        %v1637 = vpow.pop %v1636
        %v1638 = vmul.f32 %v1618, 1.442695
        %v1639 = vpow.pop %v1638
        %v1640 = vmul.f32 %v1619, 1.442695
        %v1641 = vpow.pop %v1640
        %v1642 = vmul.f32 %v1620, 1.442695
        %v1643 = vpow.pop %v1642
        %v1644 = vmul.f32 %v1621, 1.442695
        %v1645 = vpow.pop %v1644
        %v1646 = vmul.f32 %v1622, 1.442695
        %v1647 = vpow.pop %v1646
        %v1648 = vmul.f32 %v1623, 1.442695
        %v1649 = vpow.pop %v1648
        %v1650 = vmul.f32 %v1624, 1.442695
        %v1651 = vpow.pop %v1650
        %v1652 = vmul.f32 %v1625, 1.442695
        %v1653 = vpow.pop %v1652
        %v1654 = vmul.f32 %v1626, 1.442695
        %v1655 = vpow.pop %v1654
        %v1656 = vmul.f32 %v1627, 1.442695
        %v1657 = vpow.pop %v1656
        %v1658 = vmul.f32 %v1628, 1.442695
        %v1659 = vpow.pop %v1658
        %v1660 = vmul.f32 %v1629, 1.442695
        %v1661 = vpow.pop %v1660
        %v1670 = vrot.slane %v1575, 7
        %vm1671 = vcmask 1041409
        %v1672 = vsel %vm1671, %v1670, %v1574
        %v1673 = vrot.slane %v1576, 6
        %vm1674 = vcmask 1042434
        %v1675 = vsel %vm1674, %v1673, %v1672
        %v1676 = vrot.slane %v1577, 5
        %vm1677 = vcmask 1043459
        %v1678 = vsel %vm1677, %v1676, %v1675
        %v1679 = vrot.slane %v1578, 4
        %vm1680 = vcmask 1044484
        %v1681 = vsel %vm1680, %v1679, %v1678
        %v1682 = vrot.slane %v1579, 3
        %vm1683 = vcmask 1045509
        %v1684 = vsel %vm1683, %v1682, %v1681
        %v1685 = vrot.slane %v1580, 2
        %vm1686 = vcmask 1046534
        %v1687 = vsel %vm1686, %v1685, %v1684
        %v1688 = vrot.slane %v1581, 1
        %vm1689 = vcmask 1047559
        %v1690 = vsel %vm1689, %v1688, %v1687
        %v1692 = vsub.f32 %v1480, %v1690
        %v1693 = vmul.f32 %v1692, 1.442695
        %v1694 = vpow.pop %v1693
        %v1695 = vsel %vm1485, %v1631, 0.0
        %v1696 = vsel %vm1485, %v1633, 0.0
        %v1697 = vadd.f32 %v1695, %v1696
        %v1698 = vrot.slane %v1697, 4
        %v1699 = vadd.f32 %v1697, %v1698
        %v1700 = vrot.slane %v1699, 2
        %v1701 = vadd.f32 %v1699, %v1700
        %v1702 = vrot.slane %v1701, 1
        %v1703 = vadd.f32 %v1701, %v1702
        %v1704 = vsel %vm1485, %v1635, 0.0
        %v1705 = vsel %vm1485, %v1637, 0.0
        %v1706 = vadd.f32 %v1704, %v1705
        %v1707 = vrot.slane %v1706, 4
        %v1708 = vadd.f32 %v1706, %v1707
        %v1709 = vrot.slane %v1708, 2
        %v1710 = vadd.f32 %v1708, %v1709
        %v1711 = vrot.slane %v1710, 1
        %v1712 = vadd.f32 %v1710, %v1711
        %v1713 = vsel %vm1485, %v1639, 0.0
        %v1714 = vsel %vm1485, %v1641, 0.0
        %v1715 = vadd.f32 %v1713, %v1714
        %v1716 = vrot.slane %v1715, 4
        %v1717 = vadd.f32 %v1715, %v1716
        %v1718 = vrot.slane %v1717, 2
        %v1719 = vadd.f32 %v1717, %v1718
        %v1720 = vrot.slane %v1719, 1
        %v1721 = vadd.f32 %v1719, %v1720
        %v1722 = vsel %vm1485, %v1643, 0.0
        %v1723 = vsel %vm1485, %v1645, 0.0
        %v1724 = vadd.f32 %v1722, %v1723
        %v1725 = vrot.slane %v1724, 4
        %v1726 = vadd.f32 %v1724, %v1725
        %v1727 = vrot.slane %v1726, 2
        %v1728 = vadd.f32 %v1726, %v1727
        %v1729 = vrot.slane %v1728, 1
        %v1730 = vadd.f32 %v1728, %v1729
        %v1731 = vsel %vm1485, %v1647, 0.0
        %v1732 = vsel %vm1485, %v1649, 0.0
        %v1733 = vadd.f32 %v1731, %v1732
        %v1734 = vrot.slane %v1733, 4
        %v1735 = vadd.f32 %v1733, %v1734
        %v1736 = vrot.slane %v1735, 2
        %v1737 = vadd.f32 %v1735, %v1736
        %v1738 = vrot.slane %v1737, 1
        %v1739 = vadd.f32 %v1737, %v1738
        %v1740 = vsel %vm1485, %v1651, 0.0
        %v1741 = vsel %vm1485, %v1653, 0.0
        %v1742 = vadd.f32 %v1740, %v1741
        %v1743 = vrot.slane %v1742, 4
        %v1744 = vadd.f32 %v1742, %v1743
        %v1745 = vrot.slane %v1744, 2
        %v1746 = vadd.f32 %v1744, %v1745
        %v1747 = vrot.slane %v1746, 1
        %v1748 = vadd.f32 %v1746, %v1747
        %v1749 = vsel %vm1485, %v1655, 0.0
        %v1750 = vsel %vm1485, %v1657, 0.0
        %v1751 = vadd.f32 %v1749, %v1750
        %v1752 = vrot.slane %v1751, 4
        %v1753 = vadd.f32 %v1751, %v1752
        %v1754 = vrot.slane %v1753, 2
        %v1755 = vadd.f32 %v1753, %v1754
        %v1756 = vrot.slane %v1755, 1
        %v1757 = vadd.f32 %v1755, %v1756
        %v1758 = vsel %vm1485, %v1659, 0.0
        %v1759 = vsel %vm1485, %v1661, 0.0
        %v1760 = vadd.f32 %v1758, %v1759
        %v1761 = vrot.slane %v1760, 4
        %v1762 = vadd.f32 %v1760, %v1761
        %v1763 = vrot.slane %v1762, 2
        %v1764 = vadd.f32 %v1762, %v1763
        %v1765 = vrot.slane %v1764, 1
        %v1766 = vadd.f32 %v1764, %v1765
        %v1768 = vrot.slane %v1694, 1
        %v1769 = vrot.slane %v1694, 2
        %v1770 = vrot.slane %v1694, 3
        %v1771 = vrot.slane %v1694, 4
        %v1772 = vrot.slane %v1694, 5
        %v1773 = vrot.slane %v1694, 6
        %v1774 = vrot.slane %v1694, 7
        %v1783 = vadd.f32 %v1703, %v1694
        %v1784 = vadd.f32 %v1712, %v1768
        %v1785 = vadd.f32 %v1721, %v1769
        %v1786 = vadd.f32 %v1730, %v1770
        %v1787 = vadd.f32 %v1739, %v1771
        %v1788 = vadd.f32 %v1748, %v1772
        %v1789 = vadd.f32 %v1757, %v1773
        %v1790 = vadd.f32 %v1766, %v1774
        %v1791 = vrcp.pop %v1783
        %v1792 = vrcp.pop %v1784
        %v1793 = vrcp.pop %v1785
        %v1794 = vrcp.pop %v1786
        %v1795 = vrcp.pop %v1787
        %v1796 = vrcp.pop %v1788
        %v1797 = vrcp.pop %v1789
        %v1798 = vrcp.pop %v1790
        %v1799 = vlaneseq
        %v1800 = vshrl.u32 %v1799, 7
        %v1801 = vsub.s32 0, %v1800
        %v1802 = vrot.slane %v1791, %v1801
        %v1803 = vlaneseq
        %v1804 = vshrl.u32 %v1803, 7
        %v1805 = vsub.s32 0, %v1804
        %v1806 = vrot.slane %v1792, %v1805
        %v1807 = vlaneseq
        %v1808 = vshrl.u32 %v1807, 7
        %v1809 = vsub.s32 0, %v1808
        %v1810 = vrot.slane %v1793, %v1809
        %v1811 = vlaneseq
        %v1812 = vshrl.u32 %v1811, 7
        %v1813 = vsub.s32 0, %v1812
        %v1814 = vrot.slane %v1794, %v1813
        %v1815 = vlaneseq
        %v1816 = vshrl.u32 %v1815, 7
        %v1817 = vsub.s32 0, %v1816
        %v1818 = vrot.slane %v1795, %v1817
        %v1819 = vlaneseq
        %v1820 = vshrl.u32 %v1819, 7
        %v1821 = vsub.s32 0, %v1820
        %v1822 = vrot.slane %v1796, %v1821
        %v1823 = vlaneseq
        %v1824 = vshrl.u32 %v1823, 7
        %v1825 = vsub.s32 0, %v1824
        %v1826 = vrot.slane %v1797, %v1825
        %v1827 = vlaneseq
        %v1828 = vshrl.u32 %v1827, 7
        %v1829 = vsub.s32 0, %v1828
        %v1830 = vrot.slane %v1798, %v1829
        %v1831 = vmul.f32 %v1631, %v1802
        %v1832 = vmul.f32 %v1633, %v1802
        %v1833 = vmul.f32 %v1635, %v1806
        %v1834 = vmul.f32 %v1637, %v1806
        %v1835 = vmul.f32 %v1639, %v1810
        %v1836 = vmul.f32 %v1641, %v1810
        %v1837 = vmul.f32 %v1643, %v1814
        %v1838 = vmul.f32 %v1645, %v1814
        %v1839 = vmul.f32 %v1647, %v1818
        %v1840 = vmul.f32 %v1649, %v1818
        %v1841 = vmul.f32 %v1651, %v1822
        %v1842 = vmul.f32 %v1653, %v1822
        %v1843 = vmul.f32 %v1655, %v1826
        %v1844 = vmul.f32 %v1657, %v1826
        %v1845 = vmul.f32 %v1659, %v1830
        %v1846 = vmul.f32 %v1661, %v1830
        %v1855 = vrot.slane %v1792, 7
        %v1856 = vsel %vm1671, %v1855, %v1791
        %v1857 = vrot.slane %v1793, 6
        %v1858 = vsel %vm1674, %v1857, %v1856
        %v1859 = vrot.slane %v1794, 5
        %v1860 = vsel %vm1677, %v1859, %v1858
        %v1861 = vrot.slane %v1795, 4
        %v1862 = vsel %vm1680, %v1861, %v1860
        %v1863 = vrot.slane %v1796, 3
        %v1864 = vsel %vm1683, %v1863, %v1862
        %v1865 = vrot.slane %v1797, 2
        %v1866 = vsel %vm1686, %v1865, %v1864
        %v1867 = vrot.slane %v1798, 1
        %v1868 = vsel %vm1689, %v1867, %v1866
        %v1870 = vmul.f32 %v1694, %v1868
        %v1871 = vpack.c.bf16 %v1832, %v1831
        %v1872 = vpack.c.bf16 %v1834, %v1833
        %v1873 = vpack.c.bf16 %v1836, %v1835
        %v1874 = vpack.c.bf16 %v1838, %v1837
        %v1875 = vpack.c.bf16 %v1840, %v1839
        %v1876 = vpack.c.bf16 %v1842, %v1841
        %v1877 = vpack.c.bf16 %v1844, %v1843
        %v1878 = vpack.c.bf16 %v1846, %v1845
        %v1880 = vsel %vm1485, %v1871, 0
        %v1883 = vsel %vm1485, %v1872, 0
        %v1886 = vsel %vm1485, %v1873, 0
        %v1889 = vsel %vm1485, %v1874, 0
        %v1892 = vsel %vm1485, %v1875, 0
        %v1895 = vsel %vm1485, %v1876, 0
        %v1898 = vsel %vm1485, %v1877, 0
        %v1901 = vsel %vm1485, %v1878, 0
        %vm1903 = vcmask 1041408
        %v1905 = vsel %vm1903, %v533, 0
        %1907 = vmatprep.subr.bf16.mxu0 0
        %1908 = vmatpush1.bf16.msra.mxu0 0
        %1909 = vmatprep.subr.bf16.mxu0 0
        %1910 = vmatpush1.bf16.msra.mxu0 0
        %1911 = vmatprep.subr.bf16.mxu0 0
        %1912 = vmatpush1.bf16.msra.mxu0 0
        %1913 = vmatprep.subr.bf16.mxu0 0
        %1914 = vmatpush1.bf16.msra.mxu0 0
        %1915 = vmatprep.subr.bf16.mxu0 0
        %1916 = vmatpush1.bf16.msra.mxu0 0
        %1917 = vmatprep.subr.bf16.mxu0 0
        %1918 = vmatpush1.bf16.msra.mxu0 0
        %1919 = vmatprep.subr.bf16.mxu0 0
        %1920 = vmatpush1.bf16.msra.mxu0 0
        %1921 = vmatprep.subr.bf16.mxu0 0
        %1922 = vmatpush1.bf16.msra.mxu0 %v1905
        %1923 = vmatprep.subr.bf16.mxu0 0
        %1924 = vmatpush2.bf16.msra.mxu0 0
        %1925 = vmatprep.subr.bf16.mxu0 0
        %1926 = vmatpush2.bf16.msra.mxu0 0
        %1927 = vmatprep.subr.bf16.mxu0 0
        %1928 = vmatpush2.bf16.msra.mxu0 0
        %1929 = vmatprep.subr.bf16.mxu0 0
        %1930 = vmatpush2.bf16.msra.mxu0 0
        %1931 = vmatprep.subr.bf16.mxu0 0
        %1932 = vmatpush2.bf16.msra.mxu0 0
        %1933 = vmatprep.subr.bf16.mxu0 0
        %1934 = vmatpush2.bf16.msra.mxu0 0
        %1935 = vmatprep.subr.bf16.mxu0 0
        %1936 = vmatpush2.bf16.msra.mxu0 0
        %1937 = vmatprep.subr.bf16.mxu0 0
        %1938 = vmatpush2.bf16.msra.mxu0 0
        %1939 = vmatprep.mubr.bf16.mxu0 0
        %1940 = vmatmul.mubr.bf16.gmra.mxu0 %v1880
        %v1941 = vpop.f32.mrf.mxu0
        %v1942 = vadd.f32 0.0, %v1941
        %v1943 = vpop.f32.mrf.mxu0
        %v1944 = vpop.f32.mrf.mxu0
        %v1945 = vadd.f32 0.0, %v1944
        %v1946 = vpop.f32.mrf.mxu0
        %1947 = vmatprep.mubr.bf16.mxu0 0
        %1948 = vmatmul.mubr.bf16.gmra.mxu0 %v1883
        %v1949 = vpop.f32.mrf.mxu0
        %v1950 = vadd.f32 0.0, %v1949
        %v1951 = vpop.f32.mrf.mxu0
        %v1952 = vpop.f32.mrf.mxu0
        %v1953 = vadd.f32 0.0, %v1952
        %v1954 = vpop.f32.mrf.mxu0
        %1955 = vmatprep.mubr.bf16.mxu0 0
        %1956 = vmatmul.mubr.bf16.gmra.mxu0 %v1886
        %v1957 = vpop.f32.mrf.mxu0
        %v1958 = vadd.f32 0.0, %v1957
        %v1959 = vpop.f32.mrf.mxu0
        %v1960 = vpop.f32.mrf.mxu0
        %v1961 = vadd.f32 0.0, %v1960
        %v1962 = vpop.f32.mrf.mxu0
        %1963 = vmatprep.mubr.bf16.mxu0 0
        %1964 = vmatmul.mubr.bf16.gmra.mxu0 %v1889
        %v1965 = vpop.f32.mrf.mxu0
        %v1966 = vadd.f32 0.0, %v1965
        %v1967 = vpop.f32.mrf.mxu0
        %v1968 = vpop.f32.mrf.mxu0
        %v1969 = vadd.f32 0.0, %v1968
        %v1970 = vpop.f32.mrf.mxu0
        %1971 = vmatprep.mubr.bf16.mxu0 0
        %1972 = vmatmul.mubr.bf16.gmra.mxu0 %v1892
        %v1973 = vpop.f32.mrf.mxu0
        %v1974 = vadd.f32 0.0, %v1973
        %v1975 = vpop.f32.mrf.mxu0
        %v1976 = vpop.f32.mrf.mxu0
        %v1977 = vadd.f32 0.0, %v1976
        %v1978 = vpop.f32.mrf.mxu0
        %1979 = vmatprep.mubr.bf16.mxu0 0
        %1980 = vmatmul.mubr.bf16.gmra.mxu0 %v1895
        %v1981 = vpop.f32.mrf.mxu0
        %v1982 = vadd.f32 0.0, %v1981
        %v1983 = vpop.f32.mrf.mxu0
        %v1984 = vpop.f32.mrf.mxu0
        %v1985 = vadd.f32 0.0, %v1984
        %v1986 = vpop.f32.mrf.mxu0
        %1987 = vmatprep.mubr.bf16.mxu0 0
        %1988 = vmatmul.mubr.bf16.gmra.mxu0 %v1898
        %v1989 = vpop.f32.mrf.mxu0
        %v1990 = vadd.f32 0.0, %v1989
        %v1991 = vpop.f32.mrf.mxu0
        %v1992 = vpop.f32.mrf.mxu0
        %v1993 = vadd.f32 0.0, %v1992
        %v1994 = vpop.f32.mrf.mxu0
        %1995 = vmatprep.mubr.bf16.mxu0 0
        %1996 = vmatmul.mubr.bf16.gmra.mxu0 %v1901
        %v1997 = vpop.f32.mrf.mxu0
        %v1998 = vadd.f32 0.0, %v1997
        %v1999 = vpop.f32.mrf.mxu0
        %v2000 = vpop.f32.mrf.mxu0
        %v2001 = vadd.f32 0.0, %v2000
        %v2002 = vpop.f32.mrf.mxu0
        %2003 = vdwg.mxu0
        %v2004 = vpack.c.bf16 %v1870, %v1870
        %v2006 = vsel %vm1485, %v2004, 0
        %2008 = vmatprep.subr.bf16.mxu0 0
        %2009 = vmatpush1.bf16.msra.mxu0 0
        %2010 = vmatprep.subr.bf16.mxu0 0
        %2011 = vmatpush1.bf16.msra.mxu0 0
        %2012 = vmatprep.subr.bf16.mxu0 0
        %2013 = vmatpush1.bf16.msra.mxu0 0
        %2014 = vmatprep.subr.bf16.mxu0 0
        %2015 = vmatpush1.bf16.msra.mxu0 0
        %2016 = vmatprep.subr.bf16.mxu0 0
        %2017 = vmatpush1.bf16.msra.mxu0 0
        %2018 = vmatprep.subr.bf16.mxu0 0
        %2019 = vmatpush1.bf16.msra.mxu0 0
        %2020 = vmatprep.subr.bf16.mxu0 0
        %2021 = vmatpush1.bf16.msra.mxu0 0
        %2022 = vmatprep.subr.bf16.mxu0 0
        %2023 = vmatpush1.bf16.msra.mxu0 %v1905
        %2024 = vmatprep.subr.bf16.mxu0 0
        %2025 = vmatpush2.bf16.msra.mxu0 0
        %2026 = vmatprep.subr.bf16.mxu0 0
        %2027 = vmatpush2.bf16.msra.mxu0 0
        %2028 = vmatprep.subr.bf16.mxu0 0
        %2029 = vmatpush2.bf16.msra.mxu0 0
        %2030 = vmatprep.subr.bf16.mxu0 0
        %2031 = vmatpush2.bf16.msra.mxu0 0
        %2032 = vmatprep.subr.bf16.mxu0 0
        %2033 = vmatpush2.bf16.msra.mxu0 0
        %2034 = vmatprep.subr.bf16.mxu0 0
        %2035 = vmatpush2.bf16.msra.mxu0 0
        %2036 = vmatprep.subr.bf16.mxu0 0
        %2037 = vmatpush2.bf16.msra.mxu0 0
        %2038 = vmatprep.subr.bf16.mxu0 0
        %2039 = vmatpush2.bf16.msra.mxu0 0
        %2040 = vmatprep.mubr.bf16.mxu0 0
        %2041 = vmatmul.mubr.bf16.gmra.mxu0 %v2006
        %v2042 = vpop.f32.mrf.mxu0
        %v2043 = vadd.f32 0.0, %v2042
        %v2044 = vpop.f32.mrf.mxu0
        %v2045 = vpop.f32.mrf.mxu0
        %v2046 = vpop.f32.mrf.mxu0
        %2047 = vdwg.mxu0
        %v2048 = vmul.f32 %v1942, %v1054
        %v2049 = vmul.f32 %v1945, %v1057
        %v2050 = vmul.f32 %v1950, %v1062
        %v2051 = vmul.f32 %v1953, %v1065
        %v2052 = vmul.f32 %v1958, %v1070
        %v2053 = vmul.f32 %v1961, %v1073
        %v2054 = vmul.f32 %v1966, %v1078
        %v2055 = vmul.f32 %v1969, %v1081
        %v2056 = vmul.f32 %v1974, %v1086
        %v2057 = vmul.f32 %v1977, %v1089
        %v2058 = vmul.f32 %v1982, %v1094
        %v2059 = vmul.f32 %v1985, %v1097
        %v2060 = vmul.f32 %v1990, %v1102
        %v2061 = vmul.f32 %v1993, %v1105
        %v2062 = vmul.f32 %v1998, %v1110
        %v2063 = vmul.f32 %v2001, %v1113
        %v2064 = vpack.c.bf16 %v2049, %v2048
        %v2065 = vpack.c.bf16 %v2051, %v2050
        %v2066 = vpack.c.bf16 %v2053, %v2052
        %v2067 = vpack.c.bf16 %v2055, %v2054
        %v2068 = vpack.c.bf16 %v2057, %v2056
        %v2069 = vpack.c.bf16 %v2059, %v2058
        %v2070 = vpack.c.bf16 %v2061, %v2060
        %v2071 = vpack.c.bf16 %v2063, %v2062
        %v2072 = vmul.f32 %v2043, %v820
        %2073 = vmatprep.subr.bf16.mxu0 0
        %2074 = vmatpush1.bf16.msra.mxu0 %v2071
        %2075 = vmatprep.subr.bf16.mxu0 0
        %2076 = vmatpush1.bf16.msra.mxu0 %v2070
        %2077 = vmatprep.subr.bf16.mxu0 0
        %2078 = vmatpush1.bf16.msra.mxu0 %v2069
        %2079 = vmatprep.subr.bf16.mxu0 0
        %2080 = vmatpush1.bf16.msra.mxu0 %v2068
        %2081 = vmatprep.subr.bf16.mxu0 0
        %2082 = vmatpush1.bf16.msra.mxu0 %v2067
        %2083 = vmatprep.subr.bf16.mxu0 0
        %2084 = vmatpush1.bf16.msra.mxu0 %v2066
        %2085 = vmatprep.subr.bf16.mxu0 0
        %2086 = vmatpush1.bf16.msra.mxu0 %v2065
        %2087 = vmatprep.subr.bf16.mxu0 0
        %2088 = vmatpush1.bf16.msra.mxu0 %v2064
        %2089 = vmatprep.subr.bf16.mxu0 0
        %2090 = vmatpush2.bf16.msra.mxu0 0
        %2091 = vmatprep.subr.bf16.mxu0 0
        %2092 = vmatpush2.bf16.msra.mxu0 0
        %2093 = vmatprep.subr.bf16.mxu0 0
        %2094 = vmatpush2.bf16.msra.mxu0 0
        %2095 = vmatprep.subr.bf16.mxu0 0
        %2096 = vmatpush2.bf16.msra.mxu0 0
        %2097 = vmatprep.subr.bf16.mxu0 0
        %2098 = vmatpush2.bf16.msra.mxu0 0
        %2099 = vmatprep.subr.bf16.mxu0 0
        %2100 = vmatpush2.bf16.msra.mxu0 0
        %2101 = vmatprep.subr.bf16.mxu0 0
        %2102 = vmatpush2.bf16.msra.mxu0 0
        %2103 = vmatprep.subr.bf16.mxu0 0
        %2104 = vmatpush2.bf16.msra.mxu0 0
        %2105 = vmatprep.mubr.bf16.mxu0 0
        %2106 = vmatmul.mubr.bf16.gmra.mxu0 %v512
        %v2107 = vpop.f32.mrf.mxu0
        %v2108 = vadd.f32 %v2072, %v2107
        %v2109 = vpop.f32.mrf.mxu0
        %v2110 = vpop.f32.mrf.mxu0
        %v2111 = vpop.f32.mrf.mxu0
        %2112 = vdwg.mxu0
        %v2113 = vpack.c.bf16 %v2108, %v2108
        %v2114 = vld [vmem:[%s6] sm:$0xf]
        %v2115 = vld [vmem:[%s6 + $0x4] sm:$0xf]
        %v2116 = vld [vmem:[%s6 + $0x8] sm:$0xf]
        %v2117 = vld [vmem:[%s6 + $0xc] sm:$0xf]
        %v2118 = vld [vmem:[%s10] sm:$0x1]
        %v2120 = vlaneseq
        %v2121 = vshrl.u32 %v2120, 7
        %v2122 = vsub.s32 0, %v2121
        %v2123 = vrot.slane %v2118, %v2122
        %v2129 = vunpack.c.l.b16 %v2114
        %v2130 = vunpack.c.l.b16 %v2115
        %v2131 = vunpack.c.l.b16 %v2116
        %v2132 = vunpack.c.l.b16 %v2117
        %v2133 = vpack.c.b16 %v2130, %v2129
        %v2134 = vpack.c.b16 %v2132, %v2131
        %v2138 = vsel %vm655, %v2113, 0
        %2140 = vmatprep.subr.bf16.mxu0 0
        %2141 = vmatpush1.bf16.msra.mxu0 0
        %2142 = vmatprep.subr.bf16.mxu0 0
        %2143 = vmatpush1.bf16.msra.mxu0 0
        %2144 = vmatprep.subr.bf16.mxu0 0
        %2145 = vmatpush1.bf16.msra.mxu0 0
        %2146 = vmatprep.subr.bf16.mxu0 0
        %2147 = vmatpush1.bf16.msra.mxu0 0
        %2148 = vmatprep.subr.bf16.mxu0 0
        %2149 = vmatpush1.bf16.msra.mxu0 0
        %2150 = vmatprep.subr.bf16.mxu0 0
        %2151 = vmatpush1.bf16.msra.mxu0 0
        %2152 = vmatprep.subr.bf16.mxu0 0
        %2153 = vmatpush1.bf16.msra.mxu0 %v2134
        %2154 = vmatprep.subr.bf16.mxu0 0
        %2155 = vmatpush1.bf16.msra.mxu0 %v2133
        %2156 = vmatprep.subr.bf16.mxu0 0
        %2157 = vmatpush2.bf16.msra.mxu0 0
        %2158 = vmatprep.subr.bf16.mxu0 0
        %2159 = vmatpush2.bf16.msra.mxu0 0
        %2160 = vmatprep.subr.bf16.mxu0 0
        %2161 = vmatpush2.bf16.msra.mxu0 0
        %2162 = vmatprep.subr.bf16.mxu0 0
        %2163 = vmatpush2.bf16.msra.mxu0 0
        %2164 = vmatprep.subr.bf16.mxu0 0
        %2165 = vmatpush2.bf16.msra.mxu0 0
        %2166 = vmatprep.subr.bf16.mxu0 0
        %2167 = vmatpush2.bf16.msra.mxu0 0
        %2168 = vmatprep.subr.bf16.mxu0 0
        %2169 = vmatpush2.bf16.msra.mxu0 0
        %2170 = vmatprep.subr.bf16.mxu0 0
        %2171 = vmatpush2.bf16.msra.mxu0 0
        %2172 = vmatprep.mubr.bf16.mxu0 0
        %2173 = vmatmul.mubr.bf16.gmra.mxu0 %v2138
        %v2174 = vpop.f32.mrf.mxu0
        %v2175 = vadd.f32 %v2123, %v2174
        %v2176 = vpop.f32.mrf.mxu0
        %v2177 = vpop.f32.mrf.mxu0
        %v2178 = vpop.f32.mrf.mxu0
        %2179 = vdwg.mxu0
        %2180 = vst.msk [vmem:[%s488] sm:$0xff] %vm655, %v2175
        %s2181 = sand.u32 %s357, 1
        %s2182 = scalar_lea.sflag [#allocation3], %s2181
        %s2183 = sand.u32 %s357, 1
        %s2184 = smul.addr %s2183, 8
        %s2185 = scalar_lea.vmem [#allocation2], %s2184
        // Predicated region
        $region81: #{tpu_custom_call.1} parent=79 // pred_check
          %p2186 = pneg %p367
        $region82: #{tpu_custom_call.1} parent=79 // pred_check_branch
          %2188 = sbr.rel (%p2186) target = $region84
        $region83: #{tpu_custom_call.1} parent=79 // pred_region
          %s2190 = ssub.s32 128, 128
          %2191 = vsyncadd %s2182, %s2190
          %s2192 = smul.addr %s29, 128
          %s2193 = scalar_lea.hbm %s15, %s2192
          %s2195 = sshll.u32 %s2185, 4
          %s2196 = int_to_ptr.vmem [resolvable:$true] %s2195
          %2198 = dma.vmem_to_hbm [thread:$0]  %s2196, 128, %s2193, %s2182
        $region84: #{tpu_custom_call.1} parent=79 // pred_fallthru
          _
      $region80: #{tpu_custom_call.1} parent=5 // pred_fallthru
        _
      %p2199 = scmp.le.s32.totalorder 2, %s24
      // Predicated region
      $region85: #{tpu_custom_call.1} parent=5 // pred_check
        %p2200 = pneg %p2199
      $region86: #{tpu_custom_call.1} parent=5 // pred_check_branch
        %2202 = sbr.rel (%p2200) target = $region88
      $region87: #{tpu_custom_call.1} parent=5 // pred_region
        %s2203 = ssub.s32 %s24, 2
        // Predicated region
        $region89: #{tpu_custom_call.1} parent=87 // pred_check
          %p2204 = pneg %p373
        $region90: #{tpu_custom_call.1} parent=87 // pred_check_branch
          %2206 = sbr.rel (%p2204) target = $region92
        $region91: #{tpu_custom_call.1} parent=87 // pred_region
          %s2207 = sand.u32 %s358, 1
          %s2208 = scalar_lea.sflag [#allocation3], %s2207
          %s2209 = sand.u32 %s358, 1
          %s2210 = smul.addr %s2209, 8
          %s2211 = scalar_lea.vmem [#allocation2], %s2210
          %2212 = dma.done %s2208, 128
        $region92: #{tpu_custom_call.1} parent=87 // pred_fallthru
          _
      $region88: #{tpu_custom_call.1} parent=5 // pred_fallthru
        _
    $region6: #{tpu_custom_call.1} parent=1 // loop_footer
      %s28 = sadd.s32 1, %s24
    $region7: #{tpu_custom_call.1} parent=1 // loop_footer_branch
      %23 = sbr.rel target = $region3
    $region8: #{tpu_custom_call.1} parent=1 // loop_exit
      _
    %2213 = vsyncpa [#allocation3], 1
    %s2214 = scalar_lea.sflag [#allocation3], 1
    %2215 = vsyncpa %s2214, 1

</llo_original>
